<compile_context>
chip_gen: v7x
topology: tpu7x:2x2x1
jax: 0.10.0
libtpu: 0.0.40
codegen_flags: <defaults>
</compile_context>

<pallas_src>
import functools
import math

import jax
import jax.numpy as jnp
from jax.experimental import pallas as pl
from jax.experimental.pallas import tpu as pltpu


_MM_DTYPE = jnp.bfloat16          # MXU input dtype; accumulation stays f32
_LN_EPS = 1e-6
_VMEM_LIMIT = 32 * 1024 * 1024    # explicit scoped-VMEM limit (safe on v5e/v6e/v7x)


def _round_up(x, m):
    return ((x + m - 1) // m) * m


def _row_tile(M, row_bytes, budget=4 << 20):
    """Largest power-of-two row tile that divides M and fits a VMEM budget."""
    cap = max(8, budget // max(row_bytes, 1))
    for t in (512, 256, 128, 64, 32, 16, 8):
        if t <= cap and M % t == 0:
            return t
    return M                                    # fall back to full extent


def _mm(a, b, transpose_b=False):
    """2-D matmul on the MXU: bf16 operands, f32 accumulation."""
    dims = (((1,), (1 if transpose_b else 0,)), ((), ()))
    return jax.lax.dot_general(a.astype(_MM_DTYPE), b.astype(_MM_DTYPE),
                               dims, preferred_element_type=jnp.float32)


# ---------------------------------------------------------------------------
# Fused multi-head attention + residual + LayerNorm kernel (grid over batch)
# ---------------------------------------------------------------------------

def _mha_ln_kernel(lens_ref, xq_ref, xkv_ref, wq_ref, wkv_ref, wo_ref, bo_ref,
                   g_ref, off_ref, o_ref, *, h, dq, dk, dv, causal):
    b = pl.program_id(0)
    seq_len = lens_ref[b]                       # scalar (SMEM, prefetched)

    xq = xq_ref[0]                              # (Lq, D) f32
    xkv = xkv_ref[0]                            # (Lk, D) f32
    Lq, Lk = xq.shape[0], xkv.shape[0]

    # Fused Q and fused K|V projections; 1/sqrt(dk) folded into Q.
    q = _mm(xq, wq_ref[...]) * (1.0 / math.sqrt(dk))     # (Lq, h*dq)
    kv = _mm(xkv, wkv_ref[...])                          # (Lk, h*(dk+dv))
    k_all = kv[:, :h * dk]
    v_all = kv[:, h * dk:]

    # Additive mask bias built in-kernel (no HBM bias tensor).
    k_idx = jax.lax.broadcasted_iota(jnp.int32, (Lq, Lk), 1)
    valid = k_idx < seq_len
    if causal:
        q_idx = jax.lax.broadcasted_iota(jnp.int32, (Lq, Lk), 0)
        valid = jnp.logical_and(valid, k_idx <= q_idx)
    bias = jnp.where(valid, 0.0, -1e9).astype(jnp.float32)
    # NOTE: fully-masked padded query rows degrade to a uniform softmax over
    # masked keys (same behavior as the reference); harmless for padded rows.

    head_outs = []
    for head in range(h):                       # static unroll over heads
        q_h = q[:, head * dq:(head + 1) * dq]
        k_h = k_all[:, head * dk:(head + 1) * dk]
        v_h = v_all[:, head * dv:(head + 1) * dv]
        s = _mm(q_h, k_h, transpose_b=True) + bias        # (Lq, Lk) f32
        s = s - jnp.max(s, axis=-1, keepdims=True)
        p = jnp.exp(s)
        p = p * pl.reciprocal(jnp.sum(p, axis=-1, keepdims=True), approx=True)
        head_outs.append(_mm(p, v_h))                     # (Lq, dv)
    attn = jnp.concatenate(head_outs, axis=-1)            # (Lq, h*dv)

    proj = _mm(attn, wo_ref[...]) + bo_ref[...]           # (Lq, D)
    y = xq + proj                                         # residual
    mu = jnp.mean(y, axis=-1, keepdims=True)
    var = jnp.mean(jnp.square(y - mu), axis=-1, keepdims=True)
    o_ref[0] = (y - mu) * jax.lax.rsqrt(var + _LN_EPS) * g_ref[...] + off_ref[...]


def mha_ln_block(x_q, x_kv, seq_lens, attn_p, ln_p, *, h, dq, dk, dv, causal):
    """LayerNorm(x_q + MultiHeadAttention(x_q, x_kv)) in one pallas_call."""
    B, Lq, D = x_q.shape
    Lk = x_kv.shape[1]
    nq = h * dq
    nkv = h * (dk + dv)
    kernel = functools.partial(_mha_ln_kernel, h=h, dq=dq, dk=dk, dv=dv,
                               causal=causal)
    grid_spec = pltpu.PrefetchScalarGridSpec(
        num_scalar_prefetch=1,
        grid=(B,),
        in_specs=[
            pl.BlockSpec((1, Lq, D), lambda b, lens: (b, 0, 0)),
            pl.BlockSpec((1, Lk, D), lambda b, lens: (b, 0, 0)),
            pl.BlockSpec((D, nq), lambda b, lens: (0, 0)),
            pl.BlockSpec((D, nkv), lambda b, lens: (0, 0)),
            pl.BlockSpec((h * dv, D), lambda b, lens: (0, 0)),
            pl.BlockSpec((1, D), lambda b, lens: (0, 0)),
            pl.BlockSpec((1, D), lambda b, lens: (0, 0)),
            pl.BlockSpec((1, D), lambda b, lens: (0, 0)),
        ],
        out_specs=pl.BlockSpec((1, Lq, D), lambda b, lens: (b, 0, 0)),
    )
    return pl.pallas_call(
        kernel,
        grid_spec=grid_spec,
        out_shape=jax.ShapeDtypeStruct((B, Lq, D), jnp.float32),
        compiler_params=pltpu.CompilerParams(
            dimension_semantics=("parallel",),
            vmem_limit_bytes=_VMEM_LIMIT),
    )(seq_lens, x_q, x_kv, attn_p['wq'], attn_p['wkv'], attn_p['wo'],
      attn_p['bo'], ln_p['gain'], ln_p['offset'])


# ---------------------------------------------------------------------------
# Fused FFN + residual + LayerNorm kernel (row-tiled over B*L)
# ---------------------------------------------------------------------------

def _ffn_ln_kernel(x_ref, w1_ref, b1_ref, w2_ref, b2_ref, g_ref, off_ref, o_ref):
    x = x_ref[...]                                        # (tm, D) f32
    hid = jnp.maximum(_mm(x, w1_ref[...]) + b1_ref[...], 0.0)   # ReLU (Conv1d k=1)
    f = _mm(hid, w2_ref[...]) + b2_ref[...]
    y = x + f                                             # residual
    mu = jnp.mean(y, axis=-1, keepdims=True)
    var = jnp.mean(jnp.square(y - mu), axis=-1, keepdims=True)
    o_ref[...] = (y - mu) * jax.lax.rsqrt(var + _LN_EPS) * g_ref[...] + off_ref[...]


def ffn_ln_block(x2d, ffn_p, ln_p):
    M, D = x2d.shape
    H = ffn_p['w1'].shape[1]
    tm = _row_tile(M, row_bytes=4 * (2 * D + H) * 2)
    return pl.pallas_call(
        _ffn_ln_kernel,
        grid=(M // tm,),
        out_shape=jax.ShapeDtypeStruct((M, D), jnp.float32),
        in_specs=[pl.BlockSpec((tm, D), lambda i: (i, 0)),
                  pl.BlockSpec((D, H), lambda i: (0, 0)),
                  pl.BlockSpec((1, H), lambda i: (0, 0)),
                  pl.BlockSpec((H, D), lambda i: (0, 0)),
                  pl.BlockSpec((1, D), lambda i: (0, 0)),
                  pl.BlockSpec((1, D), lambda i: (0, 0)),
                  pl.BlockSpec((1, D), lambda i: (0, 0))],
        out_specs=pl.BlockSpec((tm, D), lambda i: (i, 0)),
        compiler_params=pltpu.CompilerParams(
            dimension_semantics=("parallel",),
            vmem_limit_bytes=_VMEM_LIMIT),
    )(x2d, ffn_p['w1'], ffn_p['b1'], ffn_p['w2'], ffn_p['b2'],
      ln_p['gain'], ln_p['offset'])


# ---------------------------------------------------------------------------
# Row-tiled linear (final affine, output padded to a lane-dense width)
# ---------------------------------------------------------------------------

def _linear_kernel(x_ref, w_ref, b_ref, o_ref):
    o_ref[...] = _mm(x_ref[...], w_ref[...]) + b_ref[...]


def linear(x2d, w, b):
    M, K = x2d.shape
    N = w.shape[1]
    tm = _row_tile(M, row_bytes=4 * (K + N) * 2)
    return pl.pallas_call(
        _linear_kernel,
        grid=(M // tm,),
        out_shape=jax.ShapeDtypeStruct((M, N), jnp.float32),
        in_specs=[pl.BlockSpec((tm, K), lambda i: (i, 0)),
                  pl.BlockSpec((K, N), lambda i: (0, 0)),
                  pl.BlockSpec((1, N), lambda i: (0, 0))],
        out_specs=pl.BlockSpec((tm, N), lambda i: (i, 0)),
        compiler_params=pltpu.CompilerParams(
            dimension_semantics=("parallel",),
            vmem_limit_bytes=_VMEM_LIMIT),
    )(x2d, w, b)


# ---------------------------------------------------------------------------
# Plain-JAX glue (embedding gather, positional encoding, parameter init)
# ---------------------------------------------------------------------------

def position_encoding(L, D):
    pos = jnp.arange(L, dtype=jnp.float32)[:, None]
    i = jnp.arange(D, dtype=jnp.float32)[None, :]
    angle = pos / jnp.power(10000.0, 2.0 * jnp.floor(i / 2.0) / D)
    return jnp.where((jnp.arange(D) % 2)[None, :] == 0,
                     jnp.sin(angle), jnp.cos(angle)).astype(jnp.float32)


def init_params(key, cfg):
    std = cfg['d_model'] ** (-0.5)
    D, h = cfg['d_model'], cfg['h']
    dq, dk, dv, Hid = cfg['d_q'], cfg['d_k'], cfg['d_v'], cfg['d_inner_hid']
    keys = iter(jax.random.split(key, 256))

    def nrm(shape):
        return jax.random.normal(next(keys), shape, jnp.float32) * std

    def mha_params():
        # Fused head layout: Q -> (D, h*dq), K|V -> (D, h*(dk+dv)).
        return dict(wq=nrm((D, h * dq)),
                    wkv=nrm((D, h * (dk + dv))),
                    wo=nrm((h * dv, D)),
                    bo=jnp.zeros((1, D), jnp.float32))

    def ln_params():
        return dict(gain=jnp.ones((1, D), jnp.float32),
                    offset=jnp.zeros((1, D), jnp.float32))

    def ffn_params():
        return dict(w1=nrm((D, Hid)), b1=jnp.zeros((1, Hid), jnp.float32),
                    w2=nrm((Hid, D)), b2=jnp.zeros((1, D), jnp.float32))

    enc_layers = [dict(attn=mha_params(), ln1=ln_params(),
                       ffn=ffn_params(), ln2=ln_params())
                  for _ in range(cfg['enc_N'])]
    dec_layers = [dict(self_attn=mha_params(), ln1=ln_params(),
                       cross_attn=mha_params(), ln2=ln_params(),
                       ffn=ffn_params(), ln3=ln_params())
                  for _ in range(cfg['dec_N'])]

    n_pad = _round_up(cfg['dec_ntok'], 128)     # lane-dense affine output
    affine_w = jnp.zeros((D, n_pad), jnp.float32).at[:, :cfg['dec_ntok']].set(
        nrm((D, cfg['dec_ntok'])))
    affine_b = jnp.zeros((1, n_pad), jnp.float32)

    return dict(src_emb=nrm((cfg['enc_ntok'], D)),
                dec_emb=nrm((cfg['dec_ntok'], D)),
                enc_layers=enc_layers, dec_layers=dec_layers,
                affine_w=affine_w, affine_b=affine_b)


def transformer_forward(params, cfg, src, src_mask, trg, trg_mask):
    B, Ls = src.shape
    Lt = trg.shape[1]
    D, h = cfg['d_model'], cfg['h']
    dq, dk, dv = cfg['d_q'], cfg['d_k'], cfg['d_v']
    src_seq_lens = src_mask.sum(1).astype(jnp.int32)
    trg_seq_lens = trg_mask.sum(1).astype(jnp.int32)

    # -------- Encoder --------
    x = jnp.take(params['src_emb'], src, axis=0) + position_encoding(Ls, D)[None]
    for lp in params['enc_layers']:
        x = mha_ln_block(x, x, src_seq_lens, lp['attn'], lp['ln1'],
                         h=h, dq=dq, dk=dk, dv=dv, causal=False)
        x = ffn_ln_block(x.reshape(B * Ls, D), lp['ffn'],
                         lp['ln2']).reshape(B, Ls, D)
    enc_output = x

    # -------- Decoder --------
    y = jnp.take(params['dec_emb'], trg, axis=0) + position_encoding(Lt, D)[None]
    for lp in params['dec_layers']:
        y = mha_ln_block(y, y, trg_seq_lens, lp['self_attn'], lp['ln1'],
                         h=h, dq=dq, dk=dk, dv=dv, causal=True)
        y = mha_ln_block(y, enc_output, src_seq_lens, lp['cross_attn'], lp['ln2'],
                         h=h, dq=dq, dk=dk, dv=dv, causal=False)
        y = ffn_ln_block(y.reshape(B * Lt, D), lp['ffn'],
                         lp['ln3']).reshape(B, Lt, D)

    # -------- Output affine (lane-dense padded, then sliced) --------
    logits = linear(y.reshape(B * Lt, D), params['affine_w'], params['affine_b'])
    return logits[:, :cfg['dec_ntok']].reshape(B, Lt, cfg['dec_ntok'])


if __name__ == "__main__":
    cfg = dict(d_model=32, d_q=8, d_k=8, d_v=8, h=4, enc_N=2, dec_N=2,
               d_inner_hid=64, dropout=0.1, enc_ntok=50, dec_ntok=40)
    key = jax.random.PRNGKey(0)
    kp, ks, kt = jax.random.split(key, 3)
    params = init_params(kp, cfg)

    B, Ls, Lt = 2, 8, 8
    src = jax.random.randint(ks, (B, Ls), 0, cfg['enc_ntok'], dtype=jnp.int32)
    trg = jax.random.randint(kt, (B, Lt), 0, cfg['dec_ntok'], dtype=jnp.int32)
    src_lens = jnp.array([Ls, 5], jnp.int32)
    trg_lens = jnp.array([Lt, 6], jnp.int32)
    src_mask = (jnp.arange(Ls)[None, :] < src_lens[:, None]).astype(jnp.int32)
    trg_mask = (jnp.arange(Lt)[None, :] < trg_lens[:, None]).astype(jnp.int32)

    fwd = jax.jit(lambda p, s, sm, t, tm: transformer_forward(p, cfg, s, sm, t, tm))
    y_prob = fwd(params, src, src_mask, trg, trg_mask)
    jax.block_until_ready(y_prob)
    assert y_prob.shape == (B, Lt, cfg['dec_ntok'])
    assert bool(jnp.all(jnp.isfinite(y_prob)))
    print("KERNEL_OK")
</pallas_src>

<mosaic_0001>
module attributes {stable_mosaic.version = 11 : i64} {
  func.func @_linear_kernel(%arg0: i32, %arg1: memref<16x32xf32, #tpu.memory_space<vmem>>, %arg2: memref<32x128xf32, #tpu.memory_space<vmem>>, %arg3: memref<1x128xf32, #tpu.memory_space<vmem>>, %arg4: memref<16x128xf32, #tpu.memory_space<vmem>>) attributes {dimension_semantics = [#tpu.dimension_semantics<parallel>], iteration_bounds = array<i64: 1>, scalar_prefetch = 0 : i64, scratch_operands = 0 : i64, tpu.core_type = #tpu.core_type<tc>, window_params = [{transform_indices = @transform_0, window_bounds = array<i64: 16, 32>}, {pipeline_mode = #tpu.pipeline_mode<synchronous>, transform_indices = @transform_1, window_bounds = array<i64: 32, 128>}, {pipeline_mode = #tpu.pipeline_mode<synchronous>, transform_indices = @transform_2, window_bounds = array<i64: 1, 128>}, {transform_indices = @transform_3, window_bounds = array<i64: 16, 128>}]} {
    %c0 = arith.constant 0 : index
    %c0_0 = arith.constant 0 : index
    %0 = vector.load %arg1[%c0, %c0_0] : memref<16x32xf32, #tpu.memory_space<vmem>>, vector<16x32xf32>
    %c0_1 = arith.constant 0 : index
    %c0_2 = arith.constant 0 : index
    %1 = vector.load %arg2[%c0_1, %c0_2] : memref<32x128xf32, #tpu.memory_space<vmem>>, vector<32x128xf32>
    %2 = arith.truncf %0 : vector<16x32xf32> to vector<16x32xbf16>
    %3 = arith.truncf %1 : vector<32x128xf32> to vector<32x128xbf16>
    %cst = arith.constant dense<0.000000e+00> : vector<16x128xf32>
    %4 = tpu.matmul %2, %3, %cst {dimension_numbers = #tpu.dot_dimension_numbers<[1], [0], [0], [1], [0, 0, 1, 1], [], []>} : vector<16x32xbf16>, vector<32x128xbf16>, vector<16x128xf32> -> vector<16x128xf32>
    %c0_3 = arith.constant 0 : index
    %c0_4 = arith.constant 0 : index
    %5 = vector.load %arg3[%c0_3, %c0_4] : memref<1x128xf32, #tpu.memory_space<vmem>>, vector<1x128xf32>
    %6 = vector.broadcast %5 : vector<1x128xf32> to vector<16x128xf32>
    %7 = arith.addf %4, %6 : vector<16x128xf32>
    %c0_5 = arith.constant 0 : index
    %c0_6 = arith.constant 0 : index
    %8 = vector.load %arg4[%c0_5, %c0_6] : memref<16x128xf32, #tpu.memory_space<vmem>>, vector<16x128xf32>
    tpu.vector_store %arg4[%c0_5, %c0_6], %7 {strides = array<i32>} : memref<16x128xf32, #tpu.memory_space<vmem>>, vector<16x128xf32>,
    return
  }
  func.func @transform_0(%arg0: i32) -> (i32, i32) {
    %c0_i32 = arith.constant 0 : i32
    %c0_i32_0 = arith.constant 0 : i32
    return %arg0, %c0_i32 : i32, i32
  }
  func.func @transform_1(%arg0: i32) -> (i32, i32) {
    %c0_i32 = arith.constant 0 : i32
    %c0_i32_0 = arith.constant 0 : i32
    %c0_i32_1 = arith.constant 0 : i32
    return %c0_i32, %c0_i32_0 : i32, i32
  }
  func.func @transform_2(%arg0: i32) -> (i32, i32) {
    %c0_i32 = arith.constant 0 : i32
    %c0_i32_0 = arith.constant 0 : i32
    %c0_i32_1 = arith.constant 0 : i32
    return %c0_i32, %c0_i32_0 : i32, i32
  }
  func.func @transform_3(%arg0: i32) -> (i32, i32) {
    %c0_i32 = arith.constant 0 : i32
    %c0_i32_0 = arith.constant 0 : i32
    return %arg0, %c0_i32 : i32, i32
  }
}

module attributes {stable_mosaic.version = 11 : i64} {
  func.func @_ffn_ln_kernel(%arg0: i32, %arg1: memref<16x32xf32, #tpu.memory_space<vmem>>, %arg2: memref<32x64xf32, #tpu.memory_space<vmem>>, %arg3: memref<1x64xf32, #tpu.memory_space<vmem>>, %arg4: memref<64x32xf32, #tpu.memory_space<vmem>>, %arg5: memref<1x32xf32, #tpu.memory_space<vmem>>, %arg6: memref<1x32xf32, #tpu.memory_space<vmem>>, %arg7: memref<1x32xf32, #tpu.memory_space<vmem>>, %arg8: memref<16x32xf32, #tpu.memory_space<vmem>>) attributes {dimension_semantics = [#tpu.dimension_semantics<parallel>], iteration_bounds = array<i64: 1>, scalar_prefetch = 0 : i64, scratch_operands = 0 : i64, tpu.core_type = #tpu.core_type<tc>, window_params = [{transform_indices = @transform_0, window_bounds = array<i64: 16, 32>}, {pipeline_mode = #tpu.pipeline_mode<synchronous>, transform_indices = @transform_1, window_bounds = array<i64: 32, 64>}, {pipeline_mode = #tpu.pipeline_mode<synchronous>, transform_indices = @transform_2, window_bounds = array<i64: 1, 64>}, {pipeline_mode = #tpu.pipeline_mode<synchronous>, transform_indices = @transform_3, window_bounds = array<i64: 64, 32>}, {pipeline_mode = #tpu.pipeline_mode<synchronous>, transform_indices = @transform_4, window_bounds = array<i64: 1, 32>}, {pipeline_mode = #tpu.pipeline_mode<synchronous>, transform_indices = @transform_5, window_bounds = array<i64: 1, 32>}, {pipeline_mode = #tpu.pipeline_mode<synchronous>, transform_indices = @transform_6, window_bounds = array<i64: 1, 32>}, {transform_indices = @transform_7, window_bounds = array<i64: 16, 32>}]} {
    %c0 = arith.constant 0 : index
    %c0_0 = arith.constant 0 : index
    %0 = vector.load %arg1[%c0, %c0_0] : memref<16x32xf32, #tpu.memory_space<vmem>>, vector<16x32xf32>
    %c0_1 = arith.constant 0 : index
    %c0_2 = arith.constant 0 : index
    %1 = vector.load %arg2[%c0_1, %c0_2] : memref<32x64xf32, #tpu.memory_space<vmem>>, vector<32x64xf32>
    %2 = arith.truncf %0 : vector<16x32xf32> to vector<16x32xbf16>
    %3 = arith.truncf %1 : vector<32x64xf32> to vector<32x64xbf16>
    %cst = arith.constant dense<0.000000e+00> : vector<16x64xf32>
    %4 = tpu.matmul %2, %3, %cst {dimension_numbers = #tpu.dot_dimension_numbers<[1], [0], [0], [1], [0, 0, 1, 1], [], []>} : vector<16x32xbf16>, vector<32x64xbf16>, vector<16x64xf32> -> vector<16x64xf32>
    %c0_3 = arith.constant 0 : index
    %c0_4 = arith.constant 0 : index
    %5 = vector.load %arg3[%c0_3, %c0_4] : memref<1x64xf32, #tpu.memory_space<vmem>>, vector<1x64xf32>
    %6 = vector.broadcast %5 : vector<1x64xf32> to vector<16x64xf32>
    %7 = arith.addf %4, %6 : vector<16x64xf32>
    %cst_5 = arith.constant 0.000000e+00 : f32
    %8 = vector.broadcast %cst_5 : f32 to vector<16x64xf32>
    %9 = arith.maximumf %7, %8 : vector<16x64xf32>
    %c0_6 = arith.constant 0 : index
    %c0_7 = arith.constant 0 : index
    %10 = vector.load %arg4[%c0_6, %c0_7] : memref<64x32xf32, #tpu.memory_space<vmem>>, vector<64x32xf32>
    %11 = arith.truncf %9 : vector<16x64xf32> to vector<16x64xbf16>
    %12 = arith.truncf %10 : vector<64x32xf32> to vector<64x32xbf16>
    %cst_8 = arith.constant dense<0.000000e+00> : vector<16x32xf32>
    %13 = tpu.matmul %11, %12, %cst_8 {dimension_numbers = #tpu.dot_dimension_numbers<[1], [0], [0], [1], [0, 0, 1, 1], [], []>} : vector<16x64xbf16>, vector<64x32xbf16>, vector<16x32xf32> -> vector<16x32xf32>
    %c0_9 = arith.constant 0 : index
    %c0_10 = arith.constant 0 : index
    %14 = vector.load %arg5[%c0_9, %c0_10] : memref<1x32xf32, #tpu.memory_space<vmem>>, vector<1x32xf32>
    %15 = vector.broadcast %14 : vector<1x32xf32> to vector<16x32xf32>
    %16 = arith.addf %13, %15 : vector<16x32xf32>
    %17 = arith.addf %0, %16 : vector<16x32xf32>
    %cst_11 = arith.constant dense<0.000000e+00> : vector<16xf32>
    %18 = vector.multi_reduction <add>, %17, %cst_11 [1] : vector<16x32xf32> to vector<16xf32>
    %19 = vector.shape_cast %18 : vector<16xf32> to vector<16x1xf32>
    %cst_12 = arith.constant 3.200000e+01 : f32
    %20 = vector.broadcast %cst_12 : f32 to vector<16x1xf32>
    %21 = arith.divf %19, %20 : vector<16x1xf32>
    %22 = vector.broadcast %21 : vector<16x1xf32> to vector<16x32xf32>
    %23 = arith.subf %17, %22 : vector<16x32xf32>
    %24 = arith.mulf %23, %23 : vector<16x32xf32>
    %cst_13 = arith.constant dense<0.000000e+00> : vector<16xf32>
    %25 = vector.multi_reduction <add>, %24, %cst_13 [1] : vector<16x32xf32> to vector<16xf32>
    %26 = vector.shape_cast %25 : vector<16xf32> to vector<16x1xf32>
    %cst_14 = arith.constant 3.200000e+01 : f32
    %27 = vector.broadcast %cst_14 : f32 to vector<16x1xf32>
    %28 = arith.divf %26, %27 : vector<16x1xf32>
    %29 = vector.broadcast %21 : vector<16x1xf32> to vector<16x32xf32>
    %30 = arith.subf %17, %29 : vector<16x32xf32>
    %cst_15 = arith.constant 9.99999997E-7 : f32
    %31 = vector.broadcast %cst_15 : f32 to vector<16x1xf32>
    %32 = arith.addf %28, %31 : vector<16x1xf32>
    %33 = math.rsqrt %32 : vector<16x1xf32>
    %34 = vector.broadcast %33 : vector<16x1xf32> to vector<16x32xf32>
    %35 = arith.mulf %30, %34 : vector<16x32xf32>
    %c0_16 = arith.constant 0 : index
    %c0_17 = arith.constant 0 : index
    %36 = vector.load %arg6[%c0_16, %c0_17] : memref<1x32xf32, #tpu.memory_space<vmem>>, vector<1x32xf32>
    %37 = vector.broadcast %36 : vector<1x32xf32> to vector<16x32xf32>
    %38 = arith.mulf %35, %37 : vector<16x32xf32>
    %c0_18 = arith.constant 0 : index
    %c0_19 = arith.constant 0 : index
    %39 = vector.load %arg7[%c0_18, %c0_19] : memref<1x32xf32, #tpu.memory_space<vmem>>, vector<1x32xf32>
    %40 = vector.broadcast %39 : vector<1x32xf32> to vector<16x32xf32>
    %41 = arith.addf %38, %40 : vector<16x32xf32>
    %c0_20 = arith.constant 0 : index
    %c0_21 = arith.constant 0 : index
    %42 = vector.load %arg8[%c0_20, %c0_21] : memref<16x32xf32, #tpu.memory_space<vmem>>, vector<16x32xf32>
    tpu.vector_store %arg8[%c0_20, %c0_21], %41 {strides = array<i32>} : memref<16x32xf32, #tpu.memory_space<vmem>>, vector<16x32xf32>,
    return
  }
  func.func @transform_0(%arg0: i32) -> (i32, i32) {
    %c0_i32 = arith.constant 0 : i32
    %c0_i32_0 = arith.constant 0 : i32
    return %arg0, %c0_i32 : i32, i32
  }
  func.func @transform_1(%arg0: i32) -> (i32, i32) {
    %c0_i32 = arith.constant 0 : i32
    %c0_i32_0 = arith.constant 0 : i32
    %c0_i32_1 = arith.constant 0 : i32
    return %c0_i32, %c0_i32_0 : i32, i32
  }
  func.func @transform_2(%arg0: i32) -> (i32, i32) {
    %c0_i32 = arith.constant 0 : i32
    %c0_i32_0 = arith.constant 0 : i32
    %c0_i32_1 = arith.constant 0 : i32
    return %c0_i32, %c0_i32_0 : i32, i32
  }
  func.func @transform_3(%arg0: i32) -> (i32, i32) {
    %c0_i32 = arith.constant 0 : i32
    %c0_i32_0 = arith.constant 0 : i32
    %c0_i32_1 = arith.constant 0 : i32
    return %c0_i32, %c0_i32_0 : i32, i32
  }
  func.func @transform_4(%arg0: i32) -> (i32, i32) {
    %c0_i32 = arith.constant 0 : i32
    %c0_i32_0 = arith.constant 0 : i32
    %c0_i32_1 = arith.constant 0 : i32
    return %c0_i32, %c0_i32_0 : i32, i32
  }
  func.func @transform_5(%arg0: i32) -> (i32, i32) {
    %c0_i32 = arith.constant 0 : i32
    %c0_i32_0 = arith.constant 0 : i32
    %c0_i32_1 = arith.constant 0 : i32
    return %c0_i32, %c0_i32_0 : i32, i32
  }
  func.func @transform_6(%arg0: i32) -> (i32, i32) {
    %c0_i32 = arith.constant 0 : i32
    %c0_i32_0 = arith.constant 0 : i32
    %c0_i32_1 = arith.constant 0 : i32
    return %c0_i32, %c0_i32_0 : i32, i32
  }
  func.func @transform_7(%arg0: i32) -> (i32, i32) {
    %c0_i32 = arith.constant 0 : i32
    %c0_i32_0 = arith.constant 0 : i32
    return %arg0, %c0_i32 : i32, i32
  }
}

module attributes {stable_mosaic.version = 11 : i64} {
  func.func @_mha_ln_kernel(%arg0: i32, %arg1: memref<2xi32, #tpu.memory_space<smem>>, %arg2: memref<1x8x32xf32, #tpu.memory_space<vmem>>, %arg3: memref<1x8x32xf32, #tpu.memory_space<vmem>>, %arg4: memref<32x32xf32, #tpu.memory_space<vmem>>, %arg5: memref<32x64xf32, #tpu.memory_space<vmem>>, %arg6: memref<32x32xf32, #tpu.memory_space<vmem>>, %arg7: memref<1x32xf32, #tpu.memory_space<vmem>>, %arg8: memref<1x32xf32, #tpu.memory_space<vmem>>, %arg9: memref<1x32xf32, #tpu.memory_space<vmem>>, %arg10: memref<1x8x32xf32, #tpu.memory_space<vmem>>) attributes {dimension_semantics = [#tpu.dimension_semantics<parallel>], iteration_bounds = array<i64: 2>, scalar_prefetch = 1 : i64, scratch_operands = 0 : i64, tpu.core_type = #tpu.core_type<tc>, window_params = [{transform_indices = @transform_0, window_bounds = array<i64: 1, 8, 32>}, {transform_indices = @transform_1, window_bounds = array<i64: 1, 8, 32>}, {pipeline_mode = #tpu.pipeline_mode<synchronous>, transform_indices = @transform_2, window_bounds = array<i64: 32, 32>}, {pipeline_mode = #tpu.pipeline_mode<synchronous>, transform_indices = @transform_3, window_bounds = array<i64: 32, 64>}, {pipeline_mode = #tpu.pipeline_mode<synchronous>, transform_indices = @transform_4, window_bounds = array<i64: 32, 32>}, {pipeline_mode = #tpu.pipeline_mode<synchronous>, transform_indices = @transform_5, window_bounds = array<i64: 1, 32>}, {pipeline_mode = #tpu.pipeline_mode<synchronous>, transform_indices = @transform_6, window_bounds = array<i64: 1, 32>}, {pipeline_mode = #tpu.pipeline_mode<synchronous>, transform_indices = @transform_7, window_bounds = array<i64: 1, 32>}, {transform_indices = @transform_8, window_bounds = array<i64: 1, 8, 32>}]} {
    %0 = arith.index_cast %arg0 : i32 to index
    %1 = memref.load %arg1[%0] : memref<2xi32, #tpu.memory_space<smem>>
    %c0 = arith.constant 0 : index
    %c0_0 = arith.constant 0 : index
    %c0_1 = arith.constant 0 : index
    %2 = vector.load %arg2[%c0, %c0_0, %c0_1] : memref<1x8x32xf32, #tpu.memory_space<vmem>>, vector<1x8x32xf32>
    %3 = vector.shape_cast %2 : vector<1x8x32xf32> to vector<8x32xf32>
    %c0_2 = arith.constant 0 : index
    %c0_3 = arith.constant 0 : index
    %c0_4 = arith.constant 0 : index
    %4 = vector.load %arg3[%c0_2, %c0_3, %c0_4] : memref<1x8x32xf32, #tpu.memory_space<vmem>>, vector<1x8x32xf32>
    %5 = vector.shape_cast %4 : vector<1x8x32xf32> to vector<8x32xf32>
    %c0_5 = arith.constant 0 : index
    %c0_6 = arith.constant 0 : index
    %6 = vector.load %arg4[%c0_5, %c0_6] : memref<32x32xf32, #tpu.memory_space<vmem>>, vector<32x32xf32>
    %7 = arith.truncf %3 : vector<8x32xf32> to vector<8x32xbf16>
    %8 = arith.truncf %6 : vector<32x32xf32> to vector<32x32xbf16>
    %cst = arith.constant dense<0.000000e+00> : vector<8x32xf32>
    %9 = tpu.matmul %7, %8, %cst {dimension_numbers = #tpu.dot_dimension_numbers<[1], [0], [0], [1], [0, 0, 1, 1], [], []>} : vector<8x32xbf16>, vector<32x32xbf16>, vector<8x32xf32> -> vector<8x32xf32>
    %cst_7 = arith.constant 0.353553385 : f32
    %10 = vector.broadcast %cst_7 : f32 to vector<8x32xf32>
    %11 = arith.mulf %9, %10 : vector<8x32xf32>
    %c0_8 = arith.constant 0 : index
    %c0_9 = arith.constant 0 : index
    %12 = vector.load %arg5[%c0_8, %c0_9] : memref<32x64xf32, #tpu.memory_space<vmem>>, vector<32x64xf32>
    %13 = arith.truncf %5 : vector<8x32xf32> to vector<8x32xbf16>
    %14 = arith.truncf %12 : vector<32x64xf32> to vector<32x64xbf16>
    %cst_10 = arith.constant dense<0.000000e+00> : vector<8x64xf32>
    %15 = tpu.matmul %13, %14, %cst_10 {dimension_numbers = #tpu.dot_dimension_numbers<[1], [0], [0], [1], [0, 0, 1, 1], [], []>} : vector<8x32xbf16>, vector<32x64xbf16>, vector<8x64xf32> -> vector<8x64xf32>
    %16 = vector.extract_strided_slice %15 {offsets = [0, 0], sizes = [8, 32], strides = [1, 1]} : vector<8x64xf32> to vector<8x32xf32>
    %17 = vector.extract_strided_slice %15 {offsets = [0, 32], sizes = [8, 32], strides = [1, 1]} : vector<8x64xf32> to vector<8x32xf32>
    %18 = tpu.iota {dimensions = array<i32: 1>} : vector<8x8xi32>
    %19 = vector.broadcast %1 : i32 to vector<8x8xi32>
    %20 = arith.cmpi slt, %18, %19 : vector<8x8xi32>
    %21 = tpu.iota {dimensions = array<i32: 0>} : vector<8x8xi32>
    %22 = arith.cmpi sle, %18, %21 : vector<8x8xi32>
    %23 = arith.andi %20, %22 : vector<8x8xi1>
    %cst_11 = arith.constant 0.000000e+00 : f32
    %cst_12 = arith.constant -1.000000e+09 : f32
    %24 = vector.broadcast %cst_11 : f32 to vector<8x8xf32>
    %25 = vector.broadcast %cst_12 : f32 to vector<8x8xf32>
    %26 = arith.select %23, %24, %25 : vector<8x8xi1>, vector<8x8xf32>
    %27 = vector.extract_strided_slice %11 {offsets = [0, 0], sizes = [8, 8], strides = [1, 1]} : vector<8x32xf32> to vector<8x8xf32>
    %28 = vector.extract_strided_slice %16 {offsets = [0, 0], sizes = [8, 8], strides = [1, 1]} : vector<8x32xf32> to vector<8x8xf32>
    %29 = vector.extract_strided_slice %17 {offsets = [0, 0], sizes = [8, 8], strides = [1, 1]} : vector<8x32xf32> to vector<8x8xf32>
    %30 = arith.truncf %27 : vector<8x8xf32> to vector<8x8xbf16>
    %31 = arith.truncf %28 : vector<8x8xf32> to vector<8x8xbf16>
    %cst_13 = arith.constant dense<0.000000e+00> : vector<8x8xf32>
    %32 = tpu.matmul %30, %31, %cst_13 {dimension_numbers = #tpu.dot_dimension_numbers<[1], [1], [0], [0], [0, 0, 1, 0], [], []>} : vector<8x8xbf16>, vector<8x8xbf16>, vector<8x8xf32> -> vector<8x8xf32>
    %33 = arith.addf %32, %26 : vector<8x8xf32>
    %cst_14 = arith.constant dense<0xFF800000> : vector<8xf32>
    %34 = vector.multi_reduction <maximumf>, %33, %cst_14 [1] : vector<8x8xf32> to vector<8xf32>
    %35 = vector.shape_cast %34 : vector<8xf32> to vector<8x1xf32>
    %36 = vector.broadcast %35 : vector<8x1xf32> to vector<8x8xf32>
    %37 = arith.subf %33, %36 : vector<8x8xf32>
    %38 = math.exp %37 : vector<8x8xf32>
    %cst_15 = arith.constant dense<0.000000e+00> : vector<8xf32>
    %39 = vector.multi_reduction <add>, %38, %cst_15 [1] : vector<8x8xf32> to vector<8xf32>
    %40 = vector.shape_cast %39 : vector<8xf32> to vector<8x1xf32>
    %41 = tpu.reciprocal %40 {approx = true} : vector<8x1xf32> -> vector<8x1xf32>
    %42 = vector.broadcast %41 : vector<8x1xf32> to vector<8x8xf32>
    %43 = arith.mulf %38, %42 : vector<8x8xf32>
    %44 = arith.truncf %43 : vector<8x8xf32> to vector<8x8xbf16>
    %45 = arith.truncf %29 : vector<8x8xf32> to vector<8x8xbf16>
    %cst_16 = arith.constant dense<0.000000e+00> : vector<8x8xf32>
    %46 = tpu.matmul %44, %45, %cst_16 {dimension_numbers = #tpu.dot_dimension_numbers<[1], [0], [0], [1], [0, 0, 1, 1], [], []>} : vector<8x8xbf16>, vector<8x8xbf16>, vector<8x8xf32> -> vector<8x8xf32>
    %47 = vector.extract_strided_slice %11 {offsets = [0, 8], sizes = [8, 8], strides = [1, 1]} : vector<8x32xf32> to vector<8x8xf32>
    %48 = vector.extract_strided_slice %16 {offsets = [0, 8], sizes = [8, 8], strides = [1, 1]} : vector<8x32xf32> to vector<8x8xf32>
    %49 = vector.extract_strided_slice %17 {offsets = [0, 8], sizes = [8, 8], strides = [1, 1]} : vector<8x32xf32> to vector<8x8xf32>
    %50 = arith.truncf %47 : vector<8x8xf32> to vector<8x8xbf16>
    %51 = arith.truncf %48 : vector<8x8xf32> to vector<8x8xbf16>
    %cst_17 = arith.constant dense<0.000000e+00> : vector<8x8xf32>
    %52 = tpu.matmul %50, %51, %cst_17 {dimension_numbers = #tpu.dot_dimension_numbers<[1], [1], [0], [0], [0, 0, 1, 0], [], []>} : vector<8x8xbf16>, vector<8x8xbf16>, vector<8x8xf32> -> vector<8x8xf32>
    %53 = arith.addf %52, %26 : vector<8x8xf32>
    %cst_18 = arith.constant dense<0xFF800000> : vector<8xf32>
    %54 = vector.multi_reduction <maximumf>, %53, %cst_18 [1] : vector<8x8xf32> to vector<8xf32>
    %55 = vector.shape_cast %54 : vector<8xf32> to vector<8x1xf32>
    %56 = vector.broadcast %55 : vector<8x1xf32> to vector<8x8xf32>
    %57 = arith.subf %53, %56 : vector<8x8xf32>
    %58 = math.exp %57 : vector<8x8xf32>
    %cst_19 = arith.constant dense<0.000000e+00> : vector<8xf32>
    %59 = vector.multi_reduction <add>, %58, %cst_19 [1] : vector<8x8xf32> to vector<8xf32>
    %60 = vector.shape_cast %59 : vector<8xf32> to vector<8x1xf32>
    %61 = tpu.reciprocal %60 {approx = true} : vector<8x1xf32> -> vector<8x1xf32>
    %62 = vector.broadcast %61 : vector<8x1xf32> to vector<8x8xf32>
    %63 = arith.mulf %58, %62 : vector<8x8xf32>
    %64 = arith.truncf %63 : vector<8x8xf32> to vector<8x8xbf16>
    %65 = arith.truncf %49 : vector<8x8xf32> to vector<8x8xbf16>
    %cst_20 = arith.constant dense<0.000000e+00> : vector<8x8xf32>
    %66 = tpu.matmul %64, %65, %cst_20 {dimension_numbers = #tpu.dot_dimension_numbers<[1], [0], [0], [1], [0, 0, 1, 1], [], []>} : vector<8x8xbf16>, vector<8x8xbf16>, vector<8x8xf32> -> vector<8x8xf32>
    %67 = vector.extract_strided_slice %11 {offsets = [0, 16], sizes = [8, 8], strides = [1, 1]} : vector<8x32xf32> to vector<8x8xf32>
    %68 = vector.extract_strided_slice %16 {offsets = [0, 16], sizes = [8, 8], strides = [1, 1]} : vector<8x32xf32> to vector<8x8xf32>
    %69 = vector.extract_strided_slice %17 {offsets = [0, 16], sizes = [8, 8], strides = [1, 1]} : vector<8x32xf32> to vector<8x8xf32>
    %70 = arith.truncf %67 : vector<8x8xf32> to vector<8x8xbf16>
    %71 = arith.truncf %68 : vector<8x8xf32> to vector<8x8xbf16>
    %cst_21 = arith.constant dense<0.000000e+00> : vector<8x8xf32>
    %72 = tpu.matmul %70, %71, %cst_21 {dimension_numbers = #tpu.dot_dimension_numbers<[1], [1], [0], [0], [0, 0, 1, 0], [], []>} : vector<8x8xbf16>, vector<8x8xbf16>, vector<8x8xf32> -> vector<8x8xf32>
    %73 = arith.addf %72, %26 : vector<8x8xf32>
    %cst_22 = arith.constant dense<0xFF800000> : vector<8xf32>
    %74 = vector.multi_reduction <maximumf>, %73, %cst_22 [1] : vector<8x8xf32> to vector<8xf32>
    %75 = vector.shape_cast %74 : vector<8xf32> to vector<8x1xf32>
    %76 = vector.broadcast %75 : vector<8x1xf32> to vector<8x8xf32>
    %77 = arith.subf %73, %76 : vector<8x8xf32>
    %78 = math.exp %77 : vector<8x8xf32>
    %cst_23 = arith.constant dense<0.000000e+00> : vector<8xf32>
    %79 = vector.multi_reduction <add>, %78, %cst_23 [1] : vector<8x8xf32> to vector<8xf32>
    %80 = vector.shape_cast %79 : vector<8xf32> to vector<8x1xf32>
    %81 = tpu.reciprocal %80 {approx = true} : vector<8x1xf32> -> vector<8x1xf32>
    %82 = vector.broadcast %81 : vector<8x1xf32> to vector<8x8xf32>
    %83 = arith.mulf %78, %82 : vector<8x8xf32>
    %84 = arith.truncf %83 : vector<8x8xf32> to vector<8x8xbf16>
    %85 = arith.truncf %69 : vector<8x8xf32> to vector<8x8xbf16>
    %cst_24 = arith.constant dense<0.000000e+00> : vector<8x8xf32>
    %86 = tpu.matmul %84, %85, %cst_24 {dimension_numbers = #tpu.dot_dimension_numbers<[1], [0], [0], [1], [0, 0, 1, 1], [], []>} : vector<8x8xbf16>, vector<8x8xbf16>, vector<8x8xf32> -> vector<8x8xf32>
    %87 = vector.extract_strided_slice %11 {offsets = [0, 24], sizes = [8, 8], strides = [1, 1]} : vector<8x32xf32> to vector<8x8xf32>
    %88 = vector.extract_strided_slice %16 {offsets = [0, 24], sizes = [8, 8], strides = [1, 1]} : vector<8x32xf32> to vector<8x8xf32>
    %89 = vector.extract_strided_slice %17 {offsets = [0, 24], sizes = [8, 8], strides = [1, 1]} : vector<8x32xf32> to vector<8x8xf32>
    %90 = arith.truncf %87 : vector<8x8xf32> to vector<8x8xbf16>
    %91 = arith.truncf %88 : vector<8x8xf32> to vector<8x8xbf16>
    %cst_25 = arith.constant dense<0.000000e+00> : vector<8x8xf32>
    %92 = tpu.matmul %90, %91, %cst_25 {dimension_numbers = #tpu.dot_dimension_numbers<[1], [1], [0], [0], [0, 0, 1, 0], [], []>} : vector<8x8xbf16>, vector<8x8xbf16>, vector<8x8xf32> -> vector<8x8xf32>
    %93 = arith.addf %92, %26 : vector<8x8xf32>
    %cst_26 = arith.constant dense<0xFF800000> : vector<8xf32>
    %94 = vector.multi_reduction <maximumf>, %93, %cst_26 [1] : vector<8x8xf32> to vector<8xf32>
    %95 = vector.shape_cast %94 : vector<8xf32> to vector<8x1xf32>
    %96 = vector.broadcast %95 : vector<8x1xf32> to vector<8x8xf32>
    %97 = arith.subf %93, %96 : vector<8x8xf32>
    %98 = math.exp %97 : vector<8x8xf32>
    %cst_27 = arith.constant dense<0.000000e+00> : vector<8xf32>
    %99 = vector.multi_reduction <add>, %98, %cst_27 [1] : vector<8x8xf32> to vector<8xf32>
    %100 = vector.shape_cast %99 : vector<8xf32> to vector<8x1xf32>
    %101 = tpu.reciprocal %100 {approx = true} : vector<8x1xf32> -> vector<8x1xf32>
    %102 = vector.broadcast %101 : vector<8x1xf32> to vector<8x8xf32>
    %103 = arith.mulf %98, %102 : vector<8x8xf32>
    %104 = arith.truncf %103 : vector<8x8xf32> to vector<8x8xbf16>
    %105 = arith.truncf %89 : vector<8x8xf32> to vector<8x8xbf16>
    %cst_28 = arith.constant dense<0.000000e+00> : vector<8x8xf32>
    %106 = tpu.matmul %104, %105, %cst_28 {dimension_numbers = #tpu.dot_dimension_numbers<[1], [0], [0], [1], [0, 0, 1, 1], [], []>} : vector<8x8xbf16>, vector<8x8xbf16>, vector<8x8xf32> -> vector<8x8xf32>
    %107 = tpu.concatenate %46, %66, %86, %106 in 1 : vector<8x8xf32>, vector<8x8xf32>, vector<8x8xf32>, vector<8x8xf32> -> vector<8x32xf32>
    %c0_29 = arith.constant 0 : index
    %c0_30 = arith.constant 0 : index
    %108 = vector.load %arg6[%c0_29, %c0_30] : memref<32x32xf32, #tpu.memory_space<vmem>>, vector<32x32xf32>
    %109 = arith.truncf %107 : vector<8x32xf32> to vector<8x32xbf16>
    %110 = arith.truncf %108 : vector<32x32xf32> to vector<32x32xbf16>
    %cst_31 = arith.constant dense<0.000000e+00> : vector<8x32xf32>
    %111 = tpu.matmul %109, %110, %cst_31 {dimension_numbers = #tpu.dot_dimension_numbers<[1], [0], [0], [1], [0, 0, 1, 1], [], []>} : vector<8x32xbf16>, vector<32x32xbf16>, vector<8x32xf32> -> vector<8x32xf32>
    %c0_32 = arith.constant 0 : index
    %c0_33 = arith.constant 0 : index
    %112 = vector.load %arg7[%c0_32, %c0_33] : memref<1x32xf32, #tpu.memory_space<vmem>>, vector<1x32xf32>
    %113 = vector.broadcast %112 : vector<1x32xf32> to vector<8x32xf32>
    %114 = arith.addf %111, %113 : vector<8x32xf32>
    %115 = arith.addf %3, %114 : vector<8x32xf32>
    %cst_34 = arith.constant dense<0.000000e+00> : vector<8xf32>
    %116 = vector.multi_reduction <add>, %115, %cst_34 [1] : vector<8x32xf32> to vector<8xf32>
    %117 = vector.shape_cast %116 : vector<8xf32> to vector<8x1xf32>
    %cst_35 = arith.constant 3.200000e+01 : f32
    %118 = vector.broadcast %cst_35 : f32 to vector<8x1xf32>
    %119 = arith.divf %117, %118 : vector<8x1xf32>
    %120 = vector.broadcast %119 : vector<8x1xf32> to vector<8x32xf32>
    %121 = arith.subf %115, %120 : vector<8x32xf32>
    %122 = arith.mulf %121, %121 : vector<8x32xf32>
    %cst_36 = arith.constant dense<0.000000e+00> : vector<8xf32>
    %123 = vector.multi_reduction <add>, %122, %cst_36 [1] : vector<8x32xf32> to vector<8xf32>
    %124 = vector.shape_cast %123 : vector<8xf32> to vector<8x1xf32>
    %cst_37 = arith.constant 3.200000e+01 : f32
    %125 = vector.broadcast %cst_37 : f32 to vector<8x1xf32>
    %126 = arith.divf %124, %125 : vector<8x1xf32>
    %127 = vector.broadcast %119 : vector<8x1xf32> to vector<8x32xf32>
    %128 = arith.subf %115, %127 : vector<8x32xf32>
    %cst_38 = arith.constant 9.99999997E-7 : f32
    %129 = vector.broadcast %cst_38 : f32 to vector<8x1xf32>
    %130 = arith.addf %126, %129 : vector<8x1xf32>
    %131 = math.rsqrt %130 : vector<8x1xf32>
    %132 = vector.broadcast %131 : vector<8x1xf32> to vector<8x32xf32>
    %133 = arith.mulf %128, %132 : vector<8x32xf32>
    %c0_39 = arith.constant 0 : index
    %c0_40 = arith.constant 0 : index
    %134 = vector.load %arg8[%c0_39, %c0_40] : memref<1x32xf32, #tpu.memory_space<vmem>>, vector<1x32xf32>
    %135 = vector.broadcast %134 : vector<1x32xf32> to vector<8x32xf32>
    %136 = arith.mulf %133, %135 : vector<8x32xf32>
    %c0_41 = arith.constant 0 : index
    %c0_42 = arith.constant 0 : index
    %137 = vector.load %arg9[%c0_41, %c0_42] : memref<1x32xf32, #tpu.memory_space<vmem>>, vector<1x32xf32>
    %138 = vector.broadcast %137 : vector<1x32xf32> to vector<8x32xf32>
    %139 = arith.addf %136, %138 : vector<8x32xf32>
    %c0_43 = arith.constant 0 : index
    %c0_44 = arith.constant 0 : index
    %c0_45 = arith.constant 0 : index
    %140 = vector.load %arg10[%c0_43, %c0_44, %c0_45] : memref<1x8x32xf32, #tpu.memory_space<vmem>>, vector<1x8x32xf32>
    %141 = vector.shape_cast %140 : vector<1x8x32xf32> to vector<8x32xf32>
    %142 = vector.shape_cast %139 : vector<8x32xf32> to vector<1x8x32xf32>
    tpu.vector_store %arg10[%c0_43, %c0_44, %c0_45], %142 {strides = array<i32>} : memref<1x8x32xf32, #tpu.memory_space<vmem>>, vector<1x8x32xf32>,
    return
  }
  func.func @transform_0(%arg0: i32, %arg1: memref<2xi32, #tpu.memory_space<smem>>) -> (i32, i32, i32) {
    %c0_i32 = arith.constant 0 : i32
    %c0_i32_0 = arith.constant 0 : i32
    %c0_i32_1 = arith.constant 0 : i32
    return %arg0, %c0_i32, %c0_i32_0 : i32, i32, i32
  }
  func.func @transform_1(%arg0: i32, %arg1: memref<2xi32, #tpu.memory_space<smem>>) -> (i32, i32, i32) {
    %c0_i32 = arith.constant 0 : i32
    %c0_i32_0 = arith.constant 0 : i32
    %c0_i32_1 = arith.constant 0 : i32
    return %arg0, %c0_i32, %c0_i32_0 : i32, i32, i32
  }
  func.func @transform_2(%arg0: i32, %arg1: memref<2xi32, #tpu.memory_space<smem>>) -> (i32, i32) {
    %c0_i32 = arith.constant 0 : i32
    %c0_i32_0 = arith.constant 0 : i32
    %c0_i32_1 = arith.constant 0 : i32
    return %c0_i32, %c0_i32_0 : i32, i32
  }
  func.func @transform_3(%arg0: i32, %arg1: memref<2xi32, #tpu.memory_space<smem>>) -> (i32, i32) {
    %c0_i32 = arith.constant 0 : i32
    %c0_i32_0 = arith.constant 0 : i32
    %c0_i32_1 = arith.constant 0 : i32
    return %c0_i32, %c0_i32_0 : i32, i32
  }
  func.func @transform_4(%arg0: i32, %arg1: memref<2xi32, #tpu.memory_space<smem>>) -> (i32, i32) {
    %c0_i32 = arith.constant 0 : i32
    %c0_i32_0 = arith.constant 0 : i32
    %c0_i32_1 = arith.constant 0 : i32
    return %c0_i32, %c0_i32_0 : i32, i32
  }
  func.func @transform_5(%arg0: i32, %arg1: memref<2xi32, #tpu.memory_space<smem>>) -> (i32, i32) {
    %c0_i32 = arith.constant 0 : i32
    %c0_i32_0 = arith.constant 0 : i32
    %c0_i32_1 = arith.constant 0 : i32
    return %c0_i32, %c0_i32_0 : i32, i32
  }
  func.func @transform_6(%arg0: i32, %arg1: memref<2xi32, #tpu.memory_space<smem>>) -> (i32, i32) {
    %c0_i32 = arith.constant 0 : i32
    %c0_i32_0 = arith.constant 0 : i32
    %c0_i32_1 = arith.constant 0 : i32
    return %c0_i32, %c0_i32_0 : i32, i32
  }
  func.func @transform_7(%arg0: i32, %arg1: memref<2xi32, #tpu.memory_space<smem>>) -> (i32, i32) {
    %c0_i32 = arith.constant 0 : i32
    %c0_i32_0 = arith.constant 0 : i32
    %c0_i32_1 = arith.constant 0 : i32
    return %c0_i32, %c0_i32_0 : i32, i32
  }
  func.func @transform_8(%arg0: i32, %arg1: memref<2xi32, #tpu.memory_space<smem>>) -> (i32, i32, i32) {
    %c0_i32 = arith.constant 0 : i32
    %c0_i32_0 = arith.constant 0 : i32
    %c0_i32_1 = arith.constant 0 : i32
    return %arg0, %c0_i32, %c0_i32_0 : i32, i32, i32
  }
}

module attributes {stable_mosaic.version = 11 : i64} {
  func.func @_mha_ln_kernel(%arg0: i32, %arg1: memref<2xi32, #tpu.memory_space<smem>>, %arg2: memref<1x8x32xf32, #tpu.memory_space<vmem>>, %arg3: memref<1x8x32xf32, #tpu.memory_space<vmem>>, %arg4: memref<32x32xf32, #tpu.memory_space<vmem>>, %arg5: memref<32x64xf32, #tpu.memory_space<vmem>>, %arg6: memref<32x32xf32, #tpu.memory_space<vmem>>, %arg7: memref<1x32xf32, #tpu.memory_space<vmem>>, %arg8: memref<1x32xf32, #tpu.memory_space<vmem>>, %arg9: memref<1x32xf32, #tpu.memory_space<vmem>>, %arg10: memref<1x8x32xf32, #tpu.memory_space<vmem>>) attributes {dimension_semantics = [#tpu.dimension_semantics<parallel>], iteration_bounds = array<i64: 2>, scalar_prefetch = 1 : i64, scratch_operands = 0 : i64, tpu.core_type = #tpu.core_type<tc>, window_params = [{transform_indices = @transform_0, window_bounds = array<i64: 1, 8, 32>}, {transform_indices = @transform_1, window_bounds = array<i64: 1, 8, 32>}, {pipeline_mode = #tpu.pipeline_mode<synchronous>, transform_indices = @transform_2, window_bounds = array<i64: 32, 32>}, {pipeline_mode = #tpu.pipeline_mode<synchronous>, transform_indices = @transform_3, window_bounds = array<i64: 32, 64>}, {pipeline_mode = #tpu.pipeline_mode<synchronous>, transform_indices = @transform_4, window_bounds = array<i64: 32, 32>}, {pipeline_mode = #tpu.pipeline_mode<synchronous>, transform_indices = @transform_5, window_bounds = array<i64: 1, 32>}, {pipeline_mode = #tpu.pipeline_mode<synchronous>, transform_indices = @transform_6, window_bounds = array<i64: 1, 32>}, {pipeline_mode = #tpu.pipeline_mode<synchronous>, transform_indices = @transform_7, window_bounds = array<i64: 1, 32>}, {transform_indices = @transform_8, window_bounds = array<i64: 1, 8, 32>}]} {
    %0 = arith.index_cast %arg0 : i32 to index
    %1 = memref.load %arg1[%0] : memref<2xi32, #tpu.memory_space<smem>>
    %c0 = arith.constant 0 : index
    %c0_0 = arith.constant 0 : index
    %c0_1 = arith.constant 0 : index
    %2 = vector.load %arg2[%c0, %c0_0, %c0_1] : memref<1x8x32xf32, #tpu.memory_space<vmem>>, vector<1x8x32xf32>
    %3 = vector.shape_cast %2 : vector<1x8x32xf32> to vector<8x32xf32>
    %c0_2 = arith.constant 0 : index
    %c0_3 = arith.constant 0 : index
    %c0_4 = arith.constant 0 : index
    %4 = vector.load %arg3[%c0_2, %c0_3, %c0_4] : memref<1x8x32xf32, #tpu.memory_space<vmem>>, vector<1x8x32xf32>
    %5 = vector.shape_cast %4 : vector<1x8x32xf32> to vector<8x32xf32>
    %c0_5 = arith.constant 0 : index
    %c0_6 = arith.constant 0 : index
    %6 = vector.load %arg4[%c0_5, %c0_6] : memref<32x32xf32, #tpu.memory_space<vmem>>, vector<32x32xf32>
    %7 = arith.truncf %3 : vector<8x32xf32> to vector<8x32xbf16>
    %8 = arith.truncf %6 : vector<32x32xf32> to vector<32x32xbf16>
    %cst = arith.constant dense<0.000000e+00> : vector<8x32xf32>
    %9 = tpu.matmul %7, %8, %cst {dimension_numbers = #tpu.dot_dimension_numbers<[1], [0], [0], [1], [0, 0, 1, 1], [], []>} : vector<8x32xbf16>, vector<32x32xbf16>, vector<8x32xf32> -> vector<8x32xf32>
    %cst_7 = arith.constant 0.353553385 : f32
    %10 = vector.broadcast %cst_7 : f32 to vector<8x32xf32>
    %11 = arith.mulf %9, %10 : vector<8x32xf32>
    %c0_8 = arith.constant 0 : index
    %c0_9 = arith.constant 0 : index
    %12 = vector.load %arg5[%c0_8, %c0_9] : memref<32x64xf32, #tpu.memory_space<vmem>>, vector<32x64xf32>
    %13 = arith.truncf %5 : vector<8x32xf32> to vector<8x32xbf16>
    %14 = arith.truncf %12 : vector<32x64xf32> to vector<32x64xbf16>
    %cst_10 = arith.constant dense<0.000000e+00> : vector<8x64xf32>
    %15 = tpu.matmul %13, %14, %cst_10 {dimension_numbers = #tpu.dot_dimension_numbers<[1], [0], [0], [1], [0, 0, 1, 1], [], []>} : vector<8x32xbf16>, vector<32x64xbf16>, vector<8x64xf32> -> vector<8x64xf32>
    %16 = vector.extract_strided_slice %15 {offsets = [0, 0], sizes = [8, 32], strides = [1, 1]} : vector<8x64xf32> to vector<8x32xf32>
    %17 = vector.extract_strided_slice %15 {offsets = [0, 32], sizes = [8, 32], strides = [1, 1]} : vector<8x64xf32> to vector<8x32xf32>
    %18 = tpu.iota {dimensions = array<i32: 1>} : vector<8x8xi32>
    %19 = vector.broadcast %1 : i32 to vector<8x8xi32>
    %20 = arith.cmpi slt, %18, %19 : vector<8x8xi32>
    %cst_11 = arith.constant 0.000000e+00 : f32
    %cst_12 = arith.constant -1.000000e+09 : f32
    %21 = vector.broadcast %cst_11 : f32 to vector<8x8xf32>
    %22 = vector.broadcast %cst_12 : f32 to vector<8x8xf32>
    %23 = arith.select %20, %21, %22 : vector<8x8xi1>, vector<8x8xf32>
    %24 = vector.extract_strided_slice %11 {offsets = [0, 0], sizes = [8, 8], strides = [1, 1]} : vector<8x32xf32> to vector<8x8xf32>
    %25 = vector.extract_strided_slice %16 {offsets = [0, 0], sizes = [8, 8], strides = [1, 1]} : vector<8x32xf32> to vector<8x8xf32>
    %26 = vector.extract_strided_slice %17 {offsets = [0, 0], sizes = [8, 8], strides = [1, 1]} : vector<8x32xf32> to vector<8x8xf32>
    %27 = arith.truncf %24 : vector<8x8xf32> to vector<8x8xbf16>
    %28 = arith.truncf %25 : vector<8x8xf32> to vector<8x8xbf16>
    %cst_13 = arith.constant dense<0.000000e+00> : vector<8x8xf32>
    %29 = tpu.matmul %27, %28, %cst_13 {dimension_numbers = #tpu.dot_dimension_numbers<[1], [1], [0], [0], [0, 0, 1, 0], [], []>} : vector<8x8xbf16>, vector<8x8xbf16>, vector<8x8xf32> -> vector<8x8xf32>
    %30 = arith.addf %29, %23 : vector<8x8xf32>
    %cst_14 = arith.constant dense<0xFF800000> : vector<8xf32>
    %31 = vector.multi_reduction <maximumf>, %30, %cst_14 [1] : vector<8x8xf32> to vector<8xf32>
    %32 = vector.shape_cast %31 : vector<8xf32> to vector<8x1xf32>
    %33 = vector.broadcast %32 : vector<8x1xf32> to vector<8x8xf32>
    %34 = arith.subf %30, %33 : vector<8x8xf32>
    %35 = math.exp %34 : vector<8x8xf32>
    %cst_15 = arith.constant dense<0.000000e+00> : vector<8xf32>
    %36 = vector.multi_reduction <add>, %35, %cst_15 [1] : vector<8x8xf32> to vector<8xf32>
    %37 = vector.shape_cast %36 : vector<8xf32> to vector<8x1xf32>
    %38 = tpu.reciprocal %37 {approx = true} : vector<8x1xf32> -> vector<8x1xf32>
    %39 = vector.broadcast %38 : vector<8x1xf32> to vector<8x8xf32>
    %40 = arith.mulf %35, %39 : vector<8x8xf32>
    %41 = arith.truncf %40 : vector<8x8xf32> to vector<8x8xbf16>
    %42 = arith.truncf %26 : vector<8x8xf32> to vector<8x8xbf16>
    %cst_16 = arith.constant dense<0.000000e+00> : vector<8x8xf32>
    %43 = tpu.matmul %41, %42, %cst_16 {dimension_numbers = #tpu.dot_dimension_numbers<[1], [0], [0], [1], [0, 0, 1, 1], [], []>} : vector<8x8xbf16>, vector<8x8xbf16>, vector<8x8xf32> -> vector<8x8xf32>
    %44 = vector.extract_strided_slice %11 {offsets = [0, 8], sizes = [8, 8], strides = [1, 1]} : vector<8x32xf32> to vector<8x8xf32>
    %45 = vector.extract_strided_slice %16 {offsets = [0, 8], sizes = [8, 8], strides = [1, 1]} : vector<8x32xf32> to vector<8x8xf32>
    %46 = vector.extract_strided_slice %17 {offsets = [0, 8], sizes = [8, 8], strides = [1, 1]} : vector<8x32xf32> to vector<8x8xf32>
    %47 = arith.truncf %44 : vector<8x8xf32> to vector<8x8xbf16>
    %48 = arith.truncf %45 : vector<8x8xf32> to vector<8x8xbf16>
    %cst_17 = arith.constant dense<0.000000e+00> : vector<8x8xf32>
    %49 = tpu.matmul %47, %48, %cst_17 {dimension_numbers = #tpu.dot_dimension_numbers<[1], [1], [0], [0], [0, 0, 1, 0], [], []>} : vector<8x8xbf16>, vector<8x8xbf16>, vector<8x8xf32> -> vector<8x8xf32>
    %50 = arith.addf %49, %23 : vector<8x8xf32>
    %cst_18 = arith.constant dense<0xFF800000> : vector<8xf32>
    %51 = vector.multi_reduction <maximumf>, %50, %cst_18 [1] : vector<8x8xf32> to vector<8xf32>
    %52 = vector.shape_cast %51 : vector<8xf32> to vector<8x1xf32>
    %53 = vector.broadcast %52 : vector<8x1xf32> to vector<8x8xf32>
    %54 = arith.subf %50, %53 : vector<8x8xf32>
    %55 = math.exp %54 : vector<8x8xf32>
    %cst_19 = arith.constant dense<0.000000e+00> : vector<8xf32>
    %56 = vector.multi_reduction <add>, %55, %cst_19 [1] : vector<8x8xf32> to vector<8xf32>
    %57 = vector.shape_cast %56 : vector<8xf32> to vector<8x1xf32>
    %58 = tpu.reciprocal %57 {approx = true} : vector<8x1xf32> -> vector<8x1xf32>
    %59 = vector.broadcast %58 : vector<8x1xf32> to vector<8x8xf32>
    %60 = arith.mulf %55, %59 : vector<8x8xf32>
    %61 = arith.truncf %60 : vector<8x8xf32> to vector<8x8xbf16>
    %62 = arith.truncf %46 : vector<8x8xf32> to vector<8x8xbf16>
    %cst_20 = arith.constant dense<0.000000e+00> : vector<8x8xf32>
    %63 = tpu.matmul %61, %62, %cst_20 {dimension_numbers = #tpu.dot_dimension_numbers<[1], [0], [0], [1], [0, 0, 1, 1], [], []>} : vector<8x8xbf16>, vector<8x8xbf16>, vector<8x8xf32> -> vector<8x8xf32>
    %64 = vector.extract_strided_slice %11 {offsets = [0, 16], sizes = [8, 8], strides = [1, 1]} : vector<8x32xf32> to vector<8x8xf32>
    %65 = vector.extract_strided_slice %16 {offsets = [0, 16], sizes = [8, 8], strides = [1, 1]} : vector<8x32xf32> to vector<8x8xf32>
    %66 = vector.extract_strided_slice %17 {offsets = [0, 16], sizes = [8, 8], strides = [1, 1]} : vector<8x32xf32> to vector<8x8xf32>
    %67 = arith.truncf %64 : vector<8x8xf32> to vector<8x8xbf16>
    %68 = arith.truncf %65 : vector<8x8xf32> to vector<8x8xbf16>
    %cst_21 = arith.constant dense<0.000000e+00> : vector<8x8xf32>
    %69 = tpu.matmul %67, %68, %cst_21 {dimension_numbers = #tpu.dot_dimension_numbers<[1], [1], [0], [0], [0, 0, 1, 0], [], []>} : vector<8x8xbf16>, vector<8x8xbf16>, vector<8x8xf32> -> vector<8x8xf32>
    %70 = arith.addf %69, %23 : vector<8x8xf32>
    %cst_22 = arith.constant dense<0xFF800000> : vector<8xf32>
    %71 = vector.multi_reduction <maximumf>, %70, %cst_22 [1] : vector<8x8xf32> to vector<8xf32>
    %72 = vector.shape_cast %71 : vector<8xf32> to vector<8x1xf32>
    %73 = vector.broadcast %72 : vector<8x1xf32> to vector<8x8xf32>
    %74 = arith.subf %70, %73 : vector<8x8xf32>
    %75 = math.exp %74 : vector<8x8xf32>
    %cst_23 = arith.constant dense<0.000000e+00> : vector<8xf32>
    %76 = vector.multi_reduction <add>, %75, %cst_23 [1] : vector<8x8xf32> to vector<8xf32>
    %77 = vector.shape_cast %76 : vector<8xf32> to vector<8x1xf32>
    %78 = tpu.reciprocal %77 {approx = true} : vector<8x1xf32> -> vector<8x1xf32>
    %79 = vector.broadcast %78 : vector<8x1xf32> to vector<8x8xf32>
    %80 = arith.mulf %75, %79 : vector<8x8xf32>
    %81 = arith.truncf %80 : vector<8x8xf32> to vector<8x8xbf16>
    %82 = arith.truncf %66 : vector<8x8xf32> to vector<8x8xbf16>
    %cst_24 = arith.constant dense<0.000000e+00> : vector<8x8xf32>
    %83 = tpu.matmul %81, %82, %cst_24 {dimension_numbers = #tpu.dot_dimension_numbers<[1], [0], [0], [1], [0, 0, 1, 1], [], []>} : vector<8x8xbf16>, vector<8x8xbf16>, vector<8x8xf32> -> vector<8x8xf32>
    %84 = vector.extract_strided_slice %11 {offsets = [0, 24], sizes = [8, 8], strides = [1, 1]} : vector<8x32xf32> to vector<8x8xf32>
    %85 = vector.extract_strided_slice %16 {offsets = [0, 24], sizes = [8, 8], strides = [1, 1]} : vector<8x32xf32> to vector<8x8xf32>
    %86 = vector.extract_strided_slice %17 {offsets = [0, 24], sizes = [8, 8], strides = [1, 1]} : vector<8x32xf32> to vector<8x8xf32>
    %87 = arith.truncf %84 : vector<8x8xf32> to vector<8x8xbf16>
    %88 = arith.truncf %85 : vector<8x8xf32> to vector<8x8xbf16>
    %cst_25 = arith.constant dense<0.000000e+00> : vector<8x8xf32>
    %89 = tpu.matmul %87, %88, %cst_25 {dimension_numbers = #tpu.dot_dimension_numbers<[1], [1], [0], [0], [0, 0, 1, 0], [], []>} : vector<8x8xbf16>, vector<8x8xbf16>, vector<8x8xf32> -> vector<8x8xf32>
    %90 = arith.addf %89, %23 : vector<8x8xf32>
    %cst_26 = arith.constant dense<0xFF800000> : vector<8xf32>
    %91 = vector.multi_reduction <maximumf>, %90, %cst_26 [1] : vector<8x8xf32> to vector<8xf32>
    %92 = vector.shape_cast %91 : vector<8xf32> to vector<8x1xf32>
    %93 = vector.broadcast %92 : vector<8x1xf32> to vector<8x8xf32>
    %94 = arith.subf %90, %93 : vector<8x8xf32>
    %95 = math.exp %94 : vector<8x8xf32>
    %cst_27 = arith.constant dense<0.000000e+00> : vector<8xf32>
    %96 = vector.multi_reduction <add>, %95, %cst_27 [1] : vector<8x8xf32> to vector<8xf32>
    %97 = vector.shape_cast %96 : vector<8xf32> to vector<8x1xf32>
    %98 = tpu.reciprocal %97 {approx = true} : vector<8x1xf32> -> vector<8x1xf32>
    %99 = vector.broadcast %98 : vector<8x1xf32> to vector<8x8xf32>
    %100 = arith.mulf %95, %99 : vector<8x8xf32>
    %101 = arith.truncf %100 : vector<8x8xf32> to vector<8x8xbf16>
    %102 = arith.truncf %86 : vector<8x8xf32> to vector<8x8xbf16>
    %cst_28 = arith.constant dense<0.000000e+00> : vector<8x8xf32>
    %103 = tpu.matmul %101, %102, %cst_28 {dimension_numbers = #tpu.dot_dimension_numbers<[1], [0], [0], [1], [0, 0, 1, 1], [], []>} : vector<8x8xbf16>, vector<8x8xbf16>, vector<8x8xf32> -> vector<8x8xf32>
    %104 = tpu.concatenate %43, %63, %83, %103 in 1 : vector<8x8xf32>, vector<8x8xf32>, vector<8x8xf32>, vector<8x8xf32> -> vector<8x32xf32>
    %c0_29 = arith.constant 0 : index
    %c0_30 = arith.constant 0 : index
    %105 = vector.load %arg6[%c0_29, %c0_30] : memref<32x32xf32, #tpu.memory_space<vmem>>, vector<32x32xf32>
    %106 = arith.truncf %104 : vector<8x32xf32> to vector<8x32xbf16>
    %107 = arith.truncf %105 : vector<32x32xf32> to vector<32x32xbf16>
    %cst_31 = arith.constant dense<0.000000e+00> : vector<8x32xf32>
    %108 = tpu.matmul %106, %107, %cst_31 {dimension_numbers = #tpu.dot_dimension_numbers<[1], [0], [0], [1], [0, 0, 1, 1], [], []>} : vector<8x32xbf16>, vector<32x32xbf16>, vector<8x32xf32> -> vector<8x32xf32>
    %c0_32 = arith.constant 0 : index
    %c0_33 = arith.constant 0 : index
    %109 = vector.load %arg7[%c0_32, %c0_33] : memref<1x32xf32, #tpu.memory_space<vmem>>, vector<1x32xf32>
    %110 = vector.broadcast %109 : vector<1x32xf32> to vector<8x32xf32>
    %111 = arith.addf %108, %110 : vector<8x32xf32>
    %112 = arith.addf %3, %111 : vector<8x32xf32>
    %cst_34 = arith.constant dense<0.000000e+00> : vector<8xf32>
    %113 = vector.multi_reduction <add>, %112, %cst_34 [1] : vector<8x32xf32> to vector<8xf32>
    %114 = vector.shape_cast %113 : vector<8xf32> to vector<8x1xf32>
    %cst_35 = arith.constant 3.200000e+01 : f32
    %115 = vector.broadcast %cst_35 : f32 to vector<8x1xf32>
    %116 = arith.divf %114, %115 : vector<8x1xf32>
    %117 = vector.broadcast %116 : vector<8x1xf32> to vector<8x32xf32>
    %118 = arith.subf %112, %117 : vector<8x32xf32>
    %119 = arith.mulf %118, %118 : vector<8x32xf32>
    %cst_36 = arith.constant dense<0.000000e+00> : vector<8xf32>
    %120 = vector.multi_reduction <add>, %119, %cst_36 [1] : vector<8x32xf32> to vector<8xf32>
    %121 = vector.shape_cast %120 : vector<8xf32> to vector<8x1xf32>
    %cst_37 = arith.constant 3.200000e+01 : f32
    %122 = vector.broadcast %cst_37 : f32 to vector<8x1xf32>
    %123 = arith.divf %121, %122 : vector<8x1xf32>
    %124 = vector.broadcast %116 : vector<8x1xf32> to vector<8x32xf32>
    %125 = arith.subf %112, %124 : vector<8x32xf32>
    %cst_38 = arith.constant 9.99999997E-7 : f32
    %126 = vector.broadcast %cst_38 : f32 to vector<8x1xf32>
    %127 = arith.addf %123, %126 : vector<8x1xf32>
    %128 = math.rsqrt %127 : vector<8x1xf32>
    %129 = vector.broadcast %128 : vector<8x1xf32> to vector<8x32xf32>
    %130 = arith.mulf %125, %129 : vector<8x32xf32>
    %c0_39 = arith.constant 0 : index
    %c0_40 = arith.constant 0 : index
    %131 = vector.load %arg8[%c0_39, %c0_40] : memref<1x32xf32, #tpu.memory_space<vmem>>, vector<1x32xf32>
    %132 = vector.broadcast %131 : vector<1x32xf32> to vector<8x32xf32>
    %133 = arith.mulf %130, %132 : vector<8x32xf32>
    %c0_41 = arith.constant 0 : index
    %c0_42 = arith.constant 0 : index
    %134 = vector.load %arg9[%c0_41, %c0_42] : memref<1x32xf32, #tpu.memory_space<vmem>>, vector<1x32xf32>
    %135 = vector.broadcast %134 : vector<1x32xf32> to vector<8x32xf32>
    %136 = arith.addf %133, %135 : vector<8x32xf32>
    %c0_43 = arith.constant 0 : index
    %c0_44 = arith.constant 0 : index
    %c0_45 = arith.constant 0 : index
    %137 = vector.load %arg10[%c0_43, %c0_44, %c0_45] : memref<1x8x32xf32, #tpu.memory_space<vmem>>, vector<1x8x32xf32>
    %138 = vector.shape_cast %137 : vector<1x8x32xf32> to vector<8x32xf32>
    %139 = vector.shape_cast %136 : vector<8x32xf32> to vector<1x8x32xf32>
    tpu.vector_store %arg10[%c0_43, %c0_44, %c0_45], %139 {strides = array<i32>} : memref<1x8x32xf32, #tpu.memory_space<vmem>>, vector<1x8x32xf32>,
    return
  }
  func.func @transform_0(%arg0: i32, %arg1: memref<2xi32, #tpu.memory_space<smem>>) -> (i32, i32, i32) {
    %c0_i32 = arith.constant 0 : i32
    %c0_i32_0 = arith.constant 0 : i32
    %c0_i32_1 = arith.constant 0 : i32
    return %arg0, %c0_i32, %c0_i32_0 : i32, i32, i32
  }
  func.func @transform_1(%arg0: i32, %arg1: memref<2xi32, #tpu.memory_space<smem>>) -> (i32, i32, i32) {
    %c0_i32 = arith.constant 0 : i32
    %c0_i32_0 = arith.constant 0 : i32
    %c0_i32_1 = arith.constant 0 : i32
    return %arg0, %c0_i32, %c0_i32_0 : i32, i32, i32
  }
  func.func @transform_2(%arg0: i32, %arg1: memref<2xi32, #tpu.memory_space<smem>>) -> (i32, i32) {
    %c0_i32 = arith.constant 0 : i32
    %c0_i32_0 = arith.constant 0 : i32
    %c0_i32_1 = arith.constant 0 : i32
    return %c0_i32, %c0_i32_0 : i32, i32
  }
  func.func @transform_3(%arg0: i32, %arg1: memref<2xi32, #tpu.memory_space<smem>>) -> (i32, i32) {
    %c0_i32 = arith.constant 0 : i32
    %c0_i32_0 = arith.constant 0 : i32
    %c0_i32_1 = arith.constant 0 : i32
    return %c0_i32, %c0_i32_0 : i32, i32
  }
  func.func @transform_4(%arg0: i32, %arg1: memref<2xi32, #tpu.memory_space<smem>>) -> (i32, i32) {
    %c0_i32 = arith.constant 0 : i32
    %c0_i32_0 = arith.constant 0 : i32
    %c0_i32_1 = arith.constant 0 : i32
    return %c0_i32, %c0_i32_0 : i32, i32
  }
  func.func @transform_5(%arg0: i32, %arg1: memref<2xi32, #tpu.memory_space<smem>>) -> (i32, i32) {
    %c0_i32 = arith.constant 0 : i32
    %c0_i32_0 = arith.constant 0 : i32
    %c0_i32_1 = arith.constant 0 : i32
    return %c0_i32, %c0_i32_0 : i32, i32
  }
  func.func @transform_6(%arg0: i32, %arg1: memref<2xi32, #tpu.memory_space<smem>>) -> (i32, i32) {
    %c0_i32 = arith.constant 0 : i32
    %c0_i32_0 = arith.constant 0 : i32
    %c0_i32_1 = arith.constant 0 : i32
    return %c0_i32, %c0_i32_0 : i32, i32
  }
  func.func @transform_7(%arg0: i32, %arg1: memref<2xi32, #tpu.memory_space<smem>>) -> (i32, i32) {
    %c0_i32 = arith.constant 0 : i32
    %c0_i32_0 = arith.constant 0 : i32
    %c0_i32_1 = arith.constant 0 : i32
    return %c0_i32, %c0_i32_0 : i32, i32
  }
  func.func @transform_8(%arg0: i32, %arg1: memref<2xi32, #tpu.memory_space<smem>>) -> (i32, i32, i32) {
    %c0_i32 = arith.constant 0 : i32
    %c0_i32_0 = arith.constant 0 : i32
    %c0_i32_1 = arith.constant 0 : i32
    return %arg0, %c0_i32, %c0_i32_0 : i32, i32, i32
  }
}

</mosaic_0001>

<llo_original>
// kernel: _lambda_.12
$region0: #{_lambda_.12}
  #allocation0 [shape = 'u32[]', space=smem, size = 0x4, offset = 0x4, fixed_abs, tag = 'smem constant byte address 0x4 - core index']
  #allocation1 [shape = 'u32[144,128]{1,0:T(1,128)}', space=vmem, size = 0x12000, scoped, tag = 'internal scratch']
  %s0 = inlined_call_operand.vmem [shape: f32[16,32], index: 0, kind: input, shape index: {}]
  %s1 = inlined_call_operand.vmem [shape: f32[32,64], index: 1, kind: input, shape index: {}]
  %s2 = inlined_call_operand.vmem [shape: f32[1,64], index: 2, kind: input, shape index: {}]
  %s3 = inlined_call_operand.vmem [shape: f32[64,32], index: 3, kind: input, shape index: {}]
  %s4 = inlined_call_operand.vmem [shape: f32[1,32], index: 4, kind: input, shape index: {}]
  %s5 = inlined_call_operand.vmem [shape: f32[1,32], index: 5, kind: input, shape index: {}]
  %s6 = inlined_call_operand.vmem [shape: f32[1,32], index: 6, kind: input, shape index: {}]
  %s7 = inlined_call_operand.vmem [shape: f32[16,32], index: 7, kind: output, shape index: {}]
  %s8 = sld [smem:[#allocation0]]
  $region38: #{_lambda_.12} parent=0
    _
  %s10 = ssub.s32 1, %s8
  %s11 = scalar_select 0, %s10, %s8
  // Predicated region
  $region2: #{_lambda_.12} parent=0 // pred_check
    _
  $region3: #{_lambda_.12} parent=0 // pred_check_branch
    %13 = sbr.rel (0) target = $region5
  $region4: #{_lambda_.12} parent=0 // pred_region
    _
  $region5: #{_lambda_.12} parent=0 // pred_fallthru
    _
  // Predicated region
  $region6: #{_lambda_.12} parent=0 // pred_check
    _
  $region7: #{_lambda_.12} parent=0 // pred_check_branch
    %15 = sbr.rel (0) target = $region9
  $region8: #{_lambda_.12} parent=0 // pred_region
    _
  $region9: #{_lambda_.12} parent=0 // pred_fallthru
    _
  // Predicated region
  $region10: #{_lambda_.12} parent=0 // pred_check
    _
  $region11: #{_lambda_.12} parent=0 // pred_check_branch
    %17 = sbr.rel (0) target = $region13
  $region12: #{_lambda_.12} parent=0 // pred_region
    _
  $region13: #{_lambda_.12} parent=0 // pred_fallthru
    _
  // Predicated region
  $region14: #{_lambda_.12} parent=0 // pred_check
    _
  $region15: #{_lambda_.12} parent=0 // pred_check_branch
    %19 = sbr.rel (0) target = $region17
  $region16: #{_lambda_.12} parent=0 // pred_region
    _
  $region17: #{_lambda_.12} parent=0 // pred_fallthru
    _
  // Predicated region
  $region18: #{_lambda_.12} parent=0 // pred_check
    _
  $region19: #{_lambda_.12} parent=0 // pred_check_branch
    %21 = sbr.rel (0) target = $region21
  $region20: #{_lambda_.12} parent=0 // pred_region
    _
  $region21: #{_lambda_.12} parent=0 // pred_fallthru
    _
  // Predicated region
  $region22: #{_lambda_.12} parent=0 // pred_check
    _
  $region23: #{_lambda_.12} parent=0 // pred_check_branch
    %23 = sbr.rel (0) target = $region25
  $region24: #{_lambda_.12} parent=0 // pred_region
    _
  $region25: #{_lambda_.12} parent=0 // pred_fallthru
    _
  // Predicated region
  $region26: #{_lambda_.12} parent=0 // pred_check
    _
  $region27: #{_lambda_.12} parent=0 // pred_check_branch
    %25 = sbr.rel (0) target = $region29
  $region28: #{_lambda_.12} parent=0 // pred_region
    _
  $region29: #{_lambda_.12} parent=0 // pred_fallthru
    _
  %v27 = vld [vmem:[%s0] sm:$0xff]
  %v28 = vld [vmem:[%s0 + $0x8] sm:$0xff]
  %v29 = vld [vmem:[%s1] sm:$0xff]
  %v30 = vld [vmem:[%s1 + $0x8] sm:$0xff]
  %v31 = vld [vmem:[%s1 + $0x10] sm:$0xff]
  %v32 = vld [vmem:[%s1 + $0x18] sm:$0xff]
  %v33 = vpack.c.bf16 %v28, %v27
  %v34 = vpack.c.bf16 %v30, %v29
  %v35 = vpack.c.bf16 %v32, %v31
  %v36 = vld [vmem:[%s2] sm:$0x1]
  %v38 = vlaneseq
  %v39 = vshrl.u32 %v38, 7
  %v40 = vsub.s32 0, %v39
  %v41 = vrot.slane %v36, %v40
  %vm43 = vcmask 261120
  %v45 = vsel %vm43, %v33, 0
  %47 = vmatprep.subr.bf16.mxu0 0
  %48 = vmatpush1.bf16.msra.mxu0 %v34
  %49 = vmatprep.subr.bf16.mxu0 0
  %50 = vmatpush1.bf16.msra.mxu0 %v35
  %51 = vmatprep.subr.bf16.mxu0 0
  %52 = vmatpush1.bf16.msra.mxu0 0
  %53 = vmatprep.subr.bf16.mxu0 0
  %54 = vmatpush1.bf16.msra.mxu0 0
  %55 = vmatprep.subr.bf16.mxu0 0
  %56 = vmatpush1.bf16.msra.mxu0 0
  %57 = vmatprep.subr.bf16.mxu0 0
  %58 = vmatpush1.bf16.msra.mxu0 0
  %59 = vmatprep.subr.bf16.mxu0 0
  %60 = vmatpush1.bf16.msra.mxu0 0
  %61 = vmatprep.subr.bf16.mxu0 0
  %62 = vmatpush1.bf16.msra.mxu0 0
  %63 = vmatprep.subr.bf16.mxu0 0
  %64 = vmatpush1.bf16.msra.mxu0 0
  %65 = vmatprep.subr.bf16.mxu0 0
  %66 = vmatpush1.bf16.msra.mxu0 0
  %67 = vmatprep.subr.bf16.mxu0 0
  %68 = vmatpush1.bf16.msra.mxu0 0
  %69 = vmatprep.subr.bf16.mxu0 0
  %70 = vmatpush1.bf16.msra.mxu0 0
  %71 = vmatprep.subr.bf16.mxu0 0
  %72 = vmatpush1.bf16.msra.mxu0 0
  %73 = vmatprep.subr.bf16.mxu0 0
  %74 = vmatpush1.bf16.msra.mxu0 0
  %75 = vmatprep.subr.bf16.mxu0 0
  %76 = vmatpush1.bf16.msra.mxu0 0
  %77 = vmatprep.subr.bf16.mxu0 0
  %78 = vmatpush1.bf16.msra.mxu0 0
  %79 = vmatprep.mubr.bf16.mxu0 0
  %80 = vmatmul.mubr.bf16.gmra.mrb[0].mxu0 %v45
  %v81 = vpop.f32.mrb[0].mxu0
  %v82 = vadd.f32 %v41, %v81
  %v83 = vpop.f32.mrb[0].mxu0
  %v84 = vpop.f32.mrb[0].mxu0
  %v85 = vadd.f32 %v41, %v84
  %v86 = vpop.f32.mrb[0].mxu0
  %87 = vdwg.mxu0
  %v88 = vmax.f32 %v82, 0.0
  %v89 = vmax.f32 %v85, 0.0
  %v90 = vld [vmem:[%s3] sm:$0xff]
  %v91 = vld [vmem:[%s3 + $0x8] sm:$0xff]
  %v92 = vld [vmem:[%s3 + $0x10] sm:$0xff]
  %v93 = vld [vmem:[%s3 + $0x18] sm:$0xff]
  %v94 = vld [vmem:[%s3 + $0x20] sm:$0xff]
  %v95 = vld [vmem:[%s3 + $0x28] sm:$0xff]
  %v96 = vld [vmem:[%s3 + $0x30] sm:$0xff]
  %v97 = vld [vmem:[%s3 + $0x38] sm:$0xff]
  %v98 = vpack.c.bf16 %v89, %v88
  %v99 = vpack.c.bf16 %v91, %v90
  %v100 = vpack.c.bf16 %v93, %v92
  %v101 = vpack.c.bf16 %v95, %v94
  %v102 = vpack.c.bf16 %v97, %v96
  %v103 = vld [vmem:[%s4] sm:$0x1]
  %v105 = vlaneseq
  %v106 = vshrl.u32 %v105, 7
  %v107 = vsub.s32 0, %v106
  %v108 = vrot.slane %v103, %v107
  %vm110 = vcmask 523264
  %v112 = vsel %vm110, %v98, 0
  %114 = vmatprep.subr.bf16.mxu0 0
  %115 = vmatpush1.bf16.msra.mxu0 %v99
  %116 = vmatprep.subr.bf16.mxu0 0
  %117 = vmatpush1.bf16.msra.mxu0 %v100
  %118 = vmatprep.subr.bf16.mxu0 0
  %119 = vmatpush1.bf16.msra.mxu0 %v101
  %120 = vmatprep.subr.bf16.mxu0 0
  %121 = vmatpush1.bf16.msra.mxu0 %v102
  %122 = vmatprep.subr.bf16.mxu0 0
  %123 = vmatpush1.bf16.msra.mxu0 0
  %124 = vmatprep.subr.bf16.mxu0 0
  %125 = vmatpush1.bf16.msra.mxu0 0
  %126 = vmatprep.subr.bf16.mxu0 0
  %127 = vmatpush1.bf16.msra.mxu0 0
  %128 = vmatprep.subr.bf16.mxu0 0
  %129 = vmatpush1.bf16.msra.mxu0 0
  %130 = vmatprep.subr.bf16.mxu0 0
  %131 = vmatpush1.bf16.msra.mxu0 0
  %132 = vmatprep.subr.bf16.mxu0 0
  %133 = vmatpush1.bf16.msra.mxu0 0
  %134 = vmatprep.subr.bf16.mxu0 0
  %135 = vmatpush1.bf16.msra.mxu0 0
  %136 = vmatprep.subr.bf16.mxu0 0
  %137 = vmatpush1.bf16.msra.mxu0 0
  %138 = vmatprep.subr.bf16.mxu0 0
  %139 = vmatpush1.bf16.msra.mxu0 0
  %140 = vmatprep.subr.bf16.mxu0 0
  %141 = vmatpush1.bf16.msra.mxu0 0
  %142 = vmatprep.subr.bf16.mxu0 0
  %143 = vmatpush1.bf16.msra.mxu0 0
  %144 = vmatprep.subr.bf16.mxu0 0
  %145 = vmatpush1.bf16.msra.mxu0 0
  %146 = vmatprep.mubr.bf16.mxu0 0
  %147 = vmatmul.mubr.bf16.gmra.mrb[0].mxu0 %v112
  %v148 = vpop.f32.mrb[0].mxu0
  %v149 = vadd.f32 %v108, %v148
  %v150 = vpop.f32.mrb[0].mxu0
  %v151 = vpop.f32.mrb[0].mxu0
  %v152 = vadd.f32 %v108, %v151
  %v153 = vpop.f32.mrb[0].mxu0
  %154 = vdwg.mxu0
  %v155 = vadd.f32 %v27, %v149
  %v156 = vadd.f32 %v28, %v152
  %v157 = vsel %vm43, %v155, 0.0
  %158 = vadd.xlane.f32.xlu0 %v157
  %v159 = vpop.xlane.xlu0 %158
  %v160 = vsel %vm43, %v156, 0.0
  %161 = vadd.xlane.f32.xlu0 %v160
  %v162 = vpop.xlane.xlu0 %161
  %v163 = vrcp.pop 32.0
  %v164 = vmul.f32 %v159, %v163
  %v165 = vmul.f32 %v162, %v163
  %v166 = vsub.f32 %v155, %v164
  %v167 = vsub.f32 %v156, %v165
  %v168 = vmul.f32 %v166, %v166
  %v169 = vmul.f32 %v167, %v167
  %v170 = vsel %vm43, %v168, 0.0
  %171 = vadd.xlane.f32.xlu0 %v170
  %v172 = vpop.xlane.xlu0 %171
  %v173 = vsel %vm43, %v169, 0.0
  %174 = vadd.xlane.f32.xlu0 %v173
  %v175 = vpop.xlane.xlu0 %174
  %v176 = vmul.f32 %v172, %v163
  %v177 = vmul.f32 %v175, %v163
  %v178 = vadd.f32 %v176, 1e-06
  %v179 = vadd.f32 %v177, 1e-06
  %v180 = vrsqrt.pop %v178
  %v181 = vrsqrt.pop %v179
  %v182 = vmul.f32 %v166, %v180
  %v183 = vmul.f32 %v167, %v181
  %v184 = vld [vmem:[%s5] sm:$0x1]
  %v186 = vlaneseq
  %v187 = vshrl.u32 %v186, 7
  %v188 = vsub.s32 0, %v187
  %v189 = vrot.slane %v184, %v188
  %v191 = vmul.f32 %v182, %v189
  %v192 = vmul.f32 %v183, %v189
  %v193 = vld [vmem:[%s6] sm:$0x1]
  %v195 = vlaneseq
  %v196 = vshrl.u32 %v195, 7
  %v197 = vsub.s32 0, %v196
  %v198 = vrot.slane %v193, %v197
  %v200 = vadd.f32 %v191, %v198
  %v201 = vadd.f32 %v192, %v198
  %202 = vst.msk [vmem:[%s7] sm:$0xff] %vm43, %v200
  %203 = vst.msk [vmem:[%s7 + $0x8] sm:$0xff] %vm43, %v201
  // Predicated region
  $region30: #{_lambda_.12} parent=0 // pred_check
    _
  $region31: #{_lambda_.12} parent=0 // pred_check_branch
    %205 = sbr.rel (0) target = $region33
  $region32: #{_lambda_.12} parent=0 // pred_region
    _
  $region33: #{_lambda_.12} parent=0 // pred_fallthru
    _
  // Predicated region
  $region34: #{_lambda_.12} parent=0 // pred_check
    _
  $region35: #{_lambda_.12} parent=0 // pred_check_branch
    %207 = sbr.rel (0) target = $region37
  $region36: #{_lambda_.12} parent=0 // pred_region
    _
  $region37: #{_lambda_.12} parent=0 // pred_fallthru
    _

// kernel: _lambda_.21
$region0: #{_lambda_.21}
  #allocation0 [shape = 'u32[]', space=smem, size = 0x4, offset = 0x4, fixed_abs, tag = 'smem constant byte address 0x4 - core index']
  #allocation1 [shape = 'u32[144,128]{1,0:T(1,128)}', space=vmem, size = 0x12000, scoped, tag = 'internal scratch']
  %s0 = inlined_call_operand.vmem [shape: f32[16,32], index: 0, kind: input, shape index: {}]
  %s1 = inlined_call_operand.vmem [shape: f32[32,128], index: 1, kind: input, shape index: {}]
  %s2 = inlined_call_operand.vmem [shape: f32[1,128], index: 2, kind: input, shape index: {}]
  %s3 = inlined_call_operand.vmem [shape: f32[16,128], index: 3, kind: output, shape index: {}]
  %s4 = sld [smem:[#allocation0]]
  $region22: #{_lambda_.21} parent=0
    _
  %s6 = ssub.s32 1, %s4
  %s7 = scalar_select 0, %s6, %s4
  // Predicated region
  $region2: #{_lambda_.21} parent=0 // pred_check
    _
  $region3: #{_lambda_.21} parent=0 // pred_check_branch
    %9 = sbr.rel (0) target = $region5
  $region4: #{_lambda_.21} parent=0 // pred_region
    _
  $region5: #{_lambda_.21} parent=0 // pred_fallthru
    _
  // Predicated region
  $region6: #{_lambda_.21} parent=0 // pred_check
    _
  $region7: #{_lambda_.21} parent=0 // pred_check_branch
    %11 = sbr.rel (0) target = $region9
  $region8: #{_lambda_.21} parent=0 // pred_region
    _
  $region9: #{_lambda_.21} parent=0 // pred_fallthru
    _
  // Predicated region
  $region10: #{_lambda_.21} parent=0 // pred_check
    _
  $region11: #{_lambda_.21} parent=0 // pred_check_branch
    %13 = sbr.rel (0) target = $region13
  $region12: #{_lambda_.21} parent=0 // pred_region
    _
  $region13: #{_lambda_.21} parent=0 // pred_fallthru
    _
  %v15 = vld [vmem:[%s0] sm:$0xff]
  %v16 = vld [vmem:[%s0 + $0x8] sm:$0xff]
  %v17 = vld [vmem:[%s1] sm:$0xff]
  %v18 = vld [vmem:[%s1 + $0x8] sm:$0xff]
  %v19 = vld [vmem:[%s1 + $0x10] sm:$0xff]
  %v20 = vld [vmem:[%s1 + $0x18] sm:$0xff]
  %v21 = vpack.c.bf16 %v16, %v15
  %v22 = vpack.c.bf16 %v18, %v17
  %v23 = vpack.c.bf16 %v20, %v19
  %v24 = vld [vmem:[%s2] sm:$0x1]
  %v26 = vlaneseq
  %v27 = vshrl.u32 %v26, 7
  %v28 = vsub.s32 0, %v27
  %v29 = vrot.slane %v24, %v28
  %vm31 = vcmask 261120
  %v33 = vsel %vm31, %v21, 0
  %35 = vmatprep.subr.bf16.mxu0 0
  %36 = vmatpush1.bf16.msra.mxu0 %v22
  %37 = vmatprep.subr.bf16.mxu0 0
  %38 = vmatpush1.bf16.msra.mxu0 %v23
  %39 = vmatprep.subr.bf16.mxu0 0
  %40 = vmatpush1.bf16.msra.mxu0 0
  %41 = vmatprep.subr.bf16.mxu0 0
  %42 = vmatpush1.bf16.msra.mxu0 0
  %43 = vmatprep.subr.bf16.mxu0 0
  %44 = vmatpush1.bf16.msra.mxu0 0
  %45 = vmatprep.subr.bf16.mxu0 0
  %46 = vmatpush1.bf16.msra.mxu0 0
  %47 = vmatprep.subr.bf16.mxu0 0
  %48 = vmatpush1.bf16.msra.mxu0 0
  %49 = vmatprep.subr.bf16.mxu0 0
  %50 = vmatpush1.bf16.msra.mxu0 0
  %51 = vmatprep.subr.bf16.mxu0 0
  %52 = vmatpush1.bf16.msra.mxu0 0
  %53 = vmatprep.subr.bf16.mxu0 0
  %54 = vmatpush1.bf16.msra.mxu0 0
  %55 = vmatprep.subr.bf16.mxu0 0
  %56 = vmatpush1.bf16.msra.mxu0 0
  %57 = vmatprep.subr.bf16.mxu0 0
  %58 = vmatpush1.bf16.msra.mxu0 0
  %59 = vmatprep.subr.bf16.mxu0 0
  %60 = vmatpush1.bf16.msra.mxu0 0
  %61 = vmatprep.subr.bf16.mxu0 0
  %62 = vmatpush1.bf16.msra.mxu0 0
  %63 = vmatprep.subr.bf16.mxu0 0
  %64 = vmatpush1.bf16.msra.mxu0 0
  %65 = vmatprep.subr.bf16.mxu0 0
  %66 = vmatpush1.bf16.msra.mxu0 0
  %67 = vmatprep.mubr.bf16.mxu0 0
  %68 = vmatmul.mubr.bf16.gmra.mrb[0].mxu0 %v33
  %v69 = vpop.f32.mrb[0].mxu0
  %v70 = vadd.f32 %v29, %v69
  %v71 = vpop.f32.mrb[0].mxu0
  %v72 = vpop.f32.mrb[0].mxu0
  %v73 = vadd.f32 %v29, %v72
  %v74 = vpop.f32.mrb[0].mxu0
  %75 = vdwg.mxu0
  %76 = vst [vmem:[%s3] sm:$0xff] %v70
  %77 = vst [vmem:[%s3 + $0x8] sm:$0xff] %v73
  // Predicated region
  $region14: #{_lambda_.21} parent=0 // pred_check
    _
  $region15: #{_lambda_.21} parent=0 // pred_check_branch
    %79 = sbr.rel (0) target = $region17
  $region16: #{_lambda_.21} parent=0 // pred_region
    _
  $region17: #{_lambda_.21} parent=0 // pred_fallthru
    _
  // Predicated region
  $region18: #{_lambda_.21} parent=0 // pred_check
    _
  $region19: #{_lambda_.21} parent=0 // pred_check_branch
    %81 = sbr.rel (0) target = $region21
  $region20: #{_lambda_.21} parent=0 // pred_region
    _
  $region21: #{_lambda_.21} parent=0 // pred_fallthru
    _

// kernel: _lambda_.15
$region0: #{_lambda_.15}
  #allocation0 [shape = 'u32[]', space=smem, size = 0x4, offset = 0x4, fixed_abs, tag = 'smem constant byte address 0x4 - core index']
  #allocation1 [shape = 'u32[144,128]{1,0:T(1,128)}', space=vmem, size = 0x12000, scoped, tag = 'internal scratch']
  #allocation2 [shape = 's32[1]{0}', space=sflag, size = 0x4, scoped, tag = 'scoped memory for _lambda_.15']
  #allocation3 [shape = 'u8[512]{0}', space=smem, size = 0x200, scoped, tag = 'prefetched SMEM operand 0']
  %s0 = inlined_call_operand.vmem [shape: s32[2], index: 0, kind: input, shape index: {}]
  %s1 = inlined_call_operand.vmem [shape: f32[2,8,32], index: 1, kind: input, shape index: {}, may-alias: {1,2}]
  %s2 = inlined_call_operand.vmem [shape: f32[2,8,32], index: 2, kind: input, shape index: {}, may-alias: {1,2}]
  %s3 = inlined_call_operand.vmem [shape: f32[32,32], index: 3, kind: input, shape index: {}]
  %s4 = inlined_call_operand.vmem [shape: f32[32,64], index: 4, kind: input, shape index: {}]
  %s5 = inlined_call_operand.vmem [shape: f32[32,32], index: 5, kind: input, shape index: {}]
  %s6 = inlined_call_operand.vmem [shape: f32[1,32], index: 6, kind: input, shape index: {}]
  %s7 = inlined_call_operand.vmem [shape: f32[1,32], index: 7, kind: input, shape index: {}]
  %s8 = inlined_call_operand.vmem [shape: f32[1,32], index: 8, kind: input, shape index: {}]
  %s9 = inlined_call_operand.vmem [shape: f32[2,8,32], index: 9, kind: output, shape index: {}]
  %s10 = sld [smem:[#allocation0]]
  $region65: #{_lambda_.15} parent=0
    _
  %s12 = ssub.s32 1, %s10
  %s13 = scalar_select 0, %s12, %s10
  %s14 = sshll.u32 %s0, 4
  %s15 = int_to_ptr.vmem [resolvable:$true] %s14
  %17 = dma.vmem_to_smem %s15, 16, [#allocation3], [#allocation2]
  %18 = dma.done [#allocation2], 16
  %19 = sfence
  loop: start=0, step=1, limit=4
  $region2: #{_lambda_.15} parent=0 // loop_pre_header
    _
  $region3: #{_lambda_.15} parent=0 // loop_header
    %s21 = sphi 0, %s25
    %p22 = scmp.ge.s32.totalorder %s21, 4
    %s31 = sphi 0, %s33
    %s34 = sphi 0, %s31
    %s35 = sphi 0, %s34
    %s51 = sphi 0, %s35
    %s57 = sphi 0, %s59
    %s60 = sphi 0, %s57
    %s61 = sphi 0, %s60
    %s77 = sphi 0, %s61
    %s81 = sphi 0, %s81
    %s83 = sphi 0, %s81
    %s84 = sphi 0, %s83
    %s98 = sphi 0, %s84
    %s102 = sphi 0, %s102
    %s104 = sphi 0, %s102
    %s105 = sphi 0, %s104
    %s119 = sphi 0, %s105
    %s123 = sphi 0, %s123
    %s125 = sphi 0, %s123
    %s126 = sphi 0, %s125
    %s140 = sphi 0, %s126
    %s144 = sphi 0, %s144
    %s146 = sphi 0, %s144
    %s147 = sphi 0, %s146
    %s161 = sphi 0, %s147
    %s165 = sphi 0, %s165
    %s167 = sphi 0, %s165
    %s168 = sphi 0, %s167
    %s182 = sphi 0, %s168
    %s186 = sphi 0, %s186
    %s188 = sphi 0, %s186
    %s189 = sphi 0, %s188
    %s203 = sphi 0, %s189
    %s209 = sphi 0, %s211
    %s212 = sphi 0, %s209
    %s213 = sphi 0, %s212
    %s229 = sphi 0, %s213
  $region4: #{_lambda_.15} parent=0 // loop_header_branch
    %24 = sbr.rel (%p22) target = $region8
  $region5: #{_lambda_.15} parent=0 // loop_body
    %s26 = ssub.s32 %s21, 1
    %s27 = ssub.s32 %s21, 2
    %s28 = sadd.s32 %s21, 1
    %s29 = ssub.s32 %s21, %s28
    %p30 = scmp.eq.s32.totalorder %s29, 0
    %s32 = sadd.s32 %s31, 1
    %s33 = scalar_select %p30, %s31, %s32
    %p36 = pneg %p30
    %p37 = scmp.eq.s32.totalorder %s21, 1
    %p38 = por %p36, %p37
    %p39 = scmp.ne.s32.totalorder %s31, %s34
    %p40 = scmp.eq.s32.totalorder %s21, 0
    %p41 = por %p39, %p40
    %p42 = scmp.ne.s32.totalorder %s31, %s34
    %p43 = scmp.eq.s32.totalorder %s26, 1
    %p44 = por %p42, %p43
    %p45 = scmp.ne.s32.totalorder %s34, %s35
    %p46 = scmp.eq.s32.totalorder %s26, 0
    %p47 = por %p45, %p46
    %p48 = scmp.ne.s32.totalorder %s34, %s35
    %p49 = scmp.eq.s32.totalorder %s27, 1
    %p50 = por %p48, %p49
    %p52 = scmp.ne.s32.totalorder %s35, %s51
    %p53 = scmp.eq.s32.totalorder %s27, 0
    %p54 = por %p52, %p53
    %s55 = ssub.s32 %s21, %s28
    %p56 = scmp.eq.s32.totalorder %s55, 0
    %s58 = sadd.s32 %s57, 1
    %s59 = scalar_select %p56, %s57, %s58
    %p62 = pneg %p56
    %p63 = scmp.eq.s32.totalorder %s21, 1
    %p64 = por %p62, %p63
    %p65 = scmp.ne.s32.totalorder %s57, %s60
    %p66 = scmp.eq.s32.totalorder %s21, 0
    %p67 = por %p65, %p66
    %p68 = scmp.ne.s32.totalorder %s57, %s60
    %p69 = scmp.eq.s32.totalorder %s26, 1
    %p70 = por %p68, %p69
    %p71 = scmp.ne.s32.totalorder %s60, %s61
    %p72 = scmp.eq.s32.totalorder %s26, 0
    %p73 = por %p71, %p72
    %p74 = scmp.ne.s32.totalorder %s60, %s61
    %p75 = scmp.eq.s32.totalorder %s27, 1
    %p76 = por %p74, %p75
    %p78 = scmp.ne.s32.totalorder %s61, %s77
    %p79 = scmp.eq.s32.totalorder %s27, 0
    %p80 = por %p78, %p79
    %s82 = sadd.s32 %s81, 1
    %p85 = scmp.eq.s32.totalorder %s21, 1
    %p86 = scmp.ne.s32.totalorder %s81, %s83
    %p87 = scmp.eq.s32.totalorder %s21, 0
    %p88 = por %p86, %p87
    %p89 = scmp.ne.s32.totalorder %s81, %s83
    %p90 = scmp.eq.s32.totalorder %s26, 1
    %p91 = por %p89, %p90
    %p92 = scmp.ne.s32.totalorder %s83, %s84
    %p93 = scmp.eq.s32.totalorder %s26, 0
    %p94 = por %p92, %p93
    %p95 = scmp.ne.s32.totalorder %s83, %s84
    %p96 = scmp.eq.s32.totalorder %s27, 1
    %p97 = por %p95, %p96
    %p99 = scmp.ne.s32.totalorder %s84, %s98
    %p100 = scmp.eq.s32.totalorder %s27, 0
    %p101 = por %p99, %p100
    %s103 = sadd.s32 %s102, 1
    %p106 = scmp.eq.s32.totalorder %s21, 1
    %p107 = scmp.ne.s32.totalorder %s102, %s104
    %p108 = scmp.eq.s32.totalorder %s21, 0
    %p109 = por %p107, %p108
    %p110 = scmp.ne.s32.totalorder %s102, %s104
    %p111 = scmp.eq.s32.totalorder %s26, 1
    %p112 = por %p110, %p111
    %p113 = scmp.ne.s32.totalorder %s104, %s105
    %p114 = scmp.eq.s32.totalorder %s26, 0
    %p115 = por %p113, %p114
    %p116 = scmp.ne.s32.totalorder %s104, %s105
    %p117 = scmp.eq.s32.totalorder %s27, 1
    %p118 = por %p116, %p117
    %p120 = scmp.ne.s32.totalorder %s105, %s119
    %p121 = scmp.eq.s32.totalorder %s27, 0
    %p122 = por %p120, %p121
    %s124 = sadd.s32 %s123, 1
    %p127 = scmp.eq.s32.totalorder %s21, 1
    %p128 = scmp.ne.s32.totalorder %s123, %s125
    %p129 = scmp.eq.s32.totalorder %s21, 0
    %p130 = por %p128, %p129
    %p131 = scmp.ne.s32.totalorder %s123, %s125
    %p132 = scmp.eq.s32.totalorder %s26, 1
    %p133 = por %p131, %p132
    %p134 = scmp.ne.s32.totalorder %s125, %s126
    %p135 = scmp.eq.s32.totalorder %s26, 0
    %p136 = por %p134, %p135
    %p137 = scmp.ne.s32.totalorder %s125, %s126
    %p138 = scmp.eq.s32.totalorder %s27, 1
    %p139 = por %p137, %p138
    %p141 = scmp.ne.s32.totalorder %s126, %s140
    %p142 = scmp.eq.s32.totalorder %s27, 0
    %p143 = por %p141, %p142
    %s145 = sadd.s32 %s144, 1
    %p148 = scmp.eq.s32.totalorder %s21, 1
    %p149 = scmp.ne.s32.totalorder %s144, %s146
    %p150 = scmp.eq.s32.totalorder %s21, 0
    %p151 = por %p149, %p150
    %p152 = scmp.ne.s32.totalorder %s144, %s146
    %p153 = scmp.eq.s32.totalorder %s26, 1
    %p154 = por %p152, %p153
    %p155 = scmp.ne.s32.totalorder %s146, %s147
    %p156 = scmp.eq.s32.totalorder %s26, 0
    %p157 = por %p155, %p156
    %p158 = scmp.ne.s32.totalorder %s146, %s147
    %p159 = scmp.eq.s32.totalorder %s27, 1
    %p160 = por %p158, %p159
    %p162 = scmp.ne.s32.totalorder %s147, %s161
    %p163 = scmp.eq.s32.totalorder %s27, 0
    %p164 = por %p162, %p163
    %s166 = sadd.s32 %s165, 1
    %p169 = scmp.eq.s32.totalorder %s21, 1
    %p170 = scmp.ne.s32.totalorder %s165, %s167
    %p171 = scmp.eq.s32.totalorder %s21, 0
    %p172 = por %p170, %p171
    %p173 = scmp.ne.s32.totalorder %s165, %s167
    %p174 = scmp.eq.s32.totalorder %s26, 1
    %p175 = por %p173, %p174
    %p176 = scmp.ne.s32.totalorder %s167, %s168
    %p177 = scmp.eq.s32.totalorder %s26, 0
    %p178 = por %p176, %p177
    %p179 = scmp.ne.s32.totalorder %s167, %s168
    %p180 = scmp.eq.s32.totalorder %s27, 1
    %p181 = por %p179, %p180
    %p183 = scmp.ne.s32.totalorder %s168, %s182
    %p184 = scmp.eq.s32.totalorder %s27, 0
    %p185 = por %p183, %p184
    %s187 = sadd.s32 %s186, 1
    %p190 = scmp.eq.s32.totalorder %s21, 1
    %p191 = scmp.ne.s32.totalorder %s186, %s188
    %p192 = scmp.eq.s32.totalorder %s21, 0
    %p193 = por %p191, %p192
    %p194 = scmp.ne.s32.totalorder %s186, %s188
    %p195 = scmp.eq.s32.totalorder %s26, 1
    %p196 = por %p194, %p195
    %p197 = scmp.ne.s32.totalorder %s188, %s189
    %p198 = scmp.eq.s32.totalorder %s26, 0
    %p199 = por %p197, %p198
    %p200 = scmp.ne.s32.totalorder %s188, %s189
    %p201 = scmp.eq.s32.totalorder %s27, 1
    %p202 = por %p200, %p201
    %p204 = scmp.ne.s32.totalorder %s189, %s203
    %p205 = scmp.eq.s32.totalorder %s27, 0
    %p206 = por %p204, %p205
    %s207 = ssub.s32 %s21, %s28
    %p208 = scmp.eq.s32.totalorder %s207, 0
    %s210 = sadd.s32 %s209, 1
    %s211 = scalar_select %p208, %s209, %s210
    %p214 = pneg %p208
    %p215 = scmp.eq.s32.totalorder %s21, 1
    %p216 = por %p214, %p215
    %p217 = scmp.ne.s32.totalorder %s209, %s212
    %p218 = scmp.eq.s32.totalorder %s21, 0
    %p219 = por %p217, %p218
    %p220 = scmp.ne.s32.totalorder %s209, %s212
    %p221 = scmp.eq.s32.totalorder %s26, 1
    %p222 = por %p220, %p221
    %p223 = scmp.ne.s32.totalorder %s212, %s213
    %p224 = scmp.eq.s32.totalorder %s26, 0
    %p225 = por %p223, %p224
    %p226 = scmp.ne.s32.totalorder %s212, %s213
    %p227 = scmp.eq.s32.totalorder %s27, 1
    %p228 = por %p226, %p227
    %p230 = scmp.ne.s32.totalorder %s213, %s229
    %p231 = scmp.eq.s32.totalorder %s27, 0
    %p232 = por %p230, %p231
    %p233 = scmp.le.s32.totalorder 1, %s21
    %p234 = scmp.lt.s32.totalorder %s21, 3
    %p235 = pnand %p233, %p234
    %p236 = pneg %p235
    // Predicated region
    $region9: #{_lambda_.15} parent=5 // pred_check
      _
    $region10: #{_lambda_.15} parent=5 // pred_check_branch
      %238 = sbr.rel (%p235) target = $region12
    $region11: #{_lambda_.15} parent=5 // pred_region
      %s239 = ssub.s32 %s21, 1
      // Predicated region
      $region13: #{_lambda_.15} parent=11 // pred_check
        %p240 = pneg %p94
      $region14: #{_lambda_.15} parent=11 // pred_check_branch
        %242 = sbr.rel (%p240) target = $region16
      $region15: #{_lambda_.15} parent=11 // pred_region
        _
      $region16: #{_lambda_.15} parent=11 // pred_fallthru
        _
      // Predicated region
      $region17: #{_lambda_.15} parent=11 // pred_check
        %p243 = pneg %p115
      $region18: #{_lambda_.15} parent=11 // pred_check_branch
        %245 = sbr.rel (%p243) target = $region20
      $region19: #{_lambda_.15} parent=11 // pred_region
        _
      $region20: #{_lambda_.15} parent=11 // pred_fallthru
        _
      // Predicated region
      $region21: #{_lambda_.15} parent=11 // pred_check
        %p246 = pneg %p136
      $region22: #{_lambda_.15} parent=11 // pred_check_branch
        %248 = sbr.rel (%p246) target = $region24
      $region23: #{_lambda_.15} parent=11 // pred_region
        _
      $region24: #{_lambda_.15} parent=11 // pred_fallthru
        _
      // Predicated region
      $region25: #{_lambda_.15} parent=11 // pred_check
        %p249 = pneg %p157
      $region26: #{_lambda_.15} parent=11 // pred_check_branch
        %251 = sbr.rel (%p249) target = $region28
      $region27: #{_lambda_.15} parent=11 // pred_region
        _
      $region28: #{_lambda_.15} parent=11 // pred_fallthru
        _
      // Predicated region
      $region29: #{_lambda_.15} parent=11 // pred_check
        %p252 = pneg %p178
      $region30: #{_lambda_.15} parent=11 // pred_check_branch
        %254 = sbr.rel (%p252) target = $region32
      $region31: #{_lambda_.15} parent=11 // pred_region
        _
      $region32: #{_lambda_.15} parent=11 // pred_fallthru
        _
      // Predicated region
      $region33: #{_lambda_.15} parent=11 // pred_check
        %p255 = pneg %p199
      $region34: #{_lambda_.15} parent=11 // pred_check_branch
        %257 = sbr.rel (%p255) target = $region36
      $region35: #{_lambda_.15} parent=11 // pred_region
        _
      $region36: #{_lambda_.15} parent=11 // pred_fallthru
        _
    $region12: #{_lambda_.15} parent=5 // pred_fallthru
      _
    %p258 = scmp.lt.s32.totalorder %s21, 2
    // Predicated region
    $region37: #{_lambda_.15} parent=5 // pred_check
      %p259 = pneg %p258
    $region38: #{_lambda_.15} parent=5 // pred_check_branch
      %261 = sbr.rel (%p259) target = $region40
    $region39: #{_lambda_.15} parent=5 // pred_region
      // Predicated region
      $region41: #{_lambda_.15} parent=39 // pred_check
        %p262 = pneg %p41
      $region42: #{_lambda_.15} parent=39 // pred_check_branch
        %264 = sbr.rel (%p262) target = $region44
      $region43: #{_lambda_.15} parent=39 // pred_region
        %p265 = scmp.lt.s32.totalorder %s21, 1
        %s266 = scalar_select %p265, %s21, 1
        %s267 = smul.addr %s266, 8
        %s268 = scalar_lea.vmem %s1, %s267
      $region44: #{_lambda_.15} parent=39 // pred_fallthru
        _
      // Predicated region
      $region45: #{_lambda_.15} parent=39 // pred_check
        %p269 = pneg %p67
      $region46: #{_lambda_.15} parent=39 // pred_check_branch
        %271 = sbr.rel (%p269) target = $region48
      $region47: #{_lambda_.15} parent=39 // pred_region
        %p272 = scmp.lt.s32.totalorder %s21, 1
        %s273 = scalar_select %p272, %s21, 1
        %s274 = smul.addr %s273, 8
        %s275 = scalar_lea.vmem %s2, %s274
      $region48: #{_lambda_.15} parent=39 // pred_fallthru
        _
    $region40: #{_lambda_.15} parent=5 // pred_fallthru
      _
    %p276 = scmp.le.s32.totalorder 1, %s21
    %p277 = scmp.lt.s32.totalorder %s21, 3
    %p278 = pnand %p276, %p277
    %p279 = pneg %p278
    // Predicated region
    $region49: #{_lambda_.15} parent=5 // pred_check
      _
    $region50: #{_lambda_.15} parent=5 // pred_check_branch
      %281 = sbr.rel (%p278) target = $region52
    $region51: #{_lambda_.15} parent=5 // pred_region
      %s282 = ssub.s32 %s21, 1
      %p283 = scmp.lt.s32.totalorder %s26, 1
      %s284 = scalar_select %p283, %s26, 1
      %s285 = smul.addr %s284, 8
      %s286 = scalar_lea.vmem %s1, %s285
      %p287 = pneg %p47
      %p288 = pneg %p44
      %p289 = scmp.lt.s32.totalorder %s26, 1
      %s290 = scalar_select %p289, %s26, 1
      %s291 = smul.addr %s290, 8
      %s292 = scalar_lea.vmem %s2, %s291
      %p293 = pneg %p73
      %p294 = pneg %p70
      %p295 = pneg %p94
      %p296 = pneg %p91
      %p297 = pneg %p115
      %p298 = pneg %p112
      %p299 = pneg %p136
      %p300 = pneg %p133
      %p301 = pneg %p157
      %p302 = pneg %p154
      %p303 = pneg %p178
      %p304 = pneg %p175
      %p305 = pneg %p199
      %p306 = pneg %p196
      %p307 = pneg %p225
      %p308 = pneg %p222
      %p309 = scmp.lt.s32.totalorder %s26, 1
      %s310 = scalar_select %p309, %s26, 1
      %s311 = smul.addr %s310, 8
      %s312 = scalar_lea.vmem %s9, %s311
      %p313 = scmp.lt.s32.totalorder %s26, 1
      %s314 = scalar_select %p313, %s26, 1
      %s315 = smul.addr %s314, 8
      %s316 = scalar_lea.vmem %s1, %s315
      %p317 = scmp.lt.s32.totalorder %s26, 1
      %s318 = scalar_select %p317, %s26, 1
      %s319 = smul.addr %s318, 8
      %s320 = scalar_lea.vmem %s2, %s319
      %p321 = scmp.lt.s32.totalorder %s26, 1
      %s322 = scalar_select %p321, %s26, 1
      %s323 = smul.addr %s322, 8
      %s324 = scalar_lea.vmem %s9, %s323
      %s326 = sld [smem:[#allocation3 + %s26]]
      %v327 = vld [vmem:[%s316] sm:$0xff]
      %v328 = vld [vmem:[%s320] sm:$0xff]
      %v329 = vld [vmem:[%s3] sm:$0xff]
      %v330 = vld [vmem:[%s3 + $0x8] sm:$0xff]
      %v331 = vld [vmem:[%s3 + $0x10] sm:$0xff]
      %v332 = vld [vmem:[%s3 + $0x18] sm:$0xff]
      %v333 = vpack.c.bf16 %v327, %v327
      %v334 = vpack.c.bf16 %v330, %v329
      %v335 = vpack.c.bf16 %v332, %v331
      %vm336 = vcmask 261120
      %v338 = vsel %vm336, %v333, 0
      %340 = vmatprep.subr.bf16.mxu0 0
      %341 = vmatpush1.bf16.msra.mxu0 %v334
      %342 = vmatprep.subr.bf16.mxu0 0
      %343 = vmatpush1.bf16.msra.mxu0 %v335
      %344 = vmatprep.subr.bf16.mxu0 0
      %345 = vmatpush1.bf16.msra.mxu0 0
      %346 = vmatprep.subr.bf16.mxu0 0
      %347 = vmatpush1.bf16.msra.mxu0 0
      %348 = vmatprep.subr.bf16.mxu0 0
      %349 = vmatpush1.bf16.msra.mxu0 0
      %350 = vmatprep.subr.bf16.mxu0 0
      %351 = vmatpush1.bf16.msra.mxu0 0
      %352 = vmatprep.subr.bf16.mxu0 0
      %353 = vmatpush1.bf16.msra.mxu0 0
      %354 = vmatprep.subr.bf16.mxu0 0
      %355 = vmatpush1.bf16.msra.mxu0 0
      %356 = vmatprep.subr.bf16.mxu0 0
      %357 = vmatpush1.bf16.msra.mxu0 0
      %358 = vmatprep.subr.bf16.mxu0 0
      %359 = vmatpush1.bf16.msra.mxu0 0
      %360 = vmatprep.subr.bf16.mxu0 0
      %361 = vmatpush1.bf16.msra.mxu0 0
      %362 = vmatprep.subr.bf16.mxu0 0
      %363 = vmatpush1.bf16.msra.mxu0 0
      %364 = vmatprep.subr.bf16.mxu0 0
      %365 = vmatpush1.bf16.msra.mxu0 0
      %366 = vmatprep.subr.bf16.mxu0 0
      %367 = vmatpush1.bf16.msra.mxu0 0
      %368 = vmatprep.subr.bf16.mxu0 0
      %369 = vmatpush1.bf16.msra.mxu0 0
      %370 = vmatprep.subr.bf16.mxu0 0
      %371 = vmatpush1.bf16.msra.mxu0 0
      %372 = vmatprep.mubr.bf16.mxu0 0
      %373 = vmatmul.mubr.bf16.gmra.mrb[0].mxu0 %v338
      %v374 = vpop.f32.mrb[0].mxu0
      %v375 = vadd.f32 0.0, %v374
      %v376 = vpop.f32.mrb[0].mxu0
      %v377 = vpop.f32.mrb[0].mxu0
      %v378 = vpop.f32.mrb[0].mxu0
      %379 = vdwg.mxu0
      %v380 = vmul.f32 %v375, 0.35355338
      %v381 = vld [vmem:[%s4] sm:$0xff]
      %v382 = vld [vmem:[%s4 + $0x8] sm:$0xff]
      %v383 = vld [vmem:[%s4 + $0x10] sm:$0xff]
      %v384 = vld [vmem:[%s4 + $0x18] sm:$0xff]
      %v385 = vpack.c.bf16 %v328, %v328
      %v386 = vpack.c.bf16 %v382, %v381
      %v387 = vpack.c.bf16 %v384, %v383
      %v389 = vsel %vm336, %v385, 0
      %391 = vmatprep.subr.bf16.mxu0 0
      %392 = vmatpush1.bf16.msra.mxu0 %v386
      %393 = vmatprep.subr.bf16.mxu0 0
      %394 = vmatpush1.bf16.msra.mxu0 %v387
      %395 = vmatprep.subr.bf16.mxu0 0
      %396 = vmatpush1.bf16.msra.mxu0 0
      %397 = vmatprep.subr.bf16.mxu0 0
      %398 = vmatpush1.bf16.msra.mxu0 0
      %399 = vmatprep.subr.bf16.mxu0 0
      %400 = vmatpush1.bf16.msra.mxu0 0
      %401 = vmatprep.subr.bf16.mxu0 0
      %402 = vmatpush1.bf16.msra.mxu0 0
      %403 = vmatprep.subr.bf16.mxu0 0
      %404 = vmatpush1.bf16.msra.mxu0 0
      %405 = vmatprep.subr.bf16.mxu0 0
      %406 = vmatpush1.bf16.msra.mxu0 0
      %407 = vmatprep.subr.bf16.mxu0 0
      %408 = vmatpush1.bf16.msra.mxu0 0
      %409 = vmatprep.subr.bf16.mxu0 0
      %410 = vmatpush1.bf16.msra.mxu0 0
      %411 = vmatprep.subr.bf16.mxu0 0
      %412 = vmatpush1.bf16.msra.mxu0 0
      %413 = vmatprep.subr.bf16.mxu0 0
      %414 = vmatpush1.bf16.msra.mxu0 0
      %415 = vmatprep.subr.bf16.mxu0 0
      %416 = vmatpush1.bf16.msra.mxu0 0
      %417 = vmatprep.subr.bf16.mxu0 0
      %418 = vmatpush1.bf16.msra.mxu0 0
      %419 = vmatprep.subr.bf16.mxu0 0
      %420 = vmatpush1.bf16.msra.mxu0 0
      %421 = vmatprep.subr.bf16.mxu0 0
      %422 = vmatpush1.bf16.msra.mxu0 0
      %423 = vmatprep.mubr.bf16.mxu0 0
      %424 = vmatmul.mubr.bf16.gmra.mrb[0].mxu0 %v389
      %v425 = vpop.f32.mrb[0].mxu0
      %v426 = vadd.f32 0.0, %v425
      %v427 = vpop.f32.mrb[0].mxu0
      %v428 = vpop.f32.mrb[0].mxu0
      %v429 = vpop.f32.mrb[0].mxu0
      %430 = vdwg.mxu0
      %v431 = vlaneseq
      %v432 = vand.u32 %v431, 127
      %v433 = vstv %s326
      %vm434 = vcmp.lt.s32.totalorder %v432, %v433
      %v435 = vlaneseq
      %v436 = vshrl.u32 %v435, 7
      %vm437 = vcmp.le.s32.totalorder %v432, %v436
      %vm438 = vmand %vm434, %vm437
      %v439 = vsel %vm438, 0.0, -1e+09
      %v440 = vpack.c.bf16 %v380, %v380
      %v441 = vpack.c.bf16 %v426, %v426
      %vm442 = vcmask 64512
      %v444 = vsel %vm442, %v440, 0
      %v447 = vsel %vm442, %v441, 0
      %449 = vmatprep.subr.bf16.mxu0 0
      %450 = vmatpush1.bf16.xpose.msra.mxu0 %v447
      %451 = vmatprep.subr.bf16.mxu0 0
      %452 = vmatpush1.bf16.xpose.msra.mxu0 0
      %453 = vmatprep.subr.bf16.mxu0 0
      %454 = vmatpush1.bf16.xpose.msra.mxu0 0
      %455 = vmatprep.subr.bf16.mxu0 0
      %456 = vmatpush1.bf16.xpose.msra.mxu0 0
      %457 = vmatprep.subr.bf16.mxu0 0
      %458 = vmatpush1.bf16.xpose.msra.mxu0 0
      %459 = vmatprep.subr.bf16.mxu0 0
      %460 = vmatpush1.bf16.xpose.msra.mxu0 0
      %461 = vmatprep.subr.bf16.mxu0 0
      %462 = vmatpush1.bf16.xpose.msra.mxu0 0
      %463 = vmatprep.subr.bf16.mxu0 0
      %464 = vmatpush1.bf16.xpose.msra.mxu0 0
      %465 = vmatprep.subr.bf16.mxu0 0
      %466 = vmatpush1.bf16.xpose.msra.mxu0 0
      %467 = vmatprep.subr.bf16.mxu0 0
      %468 = vmatpush1.bf16.xpose.msra.mxu0 0
      %469 = vmatprep.subr.bf16.mxu0 0
      %470 = vmatpush1.bf16.xpose.msra.mxu0 0
      %471 = vmatprep.subr.bf16.mxu0 0
      %472 = vmatpush1.bf16.xpose.msra.mxu0 0
      %473 = vmatprep.subr.bf16.mxu0 0
      %474 = vmatpush1.bf16.xpose.msra.mxu0 0
      %475 = vmatprep.subr.bf16.mxu0 0
      %476 = vmatpush1.bf16.xpose.msra.mxu0 0
      %477 = vmatprep.subr.bf16.mxu0 0
      %478 = vmatpush1.bf16.xpose.msra.mxu0 0
      %479 = vmatprep.subr.bf16.mxu0 0
      %480 = vmatpush1.bf16.xpose.msra.mxu0 0
      %481 = vmatprep.mubr.bf16.mxu0 0
      %482 = vmatmul.mubr.bf16.gmra.mrb[0].mxu0 %v444
      %v483 = vpop.f32.mrb[0].mxu0
      %v484 = vadd.f32 %v439, %v483
      %v485 = vpop.f32.mrb[0].mxu0
      %v486 = vpop.f32.mrb[0].mxu0
      %v487 = vpop.f32.mrb[0].mxu0
      %488 = vdwg.mxu0
      %v489 = vsel %vm442, %v484, -inf
      %490 = vmax.xlane.f32.xlu0 %v489
      %v491 = vpop.xlane.xlu0 %490
      %v492 = vsub.f32 %v484, %v491
      %v493 = vmul.f32 %v492, 1.442695
      %v494 = vpow.pop %v493
      %v495 = vsel %vm442, %v494, 0.0
      %496 = vadd.xlane.f32.xlu0 %v495
      %v497 = vpop.xlane.xlu0 %496
      %v498 = vrcp.pop %v497
      %v499 = vmul.f32 %v494, %v498
      %v500 = vpack.c.bf16 %v499, %v499
      %502 = vrot.lane.b32.xlu0 %v441, 96
      %v503 = vpop.permute.xlu0 %502
      %v505 = vsel %vm442, %v500, 0
      %vm507 = vcmask 1043456
      %v509 = vsel %vm507, %v503, 0
      %511 = vmatprep.subr.bf16.mxu0 0
      %512 = vmatpush1.bf16.msra.mxu0 %v509
      %513 = vmatprep.subr.bf16.mxu0 0
      %514 = vmatpush1.bf16.msra.mxu0 0
      %515 = vmatprep.subr.bf16.mxu0 0
      %516 = vmatpush1.bf16.msra.mxu0 0
      %517 = vmatprep.subr.bf16.mxu0 0
      %518 = vmatpush1.bf16.msra.mxu0 0
      %519 = vmatprep.subr.bf16.mxu0 0
      %520 = vmatpush1.bf16.msra.mxu0 0
      %521 = vmatprep.subr.bf16.mxu0 0
      %522 = vmatpush1.bf16.msra.mxu0 0
      %523 = vmatprep.subr.bf16.mxu0 0
      %524 = vmatpush1.bf16.msra.mxu0 0
      %525 = vmatprep.subr.bf16.mxu0 0
      %526 = vmatpush1.bf16.msra.mxu0 0
      %527 = vmatprep.subr.bf16.mxu0 0
      %528 = vmatpush1.bf16.msra.mxu0 0
      %529 = vmatprep.subr.bf16.mxu0 0
      %530 = vmatpush1.bf16.msra.mxu0 0
      %531 = vmatprep.subr.bf16.mxu0 0
      %532 = vmatpush1.bf16.msra.mxu0 0
      %533 = vmatprep.subr.bf16.mxu0 0
      %534 = vmatpush1.bf16.msra.mxu0 0
      %535 = vmatprep.subr.bf16.mxu0 0
      %536 = vmatpush1.bf16.msra.mxu0 0
      %537 = vmatprep.subr.bf16.mxu0 0
      %538 = vmatpush1.bf16.msra.mxu0 0
      %539 = vmatprep.subr.bf16.mxu0 0
      %540 = vmatpush1.bf16.msra.mxu0 0
      %541 = vmatprep.subr.bf16.mxu0 0
      %542 = vmatpush1.bf16.msra.mxu0 0
      %543 = vmatprep.mubr.bf16.mxu0 0
      %544 = vmatmul.mubr.bf16.gmra.mrb[0].mxu0 %v505
      %v545 = vpop.f32.mrb[0].mxu0
      %v546 = vadd.f32 0.0, %v545
      %v547 = vpop.f32.mrb[0].mxu0
      %v548 = vpop.f32.mrb[0].mxu0
      %v549 = vpop.f32.mrb[0].mxu0
      %550 = vdwg.mxu0
      %552 = vrot.lane.b32.xlu0 %v440, 120
      %v553 = vpop.permute.xlu0 %552
      %554 = vrot.lane.b32.xlu0 %v441, 120
      %v555 = vpop.permute.xlu0 %554
      %v557 = vsel %vm442, %v553, 0
      %v560 = vsel %vm442, %v555, 0
      %562 = vmatprep.subr.bf16.mxu0 0
      %563 = vmatpush1.bf16.xpose.msra.mxu0 %v560
      %564 = vmatprep.subr.bf16.mxu0 0
      %565 = vmatpush1.bf16.xpose.msra.mxu0 0
      %566 = vmatprep.subr.bf16.mxu0 0
      %567 = vmatpush1.bf16.xpose.msra.mxu0 0
      %568 = vmatprep.subr.bf16.mxu0 0
      %569 = vmatpush1.bf16.xpose.msra.mxu0 0
      %570 = vmatprep.subr.bf16.mxu0 0
      %571 = vmatpush1.bf16.xpose.msra.mxu0 0
      %572 = vmatprep.subr.bf16.mxu0 0
      %573 = vmatpush1.bf16.xpose.msra.mxu0 0
      %574 = vmatprep.subr.bf16.mxu0 0
      %575 = vmatpush1.bf16.xpose.msra.mxu0 0
      %576 = vmatprep.subr.bf16.mxu0 0
      %577 = vmatpush1.bf16.xpose.msra.mxu0 0
      %578 = vmatprep.subr.bf16.mxu0 0
      %579 = vmatpush1.bf16.xpose.msra.mxu0 0
      %580 = vmatprep.subr.bf16.mxu0 0
      %581 = vmatpush1.bf16.xpose.msra.mxu0 0
      %582 = vmatprep.subr.bf16.mxu0 0
      %583 = vmatpush1.bf16.xpose.msra.mxu0 0
      %584 = vmatprep.subr.bf16.mxu0 0
      %585 = vmatpush1.bf16.xpose.msra.mxu0 0
      %586 = vmatprep.subr.bf16.mxu0 0
      %587 = vmatpush1.bf16.xpose.msra.mxu0 0
      %588 = vmatprep.subr.bf16.mxu0 0
      %589 = vmatpush1.bf16.xpose.msra.mxu0 0
      %590 = vmatprep.subr.bf16.mxu0 0
      %591 = vmatpush1.bf16.xpose.msra.mxu0 0
      %592 = vmatprep.subr.bf16.mxu0 0
      %593 = vmatpush1.bf16.xpose.msra.mxu0 0
      %594 = vmatprep.mubr.bf16.mxu0 0
      %595 = vmatmul.mubr.bf16.gmra.mrb[0].mxu0 %v557
      %v596 = vpop.f32.mrb[0].mxu0
      %v597 = vadd.f32 %v439, %v596
      %v598 = vpop.f32.mrb[0].mxu0
      %v599 = vpop.f32.mrb[0].mxu0
      %v600 = vpop.f32.mrb[0].mxu0
      %601 = vdwg.mxu0
      %v602 = vsel %vm442, %v597, -inf
      %603 = vmax.xlane.f32.xlu0 %v602
      %v604 = vpop.xlane.xlu0 %603
      %v605 = vsub.f32 %v597, %v604
      %v606 = vmul.f32 %v605, 1.442695
      %v607 = vpow.pop %v606
      %v608 = vsel %vm442, %v607, 0.0
      %609 = vadd.xlane.f32.xlu0 %v608
      %v610 = vpop.xlane.xlu0 %609
      %v611 = vrcp.pop %v610
      %v612 = vmul.f32 %v607, %v611
      %v613 = vpack.c.bf16 %v612, %v612
      %614 = vrot.lane.b32.xlu0 %v441, 88
      %v615 = vpop.permute.xlu0 %614
      %v617 = vsel %vm442, %v613, 0
      %v620 = vsel %vm507, %v615, 0
      %622 = vmatprep.subr.bf16.mxu0 0
      %623 = vmatpush1.bf16.msra.mxu0 %v620
      %624 = vmatprep.subr.bf16.mxu0 0
      %625 = vmatpush1.bf16.msra.mxu0 0
      %626 = vmatprep.subr.bf16.mxu0 0
      %627 = vmatpush1.bf16.msra.mxu0 0
      %628 = vmatprep.subr.bf16.mxu0 0
      %629 = vmatpush1.bf16.msra.mxu0 0
      %630 = vmatprep.subr.bf16.mxu0 0
      %631 = vmatpush1.bf16.msra.mxu0 0
      %632 = vmatprep.subr.bf16.mxu0 0
      %633 = vmatpush1.bf16.msra.mxu0 0
      %634 = vmatprep.subr.bf16.mxu0 0
      %635 = vmatpush1.bf16.msra.mxu0 0
      %636 = vmatprep.subr.bf16.mxu0 0
      %637 = vmatpush1.bf16.msra.mxu0 0
      %638 = vmatprep.subr.bf16.mxu0 0
      %639 = vmatpush1.bf16.msra.mxu0 0
      %640 = vmatprep.subr.bf16.mxu0 0
      %641 = vmatpush1.bf16.msra.mxu0 0
      %642 = vmatprep.subr.bf16.mxu0 0
      %643 = vmatpush1.bf16.msra.mxu0 0
      %644 = vmatprep.subr.bf16.mxu0 0
      %645 = vmatpush1.bf16.msra.mxu0 0
      %646 = vmatprep.subr.bf16.mxu0 0
      %647 = vmatpush1.bf16.msra.mxu0 0
      %648 = vmatprep.subr.bf16.mxu0 0
      %649 = vmatpush1.bf16.msra.mxu0 0
      %650 = vmatprep.subr.bf16.mxu0 0
      %651 = vmatpush1.bf16.msra.mxu0 0
      %652 = vmatprep.subr.bf16.mxu0 0
      %653 = vmatpush1.bf16.msra.mxu0 0
      %654 = vmatprep.mubr.bf16.mxu0 0
      %655 = vmatmul.mubr.bf16.gmra.mrb[0].mxu0 %v617
      %v656 = vpop.f32.mrb[0].mxu0
      %v657 = vadd.f32 0.0, %v656
      %v658 = vpop.f32.mrb[0].mxu0
      %v659 = vpop.f32.mrb[0].mxu0
      %v660 = vpop.f32.mrb[0].mxu0
      %661 = vdwg.mxu0
      %662 = vrot.lane.b32.xlu0 %v440, 112
      %v663 = vpop.permute.xlu0 %662
      %664 = vrot.lane.b32.xlu0 %v441, 112
      %v665 = vpop.permute.xlu0 %664
      %v667 = vsel %vm442, %v663, 0
      %v670 = vsel %vm442, %v665, 0
      %672 = vmatprep.subr.bf16.mxu0 0
      %673 = vmatpush1.bf16.xpose.msra.mxu0 %v670
      %674 = vmatprep.subr.bf16.mxu0 0
      %675 = vmatpush1.bf16.xpose.msra.mxu0 0
      %676 = vmatprep.subr.bf16.mxu0 0
      %677 = vmatpush1.bf16.xpose.msra.mxu0 0
      %678 = vmatprep.subr.bf16.mxu0 0
      %679 = vmatpush1.bf16.xpose.msra.mxu0 0
      %680 = vmatprep.subr.bf16.mxu0 0
      %681 = vmatpush1.bf16.xpose.msra.mxu0 0
      %682 = vmatprep.subr.bf16.mxu0 0
      %683 = vmatpush1.bf16.xpose.msra.mxu0 0
      %684 = vmatprep.subr.bf16.mxu0 0
      %685 = vmatpush1.bf16.xpose.msra.mxu0 0
      %686 = vmatprep.subr.bf16.mxu0 0
      %687 = vmatpush1.bf16.xpose.msra.mxu0 0
      %688 = vmatprep.subr.bf16.mxu0 0
      %689 = vmatpush1.bf16.xpose.msra.mxu0 0
      %690 = vmatprep.subr.bf16.mxu0 0
      %691 = vmatpush1.bf16.xpose.msra.mxu0 0
      %692 = vmatprep.subr.bf16.mxu0 0
      %693 = vmatpush1.bf16.xpose.msra.mxu0 0
      %694 = vmatprep.subr.bf16.mxu0 0
      %695 = vmatpush1.bf16.xpose.msra.mxu0 0
      %696 = vmatprep.subr.bf16.mxu0 0
      %697 = vmatpush1.bf16.xpose.msra.mxu0 0
      %698 = vmatprep.subr.bf16.mxu0 0
      %699 = vmatpush1.bf16.xpose.msra.mxu0 0
      %700 = vmatprep.subr.bf16.mxu0 0
      %701 = vmatpush1.bf16.xpose.msra.mxu0 0
      %702 = vmatprep.subr.bf16.mxu0 0
      %703 = vmatpush1.bf16.xpose.msra.mxu0 0
      %704 = vmatprep.mubr.bf16.mxu0 0
      %705 = vmatmul.mubr.bf16.gmra.mrb[0].mxu0 %v667
      %v706 = vpop.f32.mrb[0].mxu0
      %v707 = vadd.f32 %v439, %v706
      %v708 = vpop.f32.mrb[0].mxu0
      %v709 = vpop.f32.mrb[0].mxu0
      %v710 = vpop.f32.mrb[0].mxu0
      %711 = vdwg.mxu0
      %v712 = vsel %vm442, %v707, -inf
      %713 = vmax.xlane.f32.xlu0 %v712
      %v714 = vpop.xlane.xlu0 %713
      %v715 = vsub.f32 %v707, %v714
      %v716 = vmul.f32 %v715, 1.442695
      %v717 = vpow.pop %v716
      %v718 = vsel %vm442, %v717, 0.0
      %719 = vadd.xlane.f32.xlu0 %v718
      %v720 = vpop.xlane.xlu0 %719
      %v721 = vrcp.pop %v720
      %v722 = vmul.f32 %v717, %v721
      %v723 = vpack.c.bf16 %v722, %v722
      %724 = vrot.lane.b32.xlu0 %v441, 80
      %v725 = vpop.permute.xlu0 %724
      %v727 = vsel %vm442, %v723, 0
      %v730 = vsel %vm507, %v725, 0
      %732 = vmatprep.subr.bf16.mxu0 0
      %733 = vmatpush1.bf16.msra.mxu0 %v730
      %734 = vmatprep.subr.bf16.mxu0 0
      %735 = vmatpush1.bf16.msra.mxu0 0
      %736 = vmatprep.subr.bf16.mxu0 0
      %737 = vmatpush1.bf16.msra.mxu0 0
      %738 = vmatprep.subr.bf16.mxu0 0
      %739 = vmatpush1.bf16.msra.mxu0 0
      %740 = vmatprep.subr.bf16.mxu0 0
      %741 = vmatpush1.bf16.msra.mxu0 0
      %742 = vmatprep.subr.bf16.mxu0 0
      %743 = vmatpush1.bf16.msra.mxu0 0
      %744 = vmatprep.subr.bf16.mxu0 0
      %745 = vmatpush1.bf16.msra.mxu0 0
      %746 = vmatprep.subr.bf16.mxu0 0
      %747 = vmatpush1.bf16.msra.mxu0 0
      %748 = vmatprep.subr.bf16.mxu0 0
      %749 = vmatpush1.bf16.msra.mxu0 0
      %750 = vmatprep.subr.bf16.mxu0 0
      %751 = vmatpush1.bf16.msra.mxu0 0
      %752 = vmatprep.subr.bf16.mxu0 0
      %753 = vmatpush1.bf16.msra.mxu0 0
      %754 = vmatprep.subr.bf16.mxu0 0
      %755 = vmatpush1.bf16.msra.mxu0 0
      %756 = vmatprep.subr.bf16.mxu0 0
      %757 = vmatpush1.bf16.msra.mxu0 0
      %758 = vmatprep.subr.bf16.mxu0 0
      %759 = vmatpush1.bf16.msra.mxu0 0
      %760 = vmatprep.subr.bf16.mxu0 0
      %761 = vmatpush1.bf16.msra.mxu0 0
      %762 = vmatprep.subr.bf16.mxu0 0
      %763 = vmatpush1.bf16.msra.mxu0 0
      %764 = vmatprep.mubr.bf16.mxu0 0
      %765 = vmatmul.mubr.bf16.gmra.mrb[0].mxu0 %v727
      %v766 = vpop.f32.mrb[0].mxu0
      %v767 = vadd.f32 0.0, %v766
      %v768 = vpop.f32.mrb[0].mxu0
      %v769 = vpop.f32.mrb[0].mxu0
      %v770 = vpop.f32.mrb[0].mxu0
      %771 = vdwg.mxu0
      %772 = vrot.lane.b32.xlu0 %v440, 104
      %v773 = vpop.permute.xlu0 %772
      %774 = vrot.lane.b32.xlu0 %v441, 104
      %v775 = vpop.permute.xlu0 %774
      %v777 = vsel %vm442, %v773, 0
      %v780 = vsel %vm442, %v775, 0
      %782 = vmatprep.subr.bf16.mxu0 0
      %783 = vmatpush1.bf16.xpose.msra.mxu0 %v780
      %784 = vmatprep.subr.bf16.mxu0 0
      %785 = vmatpush1.bf16.xpose.msra.mxu0 0
      %786 = vmatprep.subr.bf16.mxu0 0
      %787 = vmatpush1.bf16.xpose.msra.mxu0 0
      %788 = vmatprep.subr.bf16.mxu0 0
      %789 = vmatpush1.bf16.xpose.msra.mxu0 0
      %790 = vmatprep.subr.bf16.mxu0 0
      %791 = vmatpush1.bf16.xpose.msra.mxu0 0
      %792 = vmatprep.subr.bf16.mxu0 0
      %793 = vmatpush1.bf16.xpose.msra.mxu0 0
      %794 = vmatprep.subr.bf16.mxu0 0
      %795 = vmatpush1.bf16.xpose.msra.mxu0 0
      %796 = vmatprep.subr.bf16.mxu0 0
      %797 = vmatpush1.bf16.xpose.msra.mxu0 0
      %798 = vmatprep.subr.bf16.mxu0 0
      %799 = vmatpush1.bf16.xpose.msra.mxu0 0
      %800 = vmatprep.subr.bf16.mxu0 0
      %801 = vmatpush1.bf16.xpose.msra.mxu0 0
      %802 = vmatprep.subr.bf16.mxu0 0
      %803 = vmatpush1.bf16.xpose.msra.mxu0 0
      %804 = vmatprep.subr.bf16.mxu0 0
      %805 = vmatpush1.bf16.xpose.msra.mxu0 0
      %806 = vmatprep.subr.bf16.mxu0 0
      %807 = vmatpush1.bf16.xpose.msra.mxu0 0
      %808 = vmatprep.subr.bf16.mxu0 0
      %809 = vmatpush1.bf16.xpose.msra.mxu0 0
      %810 = vmatprep.subr.bf16.mxu0 0
      %811 = vmatpush1.bf16.xpose.msra.mxu0 0
      %812 = vmatprep.subr.bf16.mxu0 0
      %813 = vmatpush1.bf16.xpose.msra.mxu0 0
      %814 = vmatprep.mubr.bf16.mxu0 0
      %815 = vmatmul.mubr.bf16.gmra.mrb[0].mxu0 %v777
      %v816 = vpop.f32.mrb[0].mxu0
      %v817 = vadd.f32 %v439, %v816
      %v818 = vpop.f32.mrb[0].mxu0
      %v819 = vpop.f32.mrb[0].mxu0
      %v820 = vpop.f32.mrb[0].mxu0
      %821 = vdwg.mxu0
      %v822 = vsel %vm442, %v817, -inf
      %823 = vmax.xlane.f32.xlu0 %v822
      %v824 = vpop.xlane.xlu0 %823
      %v825 = vsub.f32 %v817, %v824
      %v826 = vmul.f32 %v825, 1.442695
      %v827 = vpow.pop %v826
      %v828 = vsel %vm442, %v827, 0.0
      %829 = vadd.xlane.f32.xlu0 %v828
      %v830 = vpop.xlane.xlu0 %829
      %v831 = vrcp.pop %v830
      %v832 = vmul.f32 %v827, %v831
      %v833 = vpack.c.bf16 %v832, %v832
      %834 = vrot.lane.b32.xlu0 %v441, 72
      %v835 = vpop.permute.xlu0 %834
      %v837 = vsel %vm442, %v833, 0
      %v840 = vsel %vm507, %v835, 0
      %842 = vmatprep.subr.bf16.mxu0 0
      %843 = vmatpush1.bf16.msra.mxu0 %v840
      %844 = vmatprep.subr.bf16.mxu0 0
      %845 = vmatpush1.bf16.msra.mxu0 0
      %846 = vmatprep.subr.bf16.mxu0 0
      %847 = vmatpush1.bf16.msra.mxu0 0
      %848 = vmatprep.subr.bf16.mxu0 0
      %849 = vmatpush1.bf16.msra.mxu0 0
      %850 = vmatprep.subr.bf16.mxu0 0
      %851 = vmatpush1.bf16.msra.mxu0 0
      %852 = vmatprep.subr.bf16.mxu0 0
      %853 = vmatpush1.bf16.msra.mxu0 0
      %854 = vmatprep.subr.bf16.mxu0 0
      %855 = vmatpush1.bf16.msra.mxu0 0
      %856 = vmatprep.subr.bf16.mxu0 0
      %857 = vmatpush1.bf16.msra.mxu0 0
      %858 = vmatprep.subr.bf16.mxu0 0
      %859 = vmatpush1.bf16.msra.mxu0 0
      %860 = vmatprep.subr.bf16.mxu0 0
      %861 = vmatpush1.bf16.msra.mxu0 0
      %862 = vmatprep.subr.bf16.mxu0 0
      %863 = vmatpush1.bf16.msra.mxu0 0
      %864 = vmatprep.subr.bf16.mxu0 0
      %865 = vmatpush1.bf16.msra.mxu0 0
      %866 = vmatprep.subr.bf16.mxu0 0
      %867 = vmatpush1.bf16.msra.mxu0 0
      %868 = vmatprep.subr.bf16.mxu0 0
      %869 = vmatpush1.bf16.msra.mxu0 0
      %870 = vmatprep.subr.bf16.mxu0 0
      %871 = vmatpush1.bf16.msra.mxu0 0
      %872 = vmatprep.subr.bf16.mxu0 0
      %873 = vmatpush1.bf16.msra.mxu0 0
      %874 = vmatprep.mubr.bf16.mxu0 0
      %875 = vmatmul.mubr.bf16.gmra.mrb[0].mxu0 %v837
      %v876 = vpop.f32.mrb[0].mxu0
      %v877 = vadd.f32 0.0, %v876
      %v878 = vpop.f32.mrb[0].mxu0
      %v879 = vpop.f32.mrb[0].mxu0
      %v880 = vpop.f32.mrb[0].mxu0
      %881 = vdwg.mxu0
      %883 = vrot.lane.b32.xlu0 %v657, 8
      %v884 = vpop.permute.xlu0 %883
      %887 = vrot.lane.b32.xlu0 %v767, 16
      %v888 = vpop.permute.xlu0 %887
      %891 = vrot.lane.b32.xlu0 %v877, 24
      %v892 = vpop.permute.xlu0 %891
      %v894 = vsel %vm442, %v546, %v884
      %vm895 = vcmask 130048
      %v896 = vsel %vm895, %v894, %v888
      %vm897 = vcmask 195584
      %v898 = vsel %vm897, %v896, %v892
      %v899 = vld [vmem:[%s5] sm:$0xff]
      %v900 = vld [vmem:[%s5 + $0x8] sm:$0xff]
      %v901 = vld [vmem:[%s5 + $0x10] sm:$0xff]
      %v902 = vld [vmem:[%s5 + $0x18] sm:$0xff]
      %v903 = vpack.c.bf16 %v898, %v898
      %v904 = vpack.c.bf16 %v900, %v899
      %v905 = vpack.c.bf16 %v902, %v901
      %v906 = vld [vmem:[%s6] sm:$0x1]
      %v908 = vlaneseq
      %v909 = vshrl.u32 %v908, 7
      %v910 = vsub.s32 0, %v909
      %v911 = vrot.slane %v906, %v910
      %v914 = vsel %vm336, %v903, 0
      %916 = vmatprep.subr.bf16.mxu0 0
      %917 = vmatpush1.bf16.msra.mxu0 %v904
      %918 = vmatprep.subr.bf16.mxu0 0
      %919 = vmatpush1.bf16.msra.mxu0 %v905
      %920 = vmatprep.subr.bf16.mxu0 0
      %921 = vmatpush1.bf16.msra.mxu0 0
      %922 = vmatprep.subr.bf16.mxu0 0
      %923 = vmatpush1.bf16.msra.mxu0 0
      %924 = vmatprep.subr.bf16.mxu0 0
      %925 = vmatpush1.bf16.msra.mxu0 0
      %926 = vmatprep.subr.bf16.mxu0 0
      %927 = vmatpush1.bf16.msra.mxu0 0
      %928 = vmatprep.subr.bf16.mxu0 0
      %929 = vmatpush1.bf16.msra.mxu0 0
      %930 = vmatprep.subr.bf16.mxu0 0
      %931 = vmatpush1.bf16.msra.mxu0 0
      %932 = vmatprep.subr.bf16.mxu0 0
      %933 = vmatpush1.bf16.msra.mxu0 0
      %934 = vmatprep.subr.bf16.mxu0 0
      %935 = vmatpush1.bf16.msra.mxu0 0
      %936 = vmatprep.subr.bf16.mxu0 0
      %937 = vmatpush1.bf16.msra.mxu0 0
      %938 = vmatprep.subr.bf16.mxu0 0
      %939 = vmatpush1.bf16.msra.mxu0 0
      %940 = vmatprep.subr.bf16.mxu0 0
      %941 = vmatpush1.bf16.msra.mxu0 0
      %942 = vmatprep.subr.bf16.mxu0 0
      %943 = vmatpush1.bf16.msra.mxu0 0
      %944 = vmatprep.subr.bf16.mxu0 0
      %945 = vmatpush1.bf16.msra.mxu0 0
      %946 = vmatprep.subr.bf16.mxu0 0
      %947 = vmatpush1.bf16.msra.mxu0 0
      %948 = vmatprep.mubr.bf16.mxu0 0
      %949 = vmatmul.mubr.bf16.gmra.mrb[0].mxu0 %v914
      %v950 = vpop.f32.mrb[0].mxu0
      %v951 = vadd.f32 %v911, %v950
      %v952 = vpop.f32.mrb[0].mxu0
      %v953 = vpop.f32.mrb[0].mxu0
      %v954 = vpop.f32.mrb[0].mxu0
      %955 = vdwg.mxu0
      %v956 = vadd.f32 %v327, %v951
      %v957 = vsel %vm336, %v956, 0.0
      %958 = vadd.xlane.f32.xlu0 %v957
      %v959 = vpop.xlane.xlu0 %958
      %v960 = vrcp.pop 32.0
      %v961 = vmul.f32 %v959, %v960
      %v962 = vsub.f32 %v956, %v961
      %v963 = vmul.f32 %v962, %v962
      %v964 = vsel %vm336, %v963, 0.0
      %965 = vadd.xlane.f32.xlu0 %v964
      %v966 = vpop.xlane.xlu0 %965
      %v967 = vmul.f32 %v966, %v960
      %v968 = vadd.f32 %v967, 1e-06
      %v969 = vrsqrt.pop %v968
      %v970 = vmul.f32 %v962, %v969
      %v971 = vld [vmem:[%s7] sm:$0x1]
      %v973 = vlaneseq
      %v974 = vshrl.u32 %v973, 7
      %v975 = vsub.s32 0, %v974
      %v976 = vrot.slane %v971, %v975
      %v978 = vmul.f32 %v970, %v976
      %v979 = vld [vmem:[%s8] sm:$0x1]
      %v981 = vlaneseq
      %v982 = vshrl.u32 %v981, 7
      %v983 = vsub.s32 0, %v982
      %v984 = vrot.slane %v979, %v983
      %v986 = vadd.f32 %v978, %v984
      %987 = vst.msk [vmem:[%s324] sm:$0xff] %vm336, %v986
      %p988 = scmp.lt.s32.totalorder %s26, 1
      %s989 = scalar_select %p988, %s26, 1
      %s990 = smul.addr %s989, 8
      %s991 = scalar_lea.vmem %s9, %s990
      // Predicated region
      $region53: #{_lambda_.15} parent=51 // pred_check
        %p992 = pneg %p222
      $region54: #{_lambda_.15} parent=51 // pred_check_branch
        %994 = sbr.rel (%p992) target = $region56
      $region55: #{_lambda_.15} parent=51 // pred_region
        _
      $region56: #{_lambda_.15} parent=51 // pred_fallthru
        _
    $region52: #{_lambda_.15} parent=5 // pred_fallthru
      _
    %p995 = scmp.le.s32.totalorder 2, %s21
    // Predicated region
    $region57: #{_lambda_.15} parent=5 // pred_check
      %p996 = pneg %p995
    $region58: #{_lambda_.15} parent=5 // pred_check_branch
      %998 = sbr.rel (%p996) target = $region60
    $region59: #{_lambda_.15} parent=5 // pred_region
      %s999 = ssub.s32 %s21, 2
      // Predicated region
      $region61: #{_lambda_.15} parent=59 // pred_check
        %p1000 = pneg %p228
      $region62: #{_lambda_.15} parent=59 // pred_check_branch
        %1002 = sbr.rel (%p1000) target = $region64
      $region63: #{_lambda_.15} parent=59 // pred_region
        %p1003 = scmp.lt.s32.totalorder %s27, 1
        %s1004 = scalar_select %p1003, %s27, 1
        %s1005 = smul.addr %s1004, 8
        %s1006 = scalar_lea.vmem %s9, %s1005
      $region64: #{_lambda_.15} parent=59 // pred_fallthru
        _
    $region60: #{_lambda_.15} parent=5 // pred_fallthru
      _
  $region6: #{_lambda_.15} parent=0 // loop_footer
    %s25 = sadd.s32 1, %s21
  $region7: #{_lambda_.15} parent=0 // loop_footer_branch
    %20 = sbr.rel target = $region3
  $region8: #{_lambda_.15} parent=0 // loop_exit
    _

// kernel: _lambda_.11
$region0: #{_lambda_.11}
  #allocation0 [shape = 'u32[]', space=smem, size = 0x4, offset = 0x4, fixed_abs, tag = 'smem constant byte address 0x4 - core index']
  #allocation1 [shape = 'u32[144,128]{1,0:T(1,128)}', space=vmem, size = 0x12000, scoped, tag = 'internal scratch']
  #allocation2 [shape = 's32[1]{0}', space=sflag, size = 0x4, scoped, tag = 'scoped memory for _lambda_.11']
  #allocation3 [shape = 'u8[512]{0}', space=smem, size = 0x200, scoped, tag = 'prefetched SMEM operand 0']
  %s0 = inlined_call_operand.vmem [shape: s32[2], index: 0, kind: input, shape index: {}]
  %s1 = inlined_call_operand.vmem [shape: f32[2,8,32], index: 1, kind: input, shape index: {}, may-alias: {1,2}]
  %s2 = inlined_call_operand.vmem [shape: f32[2,8,32], index: 2, kind: input, shape index: {}, may-alias: {1,2}]
  %s3 = inlined_call_operand.vmem [shape: f32[32,32], index: 3, kind: input, shape index: {}]
  %s4 = inlined_call_operand.vmem [shape: f32[32,64], index: 4, kind: input, shape index: {}]
  %s5 = inlined_call_operand.vmem [shape: f32[32,32], index: 5, kind: input, shape index: {}]
  %s6 = inlined_call_operand.vmem [shape: f32[1,32], index: 6, kind: input, shape index: {}]
  %s7 = inlined_call_operand.vmem [shape: f32[1,32], index: 7, kind: input, shape index: {}]
  %s8 = inlined_call_operand.vmem [shape: f32[1,32], index: 8, kind: input, shape index: {}]
  %s9 = inlined_call_operand.vmem [shape: f32[2,8,32], index: 9, kind: output, shape index: {}]
  %s10 = sld [smem:[#allocation0]]
  $region65: #{_lambda_.11} parent=0
    _
  %s12 = ssub.s32 1, %s10
  %s13 = scalar_select 0, %s12, %s10
  %s14 = sshll.u32 %s0, 4
  %s15 = int_to_ptr.vmem [resolvable:$true] %s14
  %17 = dma.vmem_to_smem %s15, 16, [#allocation3], [#allocation2]
  %18 = dma.done [#allocation2], 16
  %19 = sfence
  loop: start=0, step=1, limit=4
  $region2: #{_lambda_.11} parent=0 // loop_pre_header
    _
  $region3: #{_lambda_.11} parent=0 // loop_header
    %s21 = sphi 0, %s25
    %p22 = scmp.ge.s32.totalorder %s21, 4
    %s31 = sphi 0, %s33
    %s34 = sphi 0, %s31
    %s35 = sphi 0, %s34
    %s51 = sphi 0, %s35
    %s57 = sphi 0, %s59
    %s60 = sphi 0, %s57
    %s61 = sphi 0, %s60
    %s77 = sphi 0, %s61
    %s81 = sphi 0, %s81
    %s83 = sphi 0, %s81
    %s84 = sphi 0, %s83
    %s98 = sphi 0, %s84
    %s102 = sphi 0, %s102
    %s104 = sphi 0, %s102
    %s105 = sphi 0, %s104
    %s119 = sphi 0, %s105
    %s123 = sphi 0, %s123
    %s125 = sphi 0, %s123
    %s126 = sphi 0, %s125
    %s140 = sphi 0, %s126
    %s144 = sphi 0, %s144
    %s146 = sphi 0, %s144
    %s147 = sphi 0, %s146
    %s161 = sphi 0, %s147
    %s165 = sphi 0, %s165
    %s167 = sphi 0, %s165
    %s168 = sphi 0, %s167
    %s182 = sphi 0, %s168
    %s186 = sphi 0, %s186
    %s188 = sphi 0, %s186
    %s189 = sphi 0, %s188
    %s203 = sphi 0, %s189
    %s209 = sphi 0, %s211
    %s212 = sphi 0, %s209
    %s213 = sphi 0, %s212
    %s229 = sphi 0, %s213
  $region4: #{_lambda_.11} parent=0 // loop_header_branch
    %24 = sbr.rel (%p22) target = $region8
  $region5: #{_lambda_.11} parent=0 // loop_body
    %s26 = ssub.s32 %s21, 1
    %s27 = ssub.s32 %s21, 2
    %s28 = sadd.s32 %s21, 1
    %s29 = ssub.s32 %s21, %s28
    %p30 = scmp.eq.s32.totalorder %s29, 0
    %s32 = sadd.s32 %s31, 1
    %s33 = scalar_select %p30, %s31, %s32
    %p36 = pneg %p30
    %p37 = scmp.eq.s32.totalorder %s21, 1
    %p38 = por %p36, %p37
    %p39 = scmp.ne.s32.totalorder %s31, %s34
    %p40 = scmp.eq.s32.totalorder %s21, 0
    %p41 = por %p39, %p40
    %p42 = scmp.ne.s32.totalorder %s31, %s34
    %p43 = scmp.eq.s32.totalorder %s26, 1
    %p44 = por %p42, %p43
    %p45 = scmp.ne.s32.totalorder %s34, %s35
    %p46 = scmp.eq.s32.totalorder %s26, 0
    %p47 = por %p45, %p46
    %p48 = scmp.ne.s32.totalorder %s34, %s35
    %p49 = scmp.eq.s32.totalorder %s27, 1
    %p50 = por %p48, %p49
    %p52 = scmp.ne.s32.totalorder %s35, %s51
    %p53 = scmp.eq.s32.totalorder %s27, 0
    %p54 = por %p52, %p53
    %s55 = ssub.s32 %s21, %s28
    %p56 = scmp.eq.s32.totalorder %s55, 0
    %s58 = sadd.s32 %s57, 1
    %s59 = scalar_select %p56, %s57, %s58
    %p62 = pneg %p56
    %p63 = scmp.eq.s32.totalorder %s21, 1
    %p64 = por %p62, %p63
    %p65 = scmp.ne.s32.totalorder %s57, %s60
    %p66 = scmp.eq.s32.totalorder %s21, 0
    %p67 = por %p65, %p66
    %p68 = scmp.ne.s32.totalorder %s57, %s60
    %p69 = scmp.eq.s32.totalorder %s26, 1
    %p70 = por %p68, %p69
    %p71 = scmp.ne.s32.totalorder %s60, %s61
    %p72 = scmp.eq.s32.totalorder %s26, 0
    %p73 = por %p71, %p72
    %p74 = scmp.ne.s32.totalorder %s60, %s61
    %p75 = scmp.eq.s32.totalorder %s27, 1
    %p76 = por %p74, %p75
    %p78 = scmp.ne.s32.totalorder %s61, %s77
    %p79 = scmp.eq.s32.totalorder %s27, 0
    %p80 = por %p78, %p79
    %s82 = sadd.s32 %s81, 1
    %p85 = scmp.eq.s32.totalorder %s21, 1
    %p86 = scmp.ne.s32.totalorder %s81, %s83
    %p87 = scmp.eq.s32.totalorder %s21, 0
    %p88 = por %p86, %p87
    %p89 = scmp.ne.s32.totalorder %s81, %s83
    %p90 = scmp.eq.s32.totalorder %s26, 1
    %p91 = por %p89, %p90
    %p92 = scmp.ne.s32.totalorder %s83, %s84
    %p93 = scmp.eq.s32.totalorder %s26, 0
    %p94 = por %p92, %p93
    %p95 = scmp.ne.s32.totalorder %s83, %s84
    %p96 = scmp.eq.s32.totalorder %s27, 1
    %p97 = por %p95, %p96
    %p99 = scmp.ne.s32.totalorder %s84, %s98
    %p100 = scmp.eq.s32.totalorder %s27, 0
    %p101 = por %p99, %p100
    %s103 = sadd.s32 %s102, 1
    %p106 = scmp.eq.s32.totalorder %s21, 1
    %p107 = scmp.ne.s32.totalorder %s102, %s104
    %p108 = scmp.eq.s32.totalorder %s21, 0
    %p109 = por %p107, %p108
    %p110 = scmp.ne.s32.totalorder %s102, %s104
    %p111 = scmp.eq.s32.totalorder %s26, 1
    %p112 = por %p110, %p111
    %p113 = scmp.ne.s32.totalorder %s104, %s105
    %p114 = scmp.eq.s32.totalorder %s26, 0
    %p115 = por %p113, %p114
    %p116 = scmp.ne.s32.totalorder %s104, %s105
    %p117 = scmp.eq.s32.totalorder %s27, 1
    %p118 = por %p116, %p117
    %p120 = scmp.ne.s32.totalorder %s105, %s119
    %p121 = scmp.eq.s32.totalorder %s27, 0
    %p122 = por %p120, %p121
    %s124 = sadd.s32 %s123, 1
    %p127 = scmp.eq.s32.totalorder %s21, 1
    %p128 = scmp.ne.s32.totalorder %s123, %s125
    %p129 = scmp.eq.s32.totalorder %s21, 0
    %p130 = por %p128, %p129
    %p131 = scmp.ne.s32.totalorder %s123, %s125
    %p132 = scmp.eq.s32.totalorder %s26, 1
    %p133 = por %p131, %p132
    %p134 = scmp.ne.s32.totalorder %s125, %s126
    %p135 = scmp.eq.s32.totalorder %s26, 0
    %p136 = por %p134, %p135
    %p137 = scmp.ne.s32.totalorder %s125, %s126
    %p138 = scmp.eq.s32.totalorder %s27, 1
    %p139 = por %p137, %p138
    %p141 = scmp.ne.s32.totalorder %s126, %s140
    %p142 = scmp.eq.s32.totalorder %s27, 0
    %p143 = por %p141, %p142
    %s145 = sadd.s32 %s144, 1
    %p148 = scmp.eq.s32.totalorder %s21, 1
    %p149 = scmp.ne.s32.totalorder %s144, %s146
    %p150 = scmp.eq.s32.totalorder %s21, 0
    %p151 = por %p149, %p150
    %p152 = scmp.ne.s32.totalorder %s144, %s146
    %p153 = scmp.eq.s32.totalorder %s26, 1
    %p154 = por %p152, %p153
    %p155 = scmp.ne.s32.totalorder %s146, %s147
    %p156 = scmp.eq.s32.totalorder %s26, 0
    %p157 = por %p155, %p156
    %p158 = scmp.ne.s32.totalorder %s146, %s147
    %p159 = scmp.eq.s32.totalorder %s27, 1
    %p160 = por %p158, %p159
    %p162 = scmp.ne.s32.totalorder %s147, %s161
    %p163 = scmp.eq.s32.totalorder %s27, 0
    %p164 = por %p162, %p163
    %s166 = sadd.s32 %s165, 1
    %p169 = scmp.eq.s32.totalorder %s21, 1
    %p170 = scmp.ne.s32.totalorder %s165, %s167
    %p171 = scmp.eq.s32.totalorder %s21, 0
    %p172 = por %p170, %p171
    %p173 = scmp.ne.s32.totalorder %s165, %s167
    %p174 = scmp.eq.s32.totalorder %s26, 1
    %p175 = por %p173, %p174
    %p176 = scmp.ne.s32.totalorder %s167, %s168
    %p177 = scmp.eq.s32.totalorder %s26, 0
    %p178 = por %p176, %p177
    %p179 = scmp.ne.s32.totalorder %s167, %s168
    %p180 = scmp.eq.s32.totalorder %s27, 1
    %p181 = por %p179, %p180
    %p183 = scmp.ne.s32.totalorder %s168, %s182
    %p184 = scmp.eq.s32.totalorder %s27, 0
    %p185 = por %p183, %p184
    %s187 = sadd.s32 %s186, 1
    %p190 = scmp.eq.s32.totalorder %s21, 1
    %p191 = scmp.ne.s32.totalorder %s186, %s188
    %p192 = scmp.eq.s32.totalorder %s21, 0
    %p193 = por %p191, %p192
    %p194 = scmp.ne.s32.totalorder %s186, %s188
    %p195 = scmp.eq.s32.totalorder %s26, 1
    %p196 = por %p194, %p195
    %p197 = scmp.ne.s32.totalorder %s188, %s189
    %p198 = scmp.eq.s32.totalorder %s26, 0
    %p199 = por %p197, %p198
    %p200 = scmp.ne.s32.totalorder %s188, %s189
    %p201 = scmp.eq.s32.totalorder %s27, 1
    %p202 = por %p200, %p201
    %p204 = scmp.ne.s32.totalorder %s189, %s203
    %p205 = scmp.eq.s32.totalorder %s27, 0
    %p206 = por %p204, %p205
    %s207 = ssub.s32 %s21, %s28
    %p208 = scmp.eq.s32.totalorder %s207, 0
    %s210 = sadd.s32 %s209, 1
    %s211 = scalar_select %p208, %s209, %s210
    %p214 = pneg %p208
    %p215 = scmp.eq.s32.totalorder %s21, 1
    %p216 = por %p214, %p215
    %p217 = scmp.ne.s32.totalorder %s209, %s212
    %p218 = scmp.eq.s32.totalorder %s21, 0
    %p219 = por %p217, %p218
    %p220 = scmp.ne.s32.totalorder %s209, %s212
    %p221 = scmp.eq.s32.totalorder %s26, 1
    %p222 = por %p220, %p221
    %p223 = scmp.ne.s32.totalorder %s212, %s213
    %p224 = scmp.eq.s32.totalorder %s26, 0
    %p225 = por %p223, %p224
    %p226 = scmp.ne.s32.totalorder %s212, %s213
    %p227 = scmp.eq.s32.totalorder %s27, 1
    %p228 = por %p226, %p227
    %p230 = scmp.ne.s32.totalorder %s213, %s229
    %p231 = scmp.eq.s32.totalorder %s27, 0
    %p232 = por %p230, %p231
    %p233 = scmp.le.s32.totalorder 1, %s21
    %p234 = scmp.lt.s32.totalorder %s21, 3
    %p235 = pnand %p233, %p234
    %p236 = pneg %p235
    // Predicated region
    $region9: #{_lambda_.11} parent=5 // pred_check
      _
    $region10: #{_lambda_.11} parent=5 // pred_check_branch
      %238 = sbr.rel (%p235) target = $region12
    $region11: #{_lambda_.11} parent=5 // pred_region
      %s239 = ssub.s32 %s21, 1
      // Predicated region
      $region13: #{_lambda_.11} parent=11 // pred_check
        %p240 = pneg %p94
      $region14: #{_lambda_.11} parent=11 // pred_check_branch
        %242 = sbr.rel (%p240) target = $region16
      $region15: #{_lambda_.11} parent=11 // pred_region
        _
      $region16: #{_lambda_.11} parent=11 // pred_fallthru
        _
      // Predicated region
      $region17: #{_lambda_.11} parent=11 // pred_check
        %p243 = pneg %p115
      $region18: #{_lambda_.11} parent=11 // pred_check_branch
        %245 = sbr.rel (%p243) target = $region20
      $region19: #{_lambda_.11} parent=11 // pred_region
        _
      $region20: #{_lambda_.11} parent=11 // pred_fallthru
        _
      // Predicated region
      $region21: #{_lambda_.11} parent=11 // pred_check
        %p246 = pneg %p136
      $region22: #{_lambda_.11} parent=11 // pred_check_branch
        %248 = sbr.rel (%p246) target = $region24
      $region23: #{_lambda_.11} parent=11 // pred_region
        _
      $region24: #{_lambda_.11} parent=11 // pred_fallthru
        _
      // Predicated region
      $region25: #{_lambda_.11} parent=11 // pred_check
        %p249 = pneg %p157
      $region26: #{_lambda_.11} parent=11 // pred_check_branch
        %251 = sbr.rel (%p249) target = $region28
      $region27: #{_lambda_.11} parent=11 // pred_region
        _
      $region28: #{_lambda_.11} parent=11 // pred_fallthru
        _
      // Predicated region
      $region29: #{_lambda_.11} parent=11 // pred_check
        %p252 = pneg %p178
      $region30: #{_lambda_.11} parent=11 // pred_check_branch
        %254 = sbr.rel (%p252) target = $region32
      $region31: #{_lambda_.11} parent=11 // pred_region
        _
      $region32: #{_lambda_.11} parent=11 // pred_fallthru
        _
      // Predicated region
      $region33: #{_lambda_.11} parent=11 // pred_check
        %p255 = pneg %p199
      $region34: #{_lambda_.11} parent=11 // pred_check_branch
        %257 = sbr.rel (%p255) target = $region36
      $region35: #{_lambda_.11} parent=11 // pred_region
        _
      $region36: #{_lambda_.11} parent=11 // pred_fallthru
        _
    $region12: #{_lambda_.11} parent=5 // pred_fallthru
      _
    %p258 = scmp.lt.s32.totalorder %s21, 2
    // Predicated region
    $region37: #{_lambda_.11} parent=5 // pred_check
      %p259 = pneg %p258
    $region38: #{_lambda_.11} parent=5 // pred_check_branch
      %261 = sbr.rel (%p259) target = $region40
    $region39: #{_lambda_.11} parent=5 // pred_region
      // Predicated region
      $region41: #{_lambda_.11} parent=39 // pred_check
        %p262 = pneg %p41
      $region42: #{_lambda_.11} parent=39 // pred_check_branch
        %264 = sbr.rel (%p262) target = $region44
      $region43: #{_lambda_.11} parent=39 // pred_region
        %p265 = scmp.lt.s32.totalorder %s21, 1
        %s266 = scalar_select %p265, %s21, 1
        %s267 = smul.addr %s266, 8
        %s268 = scalar_lea.vmem %s1, %s267
      $region44: #{_lambda_.11} parent=39 // pred_fallthru
        _
      // Predicated region
      $region45: #{_lambda_.11} parent=39 // pred_check
        %p269 = pneg %p67
      $region46: #{_lambda_.11} parent=39 // pred_check_branch
        %271 = sbr.rel (%p269) target = $region48
      $region47: #{_lambda_.11} parent=39 // pred_region
        %p272 = scmp.lt.s32.totalorder %s21, 1
        %s273 = scalar_select %p272, %s21, 1
        %s274 = smul.addr %s273, 8
        %s275 = scalar_lea.vmem %s2, %s274
      $region48: #{_lambda_.11} parent=39 // pred_fallthru
        _
    $region40: #{_lambda_.11} parent=5 // pred_fallthru
      _
    %p276 = scmp.le.s32.totalorder 1, %s21
    %p277 = scmp.lt.s32.totalorder %s21, 3
    %p278 = pnand %p276, %p277
    %p279 = pneg %p278
    // Predicated region
    $region49: #{_lambda_.11} parent=5 // pred_check
      _
    $region50: #{_lambda_.11} parent=5 // pred_check_branch
      %281 = sbr.rel (%p278) target = $region52
    $region51: #{_lambda_.11} parent=5 // pred_region
      %s282 = ssub.s32 %s21, 1
      %p283 = scmp.lt.s32.totalorder %s26, 1
      %s284 = scalar_select %p283, %s26, 1
      %s285 = smul.addr %s284, 8
      %s286 = scalar_lea.vmem %s1, %s285
      %p287 = pneg %p47
      %p288 = pneg %p44
      %p289 = scmp.lt.s32.totalorder %s26, 1
      %s290 = scalar_select %p289, %s26, 1
      %s291 = smul.addr %s290, 8
      %s292 = scalar_lea.vmem %s2, %s291
      %p293 = pneg %p73
      %p294 = pneg %p70
      %p295 = pneg %p94
      %p296 = pneg %p91
      %p297 = pneg %p115
      %p298 = pneg %p112
      %p299 = pneg %p136
      %p300 = pneg %p133
      %p301 = pneg %p157
      %p302 = pneg %p154
      %p303 = pneg %p178
      %p304 = pneg %p175
      %p305 = pneg %p199
      %p306 = pneg %p196
      %p307 = pneg %p225
      %p308 = pneg %p222
      %p309 = scmp.lt.s32.totalorder %s26, 1
      %s310 = scalar_select %p309, %s26, 1
      %s311 = smul.addr %s310, 8
      %s312 = scalar_lea.vmem %s9, %s311
      %p313 = scmp.lt.s32.totalorder %s26, 1
      %s314 = scalar_select %p313, %s26, 1
      %s315 = smul.addr %s314, 8
      %s316 = scalar_lea.vmem %s1, %s315
      %p317 = scmp.lt.s32.totalorder %s26, 1
      %s318 = scalar_select %p317, %s26, 1
      %s319 = smul.addr %s318, 8
      %s320 = scalar_lea.vmem %s2, %s319
      %p321 = scmp.lt.s32.totalorder %s26, 1
      %s322 = scalar_select %p321, %s26, 1
      %s323 = smul.addr %s322, 8
      %s324 = scalar_lea.vmem %s9, %s323
      %s326 = sld [smem:[#allocation3 + %s26]]
      %v327 = vld [vmem:[%s316] sm:$0xff]
      %v328 = vld [vmem:[%s320] sm:$0xff]
      %v329 = vld [vmem:[%s3] sm:$0xff]
      %v330 = vld [vmem:[%s3 + $0x8] sm:$0xff]
      %v331 = vld [vmem:[%s3 + $0x10] sm:$0xff]
      %v332 = vld [vmem:[%s3 + $0x18] sm:$0xff]
      %v333 = vpack.c.bf16 %v327, %v327
      %v334 = vpack.c.bf16 %v330, %v329
      %v335 = vpack.c.bf16 %v332, %v331
      %vm336 = vcmask 261120
      %v338 = vsel %vm336, %v333, 0
      %340 = vmatprep.subr.bf16.mxu0 0
      %341 = vmatpush1.bf16.msra.mxu0 %v334
      %342 = vmatprep.subr.bf16.mxu0 0
      %343 = vmatpush1.bf16.msra.mxu0 %v335
      %344 = vmatprep.subr.bf16.mxu0 0
      %345 = vmatpush1.bf16.msra.mxu0 0
      %346 = vmatprep.subr.bf16.mxu0 0
      %347 = vmatpush1.bf16.msra.mxu0 0
      %348 = vmatprep.subr.bf16.mxu0 0
      %349 = vmatpush1.bf16.msra.mxu0 0
      %350 = vmatprep.subr.bf16.mxu0 0
      %351 = vmatpush1.bf16.msra.mxu0 0
      %352 = vmatprep.subr.bf16.mxu0 0
      %353 = vmatpush1.bf16.msra.mxu0 0
      %354 = vmatprep.subr.bf16.mxu0 0
      %355 = vmatpush1.bf16.msra.mxu0 0
      %356 = vmatprep.subr.bf16.mxu0 0
      %357 = vmatpush1.bf16.msra.mxu0 0
      %358 = vmatprep.subr.bf16.mxu0 0
      %359 = vmatpush1.bf16.msra.mxu0 0
      %360 = vmatprep.subr.bf16.mxu0 0
      %361 = vmatpush1.bf16.msra.mxu0 0
      %362 = vmatprep.subr.bf16.mxu0 0
      %363 = vmatpush1.bf16.msra.mxu0 0
      %364 = vmatprep.subr.bf16.mxu0 0
      %365 = vmatpush1.bf16.msra.mxu0 0
      %366 = vmatprep.subr.bf16.mxu0 0
      %367 = vmatpush1.bf16.msra.mxu0 0
      %368 = vmatprep.subr.bf16.mxu0 0
      %369 = vmatpush1.bf16.msra.mxu0 0
      %370 = vmatprep.subr.bf16.mxu0 0
      %371 = vmatpush1.bf16.msra.mxu0 0
      %372 = vmatprep.mubr.bf16.mxu0 0
      %373 = vmatmul.mubr.bf16.gmra.mrb[0].mxu0 %v338
      %v374 = vpop.f32.mrb[0].mxu0
      %v375 = vadd.f32 0.0, %v374
      %v376 = vpop.f32.mrb[0].mxu0
      %v377 = vpop.f32.mrb[0].mxu0
      %v378 = vpop.f32.mrb[0].mxu0
      %379 = vdwg.mxu0
      %v380 = vmul.f32 %v375, 0.35355338
      %v381 = vld [vmem:[%s4] sm:$0xff]
      %v382 = vld [vmem:[%s4 + $0x8] sm:$0xff]
      %v383 = vld [vmem:[%s4 + $0x10] sm:$0xff]
      %v384 = vld [vmem:[%s4 + $0x18] sm:$0xff]
      %v385 = vpack.c.bf16 %v328, %v328
      %v386 = vpack.c.bf16 %v382, %v381
      %v387 = vpack.c.bf16 %v384, %v383
      %v389 = vsel %vm336, %v385, 0
      %391 = vmatprep.subr.bf16.mxu0 0
      %392 = vmatpush1.bf16.msra.mxu0 %v386
      %393 = vmatprep.subr.bf16.mxu0 0
      %394 = vmatpush1.bf16.msra.mxu0 %v387
      %395 = vmatprep.subr.bf16.mxu0 0
      %396 = vmatpush1.bf16.msra.mxu0 0
      %397 = vmatprep.subr.bf16.mxu0 0
      %398 = vmatpush1.bf16.msra.mxu0 0
      %399 = vmatprep.subr.bf16.mxu0 0
      %400 = vmatpush1.bf16.msra.mxu0 0
      %401 = vmatprep.subr.bf16.mxu0 0
      %402 = vmatpush1.bf16.msra.mxu0 0
      %403 = vmatprep.subr.bf16.mxu0 0
      %404 = vmatpush1.bf16.msra.mxu0 0
      %405 = vmatprep.subr.bf16.mxu0 0
      %406 = vmatpush1.bf16.msra.mxu0 0
      %407 = vmatprep.subr.bf16.mxu0 0
      %408 = vmatpush1.bf16.msra.mxu0 0
      %409 = vmatprep.subr.bf16.mxu0 0
      %410 = vmatpush1.bf16.msra.mxu0 0
      %411 = vmatprep.subr.bf16.mxu0 0
      %412 = vmatpush1.bf16.msra.mxu0 0
      %413 = vmatprep.subr.bf16.mxu0 0
      %414 = vmatpush1.bf16.msra.mxu0 0
      %415 = vmatprep.subr.bf16.mxu0 0
      %416 = vmatpush1.bf16.msra.mxu0 0
      %417 = vmatprep.subr.bf16.mxu0 0
      %418 = vmatpush1.bf16.msra.mxu0 0
      %419 = vmatprep.subr.bf16.mxu0 0
      %420 = vmatpush1.bf16.msra.mxu0 0
      %421 = vmatprep.subr.bf16.mxu0 0
      %422 = vmatpush1.bf16.msra.mxu0 0
      %423 = vmatprep.mubr.bf16.mxu0 0
      %424 = vmatmul.mubr.bf16.gmra.mrb[0].mxu0 %v389
      %v425 = vpop.f32.mrb[0].mxu0
      %v426 = vadd.f32 0.0, %v425
      %v427 = vpop.f32.mrb[0].mxu0
      %v428 = vpop.f32.mrb[0].mxu0
      %v429 = vpop.f32.mrb[0].mxu0
      %430 = vdwg.mxu0
      %v431 = vlaneseq
      %v432 = vand.u32 %v431, 127
      %v433 = vstv %s326
      %vm434 = vcmp.lt.s32.totalorder %v432, %v433
      %v435 = vsel %vm434, 0.0, -1e+09
      %v436 = vpack.c.bf16 %v380, %v380
      %v437 = vpack.c.bf16 %v426, %v426
      %vm438 = vcmask 64512
      %v440 = vsel %vm438, %v436, 0
      %v443 = vsel %vm438, %v437, 0
      %445 = vmatprep.subr.bf16.mxu0 0
      %446 = vmatpush1.bf16.xpose.msra.mxu0 %v443
      %447 = vmatprep.subr.bf16.mxu0 0
      %448 = vmatpush1.bf16.xpose.msra.mxu0 0
      %449 = vmatprep.subr.bf16.mxu0 0
      %450 = vmatpush1.bf16.xpose.msra.mxu0 0
      %451 = vmatprep.subr.bf16.mxu0 0
      %452 = vmatpush1.bf16.xpose.msra.mxu0 0
      %453 = vmatprep.subr.bf16.mxu0 0
      %454 = vmatpush1.bf16.xpose.msra.mxu0 0
      %455 = vmatprep.subr.bf16.mxu0 0
      %456 = vmatpush1.bf16.xpose.msra.mxu0 0
      %457 = vmatprep.subr.bf16.mxu0 0
      %458 = vmatpush1.bf16.xpose.msra.mxu0 0
      %459 = vmatprep.subr.bf16.mxu0 0
      %460 = vmatpush1.bf16.xpose.msra.mxu0 0
      %461 = vmatprep.subr.bf16.mxu0 0
      %462 = vmatpush1.bf16.xpose.msra.mxu0 0
      %463 = vmatprep.subr.bf16.mxu0 0
      %464 = vmatpush1.bf16.xpose.msra.mxu0 0
      %465 = vmatprep.subr.bf16.mxu0 0
      %466 = vmatpush1.bf16.xpose.msra.mxu0 0
      %467 = vmatprep.subr.bf16.mxu0 0
      %468 = vmatpush1.bf16.xpose.msra.mxu0 0
      %469 = vmatprep.subr.bf16.mxu0 0
      %470 = vmatpush1.bf16.xpose.msra.mxu0 0
      %471 = vmatprep.subr.bf16.mxu0 0
      %472 = vmatpush1.bf16.xpose.msra.mxu0 0
      %473 = vmatprep.subr.bf16.mxu0 0
      %474 = vmatpush1.bf16.xpose.msra.mxu0 0
      %475 = vmatprep.subr.bf16.mxu0 0
      %476 = vmatpush1.bf16.xpose.msra.mxu0 0
      %477 = vmatprep.mubr.bf16.mxu0 0
      %478 = vmatmul.mubr.bf16.gmra.mrb[0].mxu0 %v440
      %v479 = vpop.f32.mrb[0].mxu0
      %v480 = vadd.f32 %v435, %v479
      %v481 = vpop.f32.mrb[0].mxu0
      %v482 = vpop.f32.mrb[0].mxu0
      %v483 = vpop.f32.mrb[0].mxu0
      %484 = vdwg.mxu0
      %v485 = vsel %vm438, %v480, -inf
      %486 = vmax.xlane.f32.xlu0 %v485
      %v487 = vpop.xlane.xlu0 %486
      %v488 = vsub.f32 %v480, %v487
      %v489 = vmul.f32 %v488, 1.442695
      %v490 = vpow.pop %v489
      %v491 = vsel %vm438, %v490, 0.0
      %492 = vadd.xlane.f32.xlu0 %v491
      %v493 = vpop.xlane.xlu0 %492
      %v494 = vrcp.pop %v493
      %v495 = vmul.f32 %v490, %v494
      %v496 = vpack.c.bf16 %v495, %v495
      %498 = vrot.lane.b32.xlu0 %v437, 96
      %v499 = vpop.permute.xlu0 %498
      %v501 = vsel %vm438, %v496, 0
      %vm503 = vcmask 1043456
      %v505 = vsel %vm503, %v499, 0
      %507 = vmatprep.subr.bf16.mxu0 0
      %508 = vmatpush1.bf16.msra.mxu0 %v505
      %509 = vmatprep.subr.bf16.mxu0 0
      %510 = vmatpush1.bf16.msra.mxu0 0
      %511 = vmatprep.subr.bf16.mxu0 0
      %512 = vmatpush1.bf16.msra.mxu0 0
      %513 = vmatprep.subr.bf16.mxu0 0
      %514 = vmatpush1.bf16.msra.mxu0 0
      %515 = vmatprep.subr.bf16.mxu0 0
      %516 = vmatpush1.bf16.msra.mxu0 0
      %517 = vmatprep.subr.bf16.mxu0 0
      %518 = vmatpush1.bf16.msra.mxu0 0
      %519 = vmatprep.subr.bf16.mxu0 0
      %520 = vmatpush1.bf16.msra.mxu0 0
      %521 = vmatprep.subr.bf16.mxu0 0
      %522 = vmatpush1.bf16.msra.mxu0 0
      %523 = vmatprep.subr.bf16.mxu0 0
      %524 = vmatpush1.bf16.msra.mxu0 0
      %525 = vmatprep.subr.bf16.mxu0 0
      %526 = vmatpush1.bf16.msra.mxu0 0
      %527 = vmatprep.subr.bf16.mxu0 0
      %528 = vmatpush1.bf16.msra.mxu0 0
      %529 = vmatprep.subr.bf16.mxu0 0
      %530 = vmatpush1.bf16.msra.mxu0 0
      %531 = vmatprep.subr.bf16.mxu0 0
      %532 = vmatpush1.bf16.msra.mxu0 0
      %533 = vmatprep.subr.bf16.mxu0 0
      %534 = vmatpush1.bf16.msra.mxu0 0
      %535 = vmatprep.subr.bf16.mxu0 0
      %536 = vmatpush1.bf16.msra.mxu0 0
      %537 = vmatprep.subr.bf16.mxu0 0
      %538 = vmatpush1.bf16.msra.mxu0 0
      %539 = vmatprep.mubr.bf16.mxu0 0
      %540 = vmatmul.mubr.bf16.gmra.mrb[0].mxu0 %v501
      %v541 = vpop.f32.mrb[0].mxu0
      %v542 = vadd.f32 0.0, %v541
      %v543 = vpop.f32.mrb[0].mxu0
      %v544 = vpop.f32.mrb[0].mxu0
      %v545 = vpop.f32.mrb[0].mxu0
      %546 = vdwg.mxu0
      %548 = vrot.lane.b32.xlu0 %v436, 120
      %v549 = vpop.permute.xlu0 %548
      %550 = vrot.lane.b32.xlu0 %v437, 120
      %v551 = vpop.permute.xlu0 %550
      %v553 = vsel %vm438, %v549, 0
      %v556 = vsel %vm438, %v551, 0
      %558 = vmatprep.subr.bf16.mxu0 0
      %559 = vmatpush1.bf16.xpose.msra.mxu0 %v556
      %560 = vmatprep.subr.bf16.mxu0 0
      %561 = vmatpush1.bf16.xpose.msra.mxu0 0
      %562 = vmatprep.subr.bf16.mxu0 0
      %563 = vmatpush1.bf16.xpose.msra.mxu0 0
      %564 = vmatprep.subr.bf16.mxu0 0
      %565 = vmatpush1.bf16.xpose.msra.mxu0 0
      %566 = vmatprep.subr.bf16.mxu0 0
      %567 = vmatpush1.bf16.xpose.msra.mxu0 0
      %568 = vmatprep.subr.bf16.mxu0 0
      %569 = vmatpush1.bf16.xpose.msra.mxu0 0
      %570 = vmatprep.subr.bf16.mxu0 0
      %571 = vmatpush1.bf16.xpose.msra.mxu0 0
      %572 = vmatprep.subr.bf16.mxu0 0
      %573 = vmatpush1.bf16.xpose.msra.mxu0 0
      %574 = vmatprep.subr.bf16.mxu0 0
      %575 = vmatpush1.bf16.xpose.msra.mxu0 0
      %576 = vmatprep.subr.bf16.mxu0 0
      %577 = vmatpush1.bf16.xpose.msra.mxu0 0
      %578 = vmatprep.subr.bf16.mxu0 0
      %579 = vmatpush1.bf16.xpose.msra.mxu0 0
      %580 = vmatprep.subr.bf16.mxu0 0
      %581 = vmatpush1.bf16.xpose.msra.mxu0 0
      %582 = vmatprep.subr.bf16.mxu0 0
      %583 = vmatpush1.bf16.xpose.msra.mxu0 0
      %584 = vmatprep.subr.bf16.mxu0 0
      %585 = vmatpush1.bf16.xpose.msra.mxu0 0
      %586 = vmatprep.subr.bf16.mxu0 0
      %587 = vmatpush1.bf16.xpose.msra.mxu0 0
      %588 = vmatprep.subr.bf16.mxu0 0
      %589 = vmatpush1.bf16.xpose.msra.mxu0 0
      %590 = vmatprep.mubr.bf16.mxu0 0
      %591 = vmatmul.mubr.bf16.gmra.mrb[0].mxu0 %v553
      %v592 = vpop.f32.mrb[0].mxu0
      %v593 = vadd.f32 %v435, %v592
      %v594 = vpop.f32.mrb[0].mxu0
      %v595 = vpop.f32.mrb[0].mxu0
      %v596 = vpop.f32.mrb[0].mxu0
      %597 = vdwg.mxu0
      %v598 = vsel %vm438, %v593, -inf
      %599 = vmax.xlane.f32.xlu0 %v598
      %v600 = vpop.xlane.xlu0 %599
      %v601 = vsub.f32 %v593, %v600
      %v602 = vmul.f32 %v601, 1.442695
      %v603 = vpow.pop %v602
      %v604 = vsel %vm438, %v603, 0.0
      %605 = vadd.xlane.f32.xlu0 %v604
      %v606 = vpop.xlane.xlu0 %605
      %v607 = vrcp.pop %v606
      %v608 = vmul.f32 %v603, %v607
      %v609 = vpack.c.bf16 %v608, %v608
      %610 = vrot.lane.b32.xlu0 %v437, 88
      %v611 = vpop.permute.xlu0 %610
      %v613 = vsel %vm438, %v609, 0
      %v616 = vsel %vm503, %v611, 0
      %618 = vmatprep.subr.bf16.mxu0 0
      %619 = vmatpush1.bf16.msra.mxu0 %v616
      %620 = vmatprep.subr.bf16.mxu0 0
      %621 = vmatpush1.bf16.msra.mxu0 0
      %622 = vmatprep.subr.bf16.mxu0 0
      %623 = vmatpush1.bf16.msra.mxu0 0
      %624 = vmatprep.subr.bf16.mxu0 0
      %625 = vmatpush1.bf16.msra.mxu0 0
      %626 = vmatprep.subr.bf16.mxu0 0
      %627 = vmatpush1.bf16.msra.mxu0 0
      %628 = vmatprep.subr.bf16.mxu0 0
      %629 = vmatpush1.bf16.msra.mxu0 0
      %630 = vmatprep.subr.bf16.mxu0 0
      %631 = vmatpush1.bf16.msra.mxu0 0
      %632 = vmatprep.subr.bf16.mxu0 0
      %633 = vmatpush1.bf16.msra.mxu0 0
      %634 = vmatprep.subr.bf16.mxu0 0
      %635 = vmatpush1.bf16.msra.mxu0 0
      %636 = vmatprep.subr.bf16.mxu0 0
      %637 = vmatpush1.bf16.msra.mxu0 0
      %638 = vmatprep.subr.bf16.mxu0 0
      %639 = vmatpush1.bf16.msra.mxu0 0
      %640 = vmatprep.subr.bf16.mxu0 0
      %641 = vmatpush1.bf16.msra.mxu0 0
      %642 = vmatprep.subr.bf16.mxu0 0
      %643 = vmatpush1.bf16.msra.mxu0 0
      %644 = vmatprep.subr.bf16.mxu0 0
      %645 = vmatpush1.bf16.msra.mxu0 0
      %646 = vmatprep.subr.bf16.mxu0 0
      %647 = vmatpush1.bf16.msra.mxu0 0
      %648 = vmatprep.subr.bf16.mxu0 0
      %649 = vmatpush1.bf16.msra.mxu0 0
      %650 = vmatprep.mubr.bf16.mxu0 0
      %651 = vmatmul.mubr.bf16.gmra.mrb[0].mxu0 %v613
      %v652 = vpop.f32.mrb[0].mxu0
      %v653 = vadd.f32 0.0, %v652
      %v654 = vpop.f32.mrb[0].mxu0
      %v655 = vpop.f32.mrb[0].mxu0
      %v656 = vpop.f32.mrb[0].mxu0
      %657 = vdwg.mxu0
      %658 = vrot.lane.b32.xlu0 %v436, 112
      %v659 = vpop.permute.xlu0 %658
      %660 = vrot.lane.b32.xlu0 %v437, 112
      %v661 = vpop.permute.xlu0 %660
      %v663 = vsel %vm438, %v659, 0
      %v666 = vsel %vm438, %v661, 0
      %668 = vmatprep.subr.bf16.mxu0 0
      %669 = vmatpush1.bf16.xpose.msra.mxu0 %v666
      %670 = vmatprep.subr.bf16.mxu0 0
      %671 = vmatpush1.bf16.xpose.msra.mxu0 0
      %672 = vmatprep.subr.bf16.mxu0 0
      %673 = vmatpush1.bf16.xpose.msra.mxu0 0
      %674 = vmatprep.subr.bf16.mxu0 0
      %675 = vmatpush1.bf16.xpose.msra.mxu0 0
      %676 = vmatprep.subr.bf16.mxu0 0
      %677 = vmatpush1.bf16.xpose.msra.mxu0 0
      %678 = vmatprep.subr.bf16.mxu0 0
      %679 = vmatpush1.bf16.xpose.msra.mxu0 0
      %680 = vmatprep.subr.bf16.mxu0 0
      %681 = vmatpush1.bf16.xpose.msra.mxu0 0
      %682 = vmatprep.subr.bf16.mxu0 0
      %683 = vmatpush1.bf16.xpose.msra.mxu0 0
      %684 = vmatprep.subr.bf16.mxu0 0
      %685 = vmatpush1.bf16.xpose.msra.mxu0 0
      %686 = vmatprep.subr.bf16.mxu0 0
      %687 = vmatpush1.bf16.xpose.msra.mxu0 0
      %688 = vmatprep.subr.bf16.mxu0 0
      %689 = vmatpush1.bf16.xpose.msra.mxu0 0
      %690 = vmatprep.subr.bf16.mxu0 0
      %691 = vmatpush1.bf16.xpose.msra.mxu0 0
      %692 = vmatprep.subr.bf16.mxu0 0
      %693 = vmatpush1.bf16.xpose.msra.mxu0 0
      %694 = vmatprep.subr.bf16.mxu0 0
      %695 = vmatpush1.bf16.xpose.msra.mxu0 0
      %696 = vmatprep.subr.bf16.mxu0 0
      %697 = vmatpush1.bf16.xpose.msra.mxu0 0
      %698 = vmatprep.subr.bf16.mxu0 0
      %699 = vmatpush1.bf16.xpose.msra.mxu0 0
      %700 = vmatprep.mubr.bf16.mxu0 0
      %701 = vmatmul.mubr.bf16.gmra.mrb[0].mxu0 %v663
      %v702 = vpop.f32.mrb[0].mxu0
      %v703 = vadd.f32 %v435, %v702
      %v704 = vpop.f32.mrb[0].mxu0
      %v705 = vpop.f32.mrb[0].mxu0
      %v706 = vpop.f32.mrb[0].mxu0
      %707 = vdwg.mxu0
      %v708 = vsel %vm438, %v703, -inf
      %709 = vmax.xlane.f32.xlu0 %v708
      %v710 = vpop.xlane.xlu0 %709
      %v711 = vsub.f32 %v703, %v710
      %v712 = vmul.f32 %v711, 1.442695
      %v713 = vpow.pop %v712
      %v714 = vsel %vm438, %v713, 0.0
      %715 = vadd.xlane.f32.xlu0 %v714
      %v716 = vpop.xlane.xlu0 %715
      %v717 = vrcp.pop %v716
      %v718 = vmul.f32 %v713, %v717
      %v719 = vpack.c.bf16 %v718, %v718
      %720 = vrot.lane.b32.xlu0 %v437, 80
      %v721 = vpop.permute.xlu0 %720
      %v723 = vsel %vm438, %v719, 0
      %v726 = vsel %vm503, %v721, 0
      %728 = vmatprep.subr.bf16.mxu0 0
      %729 = vmatpush1.bf16.msra.mxu0 %v726
      %730 = vmatprep.subr.bf16.mxu0 0
      %731 = vmatpush1.bf16.msra.mxu0 0
      %732 = vmatprep.subr.bf16.mxu0 0
      %733 = vmatpush1.bf16.msra.mxu0 0
      %734 = vmatprep.subr.bf16.mxu0 0
      %735 = vmatpush1.bf16.msra.mxu0 0
      %736 = vmatprep.subr.bf16.mxu0 0
      %737 = vmatpush1.bf16.msra.mxu0 0
      %738 = vmatprep.subr.bf16.mxu0 0
      %739 = vmatpush1.bf16.msra.mxu0 0
      %740 = vmatprep.subr.bf16.mxu0 0
      %741 = vmatpush1.bf16.msra.mxu0 0
      %742 = vmatprep.subr.bf16.mxu0 0
      %743 = vmatpush1.bf16.msra.mxu0 0
      %744 = vmatprep.subr.bf16.mxu0 0
      %745 = vmatpush1.bf16.msra.mxu0 0
      %746 = vmatprep.subr.bf16.mxu0 0
      %747 = vmatpush1.bf16.msra.mxu0 0
      %748 = vmatprep.subr.bf16.mxu0 0
      %749 = vmatpush1.bf16.msra.mxu0 0
      %750 = vmatprep.subr.bf16.mxu0 0
      %751 = vmatpush1.bf16.msra.mxu0 0
      %752 = vmatprep.subr.bf16.mxu0 0
      %753 = vmatpush1.bf16.msra.mxu0 0
      %754 = vmatprep.subr.bf16.mxu0 0
      %755 = vmatpush1.bf16.msra.mxu0 0
      %756 = vmatprep.subr.bf16.mxu0 0
      %757 = vmatpush1.bf16.msra.mxu0 0
      %758 = vmatprep.subr.bf16.mxu0 0
      %759 = vmatpush1.bf16.msra.mxu0 0
      %760 = vmatprep.mubr.bf16.mxu0 0
      %761 = vmatmul.mubr.bf16.gmra.mrb[0].mxu0 %v723
      %v762 = vpop.f32.mrb[0].mxu0
      %v763 = vadd.f32 0.0, %v762
      %v764 = vpop.f32.mrb[0].mxu0
      %v765 = vpop.f32.mrb[0].mxu0
      %v766 = vpop.f32.mrb[0].mxu0
      %767 = vdwg.mxu0
      %768 = vrot.lane.b32.xlu0 %v436, 104
      %v769 = vpop.permute.xlu0 %768
      %770 = vrot.lane.b32.xlu0 %v437, 104
      %v771 = vpop.permute.xlu0 %770
      %v773 = vsel %vm438, %v769, 0
      %v776 = vsel %vm438, %v771, 0
      %778 = vmatprep.subr.bf16.mxu0 0
      %779 = vmatpush1.bf16.xpose.msra.mxu0 %v776
      %780 = vmatprep.subr.bf16.mxu0 0
      %781 = vmatpush1.bf16.xpose.msra.mxu0 0
      %782 = vmatprep.subr.bf16.mxu0 0
      %783 = vmatpush1.bf16.xpose.msra.mxu0 0
      %784 = vmatprep.subr.bf16.mxu0 0
      %785 = vmatpush1.bf16.xpose.msra.mxu0 0
      %786 = vmatprep.subr.bf16.mxu0 0
      %787 = vmatpush1.bf16.xpose.msra.mxu0 0
      %788 = vmatprep.subr.bf16.mxu0 0
      %789 = vmatpush1.bf16.xpose.msra.mxu0 0
      %790 = vmatprep.subr.bf16.mxu0 0
      %791 = vmatpush1.bf16.xpose.msra.mxu0 0
      %792 = vmatprep.subr.bf16.mxu0 0
      %793 = vmatpush1.bf16.xpose.msra.mxu0 0
      %794 = vmatprep.subr.bf16.mxu0 0
      %795 = vmatpush1.bf16.xpose.msra.mxu0 0
      %796 = vmatprep.subr.bf16.mxu0 0
      %797 = vmatpush1.bf16.xpose.msra.mxu0 0
      %798 = vmatprep.subr.bf16.mxu0 0
      %799 = vmatpush1.bf16.xpose.msra.mxu0 0
      %800 = vmatprep.subr.bf16.mxu0 0
      %801 = vmatpush1.bf16.xpose.msra.mxu0 0
      %802 = vmatprep.subr.bf16.mxu0 0
      %803 = vmatpush1.bf16.xpose.msra.mxu0 0
      %804 = vmatprep.subr.bf16.mxu0 0
      %805 = vmatpush1.bf16.xpose.msra.mxu0 0
      %806 = vmatprep.subr.bf16.mxu0 0
      %807 = vmatpush1.bf16.xpose.msra.mxu0 0
      %808 = vmatprep.subr.bf16.mxu0 0
      %809 = vmatpush1.bf16.xpose.msra.mxu0 0
      %810 = vmatprep.mubr.bf16.mxu0 0
      %811 = vmatmul.mubr.bf16.gmra.mrb[0].mxu0 %v773
      %v812 = vpop.f32.mrb[0].mxu0
      %v813 = vadd.f32 %v435, %v812
      %v814 = vpop.f32.mrb[0].mxu0
      %v815 = vpop.f32.mrb[0].mxu0
      %v816 = vpop.f32.mrb[0].mxu0
      %817 = vdwg.mxu0
      %v818 = vsel %vm438, %v813, -inf
      %819 = vmax.xlane.f32.xlu0 %v818
      %v820 = vpop.xlane.xlu0 %819
      %v821 = vsub.f32 %v813, %v820
      %v822 = vmul.f32 %v821, 1.442695
      %v823 = vpow.pop %v822
      %v824 = vsel %vm438, %v823, 0.0
      %825 = vadd.xlane.f32.xlu0 %v824
      %v826 = vpop.xlane.xlu0 %825
      %v827 = vrcp.pop %v826
      %v828 = vmul.f32 %v823, %v827
      %v829 = vpack.c.bf16 %v828, %v828
      %830 = vrot.lane.b32.xlu0 %v437, 72
      %v831 = vpop.permute.xlu0 %830
      %v833 = vsel %vm438, %v829, 0
      %v836 = vsel %vm503, %v831, 0
      %838 = vmatprep.subr.bf16.mxu0 0
      %839 = vmatpush1.bf16.msra.mxu0 %v836
      %840 = vmatprep.subr.bf16.mxu0 0
      %841 = vmatpush1.bf16.msra.mxu0 0
      %842 = vmatprep.subr.bf16.mxu0 0
      %843 = vmatpush1.bf16.msra.mxu0 0
      %844 = vmatprep.subr.bf16.mxu0 0
      %845 = vmatpush1.bf16.msra.mxu0 0
      %846 = vmatprep.subr.bf16.mxu0 0
      %847 = vmatpush1.bf16.msra.mxu0 0
      %848 = vmatprep.subr.bf16.mxu0 0
      %849 = vmatpush1.bf16.msra.mxu0 0
      %850 = vmatprep.subr.bf16.mxu0 0
      %851 = vmatpush1.bf16.msra.mxu0 0
      %852 = vmatprep.subr.bf16.mxu0 0
      %853 = vmatpush1.bf16.msra.mxu0 0
      %854 = vmatprep.subr.bf16.mxu0 0
      %855 = vmatpush1.bf16.msra.mxu0 0
      %856 = vmatprep.subr.bf16.mxu0 0
      %857 = vmatpush1.bf16.msra.mxu0 0
      %858 = vmatprep.subr.bf16.mxu0 0
      %859 = vmatpush1.bf16.msra.mxu0 0
      %860 = vmatprep.subr.bf16.mxu0 0
      %861 = vmatpush1.bf16.msra.mxu0 0
      %862 = vmatprep.subr.bf16.mxu0 0
      %863 = vmatpush1.bf16.msra.mxu0 0
      %864 = vmatprep.subr.bf16.mxu0 0
      %865 = vmatpush1.bf16.msra.mxu0 0
      %866 = vmatprep.subr.bf16.mxu0 0
      %867 = vmatpush1.bf16.msra.mxu0 0
      %868 = vmatprep.subr.bf16.mxu0 0
      %869 = vmatpush1.bf16.msra.mxu0 0
      %870 = vmatprep.mubr.bf16.mxu0 0
      %871 = vmatmul.mubr.bf16.gmra.mrb[0].mxu0 %v833
      %v872 = vpop.f32.mrb[0].mxu0
      %v873 = vadd.f32 0.0, %v872
      %v874 = vpop.f32.mrb[0].mxu0
      %v875 = vpop.f32.mrb[0].mxu0
      %v876 = vpop.f32.mrb[0].mxu0
      %877 = vdwg.mxu0
      %879 = vrot.lane.b32.xlu0 %v653, 8
      %v880 = vpop.permute.xlu0 %879
      %883 = vrot.lane.b32.xlu0 %v763, 16
      %v884 = vpop.permute.xlu0 %883
      %887 = vrot.lane.b32.xlu0 %v873, 24
      %v888 = vpop.permute.xlu0 %887
      %v890 = vsel %vm438, %v542, %v880
      %vm891 = vcmask 130048
      %v892 = vsel %vm891, %v890, %v884
      %vm893 = vcmask 195584
      %v894 = vsel %vm893, %v892, %v888
      %v895 = vld [vmem:[%s5] sm:$0xff]
      %v896 = vld [vmem:[%s5 + $0x8] sm:$0xff]
      %v897 = vld [vmem:[%s5 + $0x10] sm:$0xff]
      %v898 = vld [vmem:[%s5 + $0x18] sm:$0xff]
      %v899 = vpack.c.bf16 %v894, %v894
      %v900 = vpack.c.bf16 %v896, %v895
      %v901 = vpack.c.bf16 %v898, %v897
      %v902 = vld [vmem:[%s6] sm:$0x1]
      %v904 = vlaneseq
      %v905 = vshrl.u32 %v904, 7
      %v906 = vsub.s32 0, %v905
      %v907 = vrot.slane %v902, %v906
      %v910 = vsel %vm336, %v899, 0
      %912 = vmatprep.subr.bf16.mxu0 0
      %913 = vmatpush1.bf16.msra.mxu0 %v900
      %914 = vmatprep.subr.bf16.mxu0 0
      %915 = vmatpush1.bf16.msra.mxu0 %v901
      %916 = vmatprep.subr.bf16.mxu0 0
      %917 = vmatpush1.bf16.msra.mxu0 0
      %918 = vmatprep.subr.bf16.mxu0 0
      %919 = vmatpush1.bf16.msra.mxu0 0
      %920 = vmatprep.subr.bf16.mxu0 0
      %921 = vmatpush1.bf16.msra.mxu0 0
      %922 = vmatprep.subr.bf16.mxu0 0
      %923 = vmatpush1.bf16.msra.mxu0 0
      %924 = vmatprep.subr.bf16.mxu0 0
      %925 = vmatpush1.bf16.msra.mxu0 0
      %926 = vmatprep.subr.bf16.mxu0 0
      %927 = vmatpush1.bf16.msra.mxu0 0
      %928 = vmatprep.subr.bf16.mxu0 0
      %929 = vmatpush1.bf16.msra.mxu0 0
      %930 = vmatprep.subr.bf16.mxu0 0
      %931 = vmatpush1.bf16.msra.mxu0 0
      %932 = vmatprep.subr.bf16.mxu0 0
      %933 = vmatpush1.bf16.msra.mxu0 0
      %934 = vmatprep.subr.bf16.mxu0 0
      %935 = vmatpush1.bf16.msra.mxu0 0
      %936 = vmatprep.subr.bf16.mxu0 0
      %937 = vmatpush1.bf16.msra.mxu0 0
      %938 = vmatprep.subr.bf16.mxu0 0
      %939 = vmatpush1.bf16.msra.mxu0 0
      %940 = vmatprep.subr.bf16.mxu0 0
      %941 = vmatpush1.bf16.msra.mxu0 0
      %942 = vmatprep.subr.bf16.mxu0 0
      %943 = vmatpush1.bf16.msra.mxu0 0
      %944 = vmatprep.mubr.bf16.mxu0 0
      %945 = vmatmul.mubr.bf16.gmra.mrb[0].mxu0 %v910
      %v946 = vpop.f32.mrb[0].mxu0
      %v947 = vadd.f32 %v907, %v946
      %v948 = vpop.f32.mrb[0].mxu0
      %v949 = vpop.f32.mrb[0].mxu0
      %v950 = vpop.f32.mrb[0].mxu0
      %951 = vdwg.mxu0
      %v952 = vadd.f32 %v327, %v947
      %v953 = vsel %vm336, %v952, 0.0
      %954 = vadd.xlane.f32.xlu0 %v953
      %v955 = vpop.xlane.xlu0 %954
      %v956 = vrcp.pop 32.0
      %v957 = vmul.f32 %v955, %v956
      %v958 = vsub.f32 %v952, %v957
      %v959 = vmul.f32 %v958, %v958
      %v960 = vsel %vm336, %v959, 0.0
      %961 = vadd.xlane.f32.xlu0 %v960
      %v962 = vpop.xlane.xlu0 %961
      %v963 = vmul.f32 %v962, %v956
      %v964 = vadd.f32 %v963, 1e-06
      %v965 = vrsqrt.pop %v964
      %v966 = vmul.f32 %v958, %v965
      %v967 = vld [vmem:[%s7] sm:$0x1]
      %v969 = vlaneseq
      %v970 = vshrl.u32 %v969, 7
      %v971 = vsub.s32 0, %v970
      %v972 = vrot.slane %v967, %v971
      %v974 = vmul.f32 %v966, %v972
      %v975 = vld [vmem:[%s8] sm:$0x1]
      %v977 = vlaneseq
      %v978 = vshrl.u32 %v977, 7
      %v979 = vsub.s32 0, %v978
      %v980 = vrot.slane %v975, %v979
      %v982 = vadd.f32 %v974, %v980
      %983 = vst.msk [vmem:[%s324] sm:$0xff] %vm336, %v982
      %p984 = scmp.lt.s32.totalorder %s26, 1
      %s985 = scalar_select %p984, %s26, 1
      %s986 = smul.addr %s985, 8
      %s987 = scalar_lea.vmem %s9, %s986
      // Predicated region
      $region53: #{_lambda_.11} parent=51 // pred_check
        %p988 = pneg %p222
      $region54: #{_lambda_.11} parent=51 // pred_check_branch
        %990 = sbr.rel (%p988) target = $region56
      $region55: #{_lambda_.11} parent=51 // pred_region
        _
      $region56: #{_lambda_.11} parent=51 // pred_fallthru
        _
    $region52: #{_lambda_.11} parent=5 // pred_fallthru
      _
    %p991 = scmp.le.s32.totalorder 2, %s21
    // Predicated region
    $region57: #{_lambda_.11} parent=5 // pred_check
      %p992 = pneg %p991
    $region58: #{_lambda_.11} parent=5 // pred_check_branch
      %994 = sbr.rel (%p992) target = $region60
    $region59: #{_lambda_.11} parent=5 // pred_region
      %s995 = ssub.s32 %s21, 2
      // Predicated region
      $region61: #{_lambda_.11} parent=59 // pred_check
        %p996 = pneg %p228
      $region62: #{_lambda_.11} parent=59 // pred_check_branch
        %998 = sbr.rel (%p996) target = $region64
      $region63: #{_lambda_.11} parent=59 // pred_region
        %p999 = scmp.lt.s32.totalorder %s27, 1
        %s1000 = scalar_select %p999, %s27, 1
        %s1001 = smul.addr %s1000, 8
        %s1002 = scalar_lea.vmem %s9, %s1001
      $region64: #{_lambda_.11} parent=59 // pred_fallthru
        _
    $region60: #{_lambda_.11} parent=5 // pred_fallthru
      _
  $region6: #{_lambda_.11} parent=0 // loop_footer
    %s25 = sadd.s32 1, %s21
  $region7: #{_lambda_.11} parent=0 // loop_footer_branch
    %20 = sbr.rel target = $region3
  $region8: #{_lambda_.11} parent=0 // loop_exit
    _

</llo_original>
